<compile_context>
chip_gen: v7x
topology: tpu7x:2x2x1
jax: 0.10.0
libtpu: 0.0.40
codegen_flags: <defaults>
</compile_context>

<pallas_src>
import functools

import numpy as np
import jax
import jax.numpy as jnp
from jax.experimental import pallas as pl
from jax.experimental.pallas import tpu as pltpu


# ---------------------------------------------------------------------------
# Config (small synthetic shapes consistent with the module's forward)
# ---------------------------------------------------------------------------
BATCH = 2
IMG = 32            # stands in for 448
PAD_SIDE = 8        # stands in for 224
PART_SIZE = 32      # stands in for the 224x224 part crops
FV_SIZE = 128       # args.fv_size
NUM_LABELS = 10     # args.num_labels
TOPN = 4            # args.PROPOSAL_NUM
CAT_NUM = 2
RPN_H = IMG // 4    # 8  (stem conv has stride 4)

LANE = 128
SUBLANE_BF16 = 16
# Explicit, conservative VMEM budget: largest resident set here is ~1.3 MiB,
# so 32 MiB fits every generation including v7x's 64 MiB physical VMEM.
_VMEM_LIMIT = 32 * 1024 * 1024


def _round_up(x, m):
    return ((x + m - 1) // m) * m


def _pad2d_const(a, shape, dtype):
    """Pad a small constant (weight/bias) once, at init time."""
    out = jnp.zeros(shape, dtype)
    return out.at[: a.shape[0], : a.shape[1]].set(a.astype(dtype))


def _pad_rows(x, mult=SUBLANE_BF16):
    """Pad M only up to the bf16 sublane multiple (NOT 128)."""
    m = x.shape[0]
    mp = _round_up(max(m, mult), mult)
    if mp != m:
        x = jnp.pad(x, ((0, mp - m), (0, 0)))
    return x, m


def _row_tiling(mp):
    """Row tile: 128 when M allows it, otherwise a single full-M block."""
    if mp % 128 == 0 and mp >= 128:
        return 128, mp // 128
    return mp, 1


# ---------------------------------------------------------------------------
# Pallas kernels
# ---------------------------------------------------------------------------
def _matmul_bias_kernel(x_ref, w_ref, b_ref, o_ref, *, relu):
    acc = jnp.dot(x_ref[...], w_ref[...], preferred_element_type=jnp.float32)
    acc = acc + b_ref[...]
    if relu:
        acc = jnp.maximum(acc, 0.0)
    o_ref[...] = acc.astype(o_ref.dtype)


def pallas_matmul(x, w, b, relu=False, out_dtype=jnp.float32):
    """x:[M,Kp] @ w:[Kp,Np] + b  on the MXU.  w/b are pre-padded (bf16 / f32)."""
    xp, m = _pad_rows(x.astype(jnp.bfloat16))
    mp, kp = xp.shape
    n_pad = w.shape[1]
    tm, gm = _row_tiling(mp)
    out = pl.pallas_call(
        functools.partial(_matmul_bias_kernel, relu=relu),
        out_shape=jax.ShapeDtypeStruct((mp, n_pad), out_dtype),
        grid=(gm,),
        in_specs=[
            pl.BlockSpec((tm, kp), lambda i: (i, 0)),
            pl.BlockSpec((kp, n_pad), lambda i: (0, 0)),
            pl.BlockSpec((1, n_pad), lambda i: (0, 0)),
        ],
        out_specs=pl.BlockSpec((tm, n_pad), lambda i: (i, 0)),
        compiler_params=pltpu.CompilerParams(
            dimension_semantics=("parallel",),
            vmem_limit_bytes=_VMEM_LIMIT),
    )(xp, w, b)
    return out if mp == m else out[:m]


def _down_tidy_kernel(x_ref, wd_ref, bd_ref, wt_ref, bt_ref, d_ref, t_ref):
    # down conv (3x3, via im2col cols) + ReLU on the f32 accumulator
    d = jnp.dot(x_ref[...], wd_ref[...], preferred_element_type=jnp.float32)
    d = jnp.maximum(d + bd_ref[...], 0.0)
    d_ref[...] = d.astype(d_ref.dtype)
    # fused 1x1 tidy conv on the resident activation (no HBM round trip)
    t = jnp.dot(d.astype(jnp.bfloat16), wt_ref[...],
                preferred_element_type=jnp.float32)
    t_ref[...] = t + bt_ref[...]


def pallas_down_tidy(cols, wd, bd, wt, bt):
    """Fused ReLU(conv) + 1x1 tidy conv.  Returns (d [M,128] bf16, t [M,128] f32)."""
    xp, m = _pad_rows(cols.astype(jnp.bfloat16))
    mp, kp = xp.shape
    nd = wd.shape[1]
    nt = wt.shape[1]
    tm, gm = _row_tiling(mp)
    d, t = pl.pallas_call(
        _down_tidy_kernel,
        out_shape=(jax.ShapeDtypeStruct((mp, nd), jnp.bfloat16),
                   jax.ShapeDtypeStruct((mp, nt), jnp.float32)),
        grid=(gm,),
        in_specs=[
            pl.BlockSpec((tm, kp), lambda i: (i, 0)),
            pl.BlockSpec((kp, nd), lambda i: (0, 0)),
            pl.BlockSpec((1, nd), lambda i: (0, 0)),
            pl.BlockSpec((nd, nt), lambda i: (0, 0)),
            pl.BlockSpec((1, nt), lambda i: (0, 0)),
        ],
        out_specs=(pl.BlockSpec((tm, nd), lambda i: (i, 0)),
                   pl.BlockSpec((tm, nt), lambda i: (i, 0))),
        compiler_params=pltpu.CompilerParams(
            dimension_semantics=("parallel",),
            vmem_limit_bytes=_VMEM_LIMIT),
    )(xp, wd, bd, wt, bt)
    if mp != m:
        d, t = d[:m], t[:m]
    return d, t


def _pool_cls_kernel(x_ref, w_ref, b_ref, feat_ref, logit_ref):
    feat = jnp.mean(x_ref[...], axis=1)                       # AdaptiveAvgPool2d(1)
    feat_ref[...] = feat
    acc = jnp.dot(feat.astype(jnp.bfloat16), w_ref[...],
                  preferred_element_type=jnp.float32)
    logit_ref[...] = acc + b_ref[...]


def pallas_pool_classify(fmap_flat, w, b):
    """Fused global-avg-pool + classifier:  [B,HW,C] -> (feature [B,C], logits [B,Np])."""
    bsz, hw, c = fmap_flat.shape
    n_pad = w.shape[1]
    feat, logits = pl.pallas_call(
        _pool_cls_kernel,
        out_shape=(jax.ShapeDtypeStruct((bsz, c), jnp.float32),
                   jax.ShapeDtypeStruct((bsz, n_pad), jnp.float32)),
        grid=(1,),
        in_specs=[
            pl.BlockSpec((bsz, hw, c), lambda i: (0, 0, 0)),
            pl.BlockSpec((c, n_pad), lambda i: (0, 0)),
            pl.BlockSpec((1, n_pad), lambda i: (0, 0)),
        ],
        out_specs=(pl.BlockSpec((bsz, c), lambda i: (0, 0)),
                   pl.BlockSpec((bsz, n_pad), lambda i: (0, 0))),
        compiler_params=pltpu.CompilerParams(
            dimension_semantics=("arbitrary",),
            vmem_limit_bytes=_VMEM_LIMIT),
    )(fmap_flat.astype(jnp.float32), w, b)
    return feat, logits


# ---------------------------------------------------------------------------
# Conv = im2col (device-side XLA glue) + Pallas matmul (hot path)
# ---------------------------------------------------------------------------
# TODO(synk): at real NTS-Net scale (448^2 input) im2col is a 9x HBM-traffic
# multiplier; it should become an in-kernel 9-tap reduction grid over (dh,dw)
# shifts with a VMEM f32 accumulator.  At the toy 32x32 size it is negligible.
def _im2col(x_nhwc, k, stride, pad, k_pad=None):
    b, h, w, c = x_nhwc.shape
    xp = jnp.pad(x_nhwc, ((0, 0), (pad, pad), (pad, pad), (0, 0)))
    ho = (h + 2 * pad - k) // stride + 1
    wo = (w + 2 * pad - k) // stride + 1
    cols = []
    for dh in range(k):
        for dw in range(k):
            cols.append(xp[:, dh:dh + stride * ho:stride,
                           dw:dw + stride * wo:stride, :])
    cols = jnp.concatenate(cols, axis=-1).reshape(b * ho * wo, k * k * c)
    if k_pad is not None and k_pad != k * k * c:
        cols = jnp.pad(cols, ((0, 0), (0, k_pad - k * k * c)))
    return cols, ho, wo


# ---------------------------------------------------------------------------
# Parameters (deterministic synthetic init; padded/lane-dense, bf16, ONCE)
# ---------------------------------------------------------------------------
def init_params(key):
    ks = jax.random.split(key, 10)
    s = 0.05

    def wmat(k, kin, kout, kin_pad, kout_pad):
        w = jax.random.normal(k, (kin, kout), jnp.float32) * s
        return _pad2d_const(w, (kin_pad, kout_pad), jnp.bfloat16)

    def bias(kout_pad):
        return jnp.zeros((1, kout_pad), jnp.float32)

    return {
        # synthetic "pretrained_model" backbone stand-in
        "stem_w": wmat(ks[0], 4 * 4 * 3, FV_SIZE, LANE, LANE), "stem_b": bias(LANE),
        "cls_w": wmat(ks[1], FV_SIZE, NUM_LABELS, LANE, LANE), "cls_b": bias(LANE),
        # ProposalNet
        "d1_w": wmat(ks[2], 9 * FV_SIZE, 128, 9 * FV_SIZE, 128), "d1_b": bias(128),
        "d2_w": wmat(ks[3], 9 * 128, 128, 9 * 128, 128),         "d2_b": bias(128),
        "d3_w": wmat(ks[4], 9 * 128, 128, 9 * 128, 128),         "d3_b": bias(128),
        "t1_w": wmat(ks[5], 128, 6, 128, LANE), "t1_b": bias(LANE),
        "t2_w": wmat(ks[6], 128, 6, 128, LANE), "t2_b": bias(LANE),
        "t3_w": wmat(ks[7], 128, 9, 128, LANE), "t3_b": bias(LANE),
        # heads
        "concat_w": wmat(ks[8], FV_SIZE * (CAT_NUM + 1), NUM_LABELS,
                         FV_SIZE * (CAT_NUM + 1), LANE),
        "concat_b": bias(LANE),
        "part_w": wmat(ks[9], FV_SIZE, NUM_LABELS, LANE, LANE), "part_b": bias(LANE),
    }


# ---------------------------------------------------------------------------
# Sub-networks
# ---------------------------------------------------------------------------
def pretrained_model(params, x_nchw):
    """Synthetic backbone stand-in returning (logits, rpn_feature, feature)."""
    x_nhwc = jnp.transpose(x_nchw, (0, 2, 3, 1)).astype(jnp.bfloat16)
    b = x_nhwc.shape[0]
    # stem: 4x4/s4 conv 3->FV_SIZE + ReLU  (Pallas matmul on the MXU)
    cols, ho, wo = _im2col(x_nhwc, k=4, stride=4, pad=0, k_pad=LANE)
    fmap_flat = pallas_matmul(cols, params["stem_w"], params["stem_b"],
                              relu=True, out_dtype=jnp.float32)   # [b*ho*wo, FV]
    fmap = fmap_flat.reshape(b, ho, wo, FV_SIZE)
    # fused AdaptiveAvgPool2d(1) + classifier head (single Pallas kernel)
    feature, logits_pad = pallas_pool_classify(
        fmap_flat.reshape(b, ho * wo, FV_SIZE), params["cls_w"], params["cls_b"])
    logits = logits_pad[:, :NUM_LABELS]
    return logits, fmap, feature


def _flatten_tidy_nchw(t_flat, b, ho, wo, nt):
    # flatten in NCHW order to match torch's .view(batch, -1)
    t = t_flat.reshape(b, ho, wo, -1)[:, :, :, :nt]
    return jnp.transpose(t, (0, 3, 1, 2)).reshape(b, -1)


def proposal_net(params, rpn_feature_nhwc):
    """ProposalNet.forward (arch != inception*, so the trailing fc is skipped)."""
    b = rpn_feature_nhwc.shape[0]
    cols1, h1, w1 = _im2col(rpn_feature_nhwc, 3, 1, 1)
    d1_flat, t1_flat = pallas_down_tidy(cols1, params["d1_w"], params["d1_b"],
                                        params["t1_w"], params["t1_b"])
    d1 = d1_flat.reshape(b, h1, w1, 128)

    cols2, h2, w2 = _im2col(d1, 3, 2, 1)
    d2_flat, t2_flat = pallas_down_tidy(cols2, params["d2_w"], params["d2_b"],
                                        params["t2_w"], params["t2_b"])
    d2 = d2_flat.reshape(b, h2, w2, 128)

    cols3, h3, w3 = _im2col(d2, 3, 2, 1)
    _, t3_flat = pallas_down_tidy(cols3, params["d3_w"], params["d3_b"],
                                  params["t3_w"], params["t3_b"])

    t1f = _flatten_tidy_nchw(t1_flat, b, h1, w1, 6)
    t2f = _flatten_tidy_nchw(t2_flat, b, h2, w2, 6)
    t3f = _flatten_tidy_nchw(t3_flat, b, h3, w3, 9)
    return jnp.concatenate([t1f, t2f, t3f], axis=1)              # [B, 516]


# ---------------------------------------------------------------------------
# Device-side crop + bilinear resize (align_corners=True) via gather
# ---------------------------------------------------------------------------
def _bilinear_crop_resize(img_chw, box):
    """Crop box=[y0,x0,y1,x1] from a padded CHW image and resize to PART_SIZE."""
    hp, wp = img_chw.shape[1], img_chw.shape[2]
    y0, x0, y1, x1 = box[0], box[1], box[2], box[3]
    ch = jnp.maximum(y1 - y0, 1).astype(jnp.float32)   # guard zero-area boxes
    cw = jnp.maximum(x1 - x0, 1).astype(jnp.float32)
    p = jnp.arange(PART_SIZE, dtype=jnp.float32)
    ys = y0.astype(jnp.float32) + p * (ch - 1.0) / float(PART_SIZE - 1)
    xs = x0.astype(jnp.float32) + p * (cw - 1.0) / float(PART_SIZE - 1)
    y0i = jnp.clip(jnp.floor(ys).astype(jnp.int32), 0, hp - 1)
    x0i = jnp.clip(jnp.floor(xs).astype(jnp.int32), 0, wp - 1)
    y1i = jnp.minimum(y0i + 1, hp - 1)
    x1i = jnp.minimum(x0i + 1, wp - 1)
    wy = (ys - y0i.astype(jnp.float32))[None, :, None]
    wx = (xs - x0i.astype(jnp.float32))[None, None, :]
    ia = img_chw[:, y0i, :][:, :, x0i]
    ib = img_chw[:, y0i, :][:, :, x1i]
    ic = img_chw[:, y1i, :][:, :, x0i]
    idd = img_chw[:, y1i, :][:, :, x1i]
    return (ia * (1.0 - wy) * (1.0 - wx) + ib * (1.0 - wy) * wx
            + ic * wy * (1.0 - wx) + idd * wy * wx)


# ---------------------------------------------------------------------------
# Host-side helpers (anchors + hard_nms only — exactly like the reference)
# ---------------------------------------------------------------------------
def generate_default_anchor_maps(num_anchors, img_size):
    idx = np.arange(num_anchors)
    cy = (idx * 7) % img_size
    cx = (idx * 13) % img_size
    half = np.array([4, 6, 8])[idx % 3]
    y0 = np.clip(cy - half, 0, img_size)
    x0 = np.clip(cx - half, 0, img_size)
    y1 = np.clip(cy + half, 0, img_size)
    x1 = np.clip(cx + half, 0, img_size)
    edge_anchors = np.stack([y0, x0, y1, x1], axis=1).astype(np.float32)
    return None, edge_anchors, None


def hard_nms(cdds, topn=10, iou_thresh=0.25):
    # TODO(synk): data-dependent greedy NMS loop has no static-shape Pallas
    # equivalent; it runs host-side in numpy exactly like the reference.
    cdds = cdds.copy()
    indices = np.argsort(cdds[:, 0])
    cdds = cdds[indices]
    cdd_results = []
    res = cdds
    while res.any():
        cdd = res[-1]
        cdd_results.append(cdd)
        res = res[:-1]
        if len(cdd_results) == topn or len(res) == 0:
            break
        start_max = np.maximum(res[:, 1:3], cdd[1:3])
        end_min = np.minimum(res[:, 3:5], cdd[3:5])
        lengths = end_min - start_max
        intersec = lengths[:, 0] * lengths[:, 1]
        intersec[np.logical_or(lengths[:, 0] < 0, lengths[:, 1] < 0)] = 0
        union = ((res[:, 3] - res[:, 1]) * (res[:, 4] - res[:, 2])
                 + (cdd[3] - cdd[1]) * (cdd[4] - cdd[2]) - intersec)
        iou = intersec / union
        res = res[iou < iou_thresh]
    if not cdd_results:                      # guard: degenerate all-zero input
        cdd_results.append(cdds[-1] if len(cdds) else np.zeros(6, np.float32))
    while len(cdd_results) < topn:           # safety pad (synthetic anchors)
        cdd_results.append(cdd_results[-1])
    return np.array(cdd_results[:topn])


# ---------------------------------------------------------------------------
# attention_net.forward
# ---------------------------------------------------------------------------
@jax.jit
def _forward_front(params, x_nchw):
    resnet_out, rpn_feature, feature = pretrained_model(params, x_nchw)
    rpn_score = proposal_net(params, jax.lax.stop_gradient(rpn_feature))
    x_pad = jnp.pad(x_nchw.astype(jnp.float32),
                    ((0, 0), (0, 0), (PAD_SIDE, PAD_SIDE), (PAD_SIDE, PAD_SIDE)))
    return resnet_out, feature, rpn_score, x_pad


@jax.jit
def _forward_back(params, x_pad, feature, rpn_score, top_n_index, boxes):
    batch = x_pad.shape[0]
    top_n_prob = jnp.take_along_axis(rpn_score, top_n_index, axis=1)

    # device-side crop + bilinear resize (align_corners=True) of the top-N boxes
    img_idx = jnp.repeat(jnp.arange(batch), TOPN)
    part_imgs = jax.vmap(_bilinear_crop_resize)(
        x_pad[img_idx], boxes.reshape(batch * TOPN, 4))   # [B*TOPN, 3, P, P]

    _, _, part_features = pretrained_model(params, part_imgs)        # [B*TOPN, FV]

    part_feature = part_features.reshape(batch, TOPN, -1)[:, :CAT_NUM]
    part_feature = part_feature.reshape(batch, -1)                    # [B, CAT*FV]
    concat_out = jnp.concatenate([part_feature, feature], axis=1)     # [B, (CAT+1)*FV]
    concat_logits = pallas_matmul(concat_out, params["concat_w"],
                                  params["concat_b"])[:, :NUM_LABELS]
    part_logits = pallas_matmul(part_features, params["part_w"],
                                params["part_b"])[:, :NUM_LABELS]
    part_logits = part_logits.reshape(batch, TOPN, NUM_LABELS)
    return concat_logits, part_logits, top_n_prob


def attention_net_forward(params, x_nchw, edge_anchors):
    resnet_out, feature, rpn_score, x_pad = _forward_front(params, x_nchw)

    # single small device->host sync: (B, 516) scores for the greedy NMS
    rpn_score_np = np.asarray(jax.device_get(rpn_score))
    all_cdds = [
        np.concatenate((s.reshape(-1, 1), edge_anchors.copy(),
                        np.arange(0, len(s)).reshape(-1, 1)), axis=1)
        for s in rpn_score_np
    ]
    top_n_cdds = np.stack([hard_nms(c, topn=TOPN, iou_thresh=0.25) for c in all_cdds])
    top_n_index = jnp.asarray(top_n_cdds[:, :, -1].astype(np.int32))
    boxes = jnp.asarray(top_n_cdds[:, :, 1:5].astype(np.int32))       # [B, TOPN, 4]

    concat_logits, part_logits, top_n_prob = _forward_back(
        params, x_pad, feature, rpn_score, top_n_index, boxes)

    return [resnet_out, concat_logits, part_logits, top_n_index, top_n_prob]


# ---------------------------------------------------------------------------
if __name__ == "__main__":
    key = jax.random.PRNGKey(0)
    kx, kp = jax.random.split(key)
    x = jax.random.normal(kx, (BATCH, 3, IMG, IMG), jnp.float32)   # NCHW input
    params = init_params(kp)

    # anchor count = 6*8*8 + 6*4*4 + 9*2*2 = 516 (matches ProposalNet output)
    num_anchors = 6 * RPN_H * RPN_H + 6 * (RPN_H // 2) ** 2 + 9 * (RPN_H // 4) ** 2
    _, edge_anchors, _ = generate_default_anchor_maps(num_anchors, IMG)
    edge_anchors = (edge_anchors + PAD_SIDE).astype(np.int64).astype(np.float32)

    outs = attention_net_forward(params, x, edge_anchors)
    outs = jax.block_until_ready(outs)

    raw_logits, concat_logits, part_logits, top_n_index, top_n_prob = outs
    assert raw_logits.shape == (BATCH, NUM_LABELS)
    assert concat_logits.shape == (BATCH, NUM_LABELS)
    assert part_logits.shape == (BATCH, TOPN, NUM_LABELS)
    assert top_n_index.shape == (BATCH, TOPN)
    assert top_n_prob.shape == (BATCH, TOPN)
    print("KERNEL_OK")
</pallas_src>

<mosaic_0001>
module attributes {stable_mosaic.version = 11 : i64} {
  func.func @_matmul_bias_kernel(%arg0: i32, %arg1: memref<128x128xbf16, #tpu.memory_space<vmem>>, %arg2: memref<128x128xbf16, #tpu.memory_space<vmem>>, %arg3: memref<1x128xf32, #tpu.memory_space<vmem>>, %arg4: memref<128x128xf32, #tpu.memory_space<vmem>>) attributes {dimension_semantics = [#tpu.dimension_semantics<parallel>], iteration_bounds = array<i64: 1>, scalar_prefetch = 0 : i64, scratch_operands = 0 : i64, tpu.core_type = #tpu.core_type<tc>, window_params = [{transform_indices = @transform_0, window_bounds = array<i64: 128, 128>}, {pipeline_mode = #tpu.pipeline_mode<synchronous>, transform_indices = @transform_1, window_bounds = array<i64: 128, 128>}, {pipeline_mode = #tpu.pipeline_mode<synchronous>, transform_indices = @transform_2, window_bounds = array<i64: 1, 128>}, {transform_indices = @transform_3, window_bounds = array<i64: 128, 128>}]} {
    %c0 = arith.constant 0 : index
    %c0_0 = arith.constant 0 : index
    %0 = vector.load %arg1[%c0, %c0_0] : memref<128x128xbf16, #tpu.memory_space<vmem>>, vector<128x128xbf16>
    %c0_1 = arith.constant 0 : index
    %c0_2 = arith.constant 0 : index
    %1 = vector.load %arg2[%c0_1, %c0_2] : memref<128x128xbf16, #tpu.memory_space<vmem>>, vector<128x128xbf16>
    %cst = arith.constant dense<0.000000e+00> : vector<128x128xf32>
    %2 = tpu.matmul %0, %1, %cst {dimension_numbers = #tpu.dot_dimension_numbers<[1], [0], [0], [1], [0, 0, 1, 1], [], []>} : vector<128x128xbf16>, vector<128x128xbf16>, vector<128x128xf32> -> vector<128x128xf32>
    %c0_3 = arith.constant 0 : index
    %c0_4 = arith.constant 0 : index
    %3 = vector.load %arg3[%c0_3, %c0_4] : memref<1x128xf32, #tpu.memory_space<vmem>>, vector<1x128xf32>
    %4 = vector.broadcast %3 : vector<1x128xf32> to vector<128x128xf32>
    %5 = arith.addf %2, %4 : vector<128x128xf32>
    %cst_5 = arith.constant 0.000000e+00 : f32
    %6 = vector.broadcast %cst_5 : f32 to vector<128x128xf32>
    %7 = arith.maximumf %5, %6 : vector<128x128xf32>
    %c0_6 = arith.constant 0 : index
    %c0_7 = arith.constant 0 : index
    %8 = vector.load %arg4[%c0_6, %c0_7] : memref<128x128xf32, #tpu.memory_space<vmem>>, vector<128x128xf32>
    tpu.vector_store %arg4[%c0_6, %c0_7], %7 {strides = array<i32>} : memref<128x128xf32, #tpu.memory_space<vmem>>, vector<128x128xf32>,
    return
  }
  func.func @transform_0(%arg0: i32) -> (i32, i32) {
    %c0_i32 = arith.constant 0 : i32
    %c0_i32_0 = arith.constant 0 : i32
    return %arg0, %c0_i32 : i32, i32
  }
  func.func @transform_1(%arg0: i32) -> (i32, i32) {
    %c0_i32 = arith.constant 0 : i32
    %c0_i32_0 = arith.constant 0 : i32
    %c0_i32_1 = arith.constant 0 : i32
    return %c0_i32, %c0_i32_0 : i32, i32
  }
  func.func @transform_2(%arg0: i32) -> (i32, i32) {
    %c0_i32 = arith.constant 0 : i32
    %c0_i32_0 = arith.constant 0 : i32
    %c0_i32_1 = arith.constant 0 : i32
    return %c0_i32, %c0_i32_0 : i32, i32
  }
  func.func @transform_3(%arg0: i32) -> (i32, i32) {
    %c0_i32 = arith.constant 0 : i32
    %c0_i32_0 = arith.constant 0 : i32
    return %arg0, %c0_i32 : i32, i32
  }
}

module attributes {stable_mosaic.version = 11 : i64} {
  func.func @_down_tidy_kernel(%arg0: i32, %arg1: memref<128x1152xbf16, #tpu.memory_space<vmem>>, %arg2: memref<1152x128xbf16, #tpu.memory_space<vmem>>, %arg3: memref<1x128xf32, #tpu.memory_space<vmem>>, %arg4: memref<128x128xbf16, #tpu.memory_space<vmem>>, %arg5: memref<1x128xf32, #tpu.memory_space<vmem>>, %arg6: memref<128x128xbf16, #tpu.memory_space<vmem>>, %arg7: memref<128x128xf32, #tpu.memory_space<vmem>>) attributes {dimension_semantics = [#tpu.dimension_semantics<parallel>], iteration_bounds = array<i64: 1>, scalar_prefetch = 0 : i64, scratch_operands = 0 : i64, tpu.core_type = #tpu.core_type<tc>, window_params = [{transform_indices = @transform_0, window_bounds = array<i64: 128, 1152>}, {pipeline_mode = #tpu.pipeline_mode<synchronous>, transform_indices = @transform_1, window_bounds = array<i64: 1152, 128>}, {pipeline_mode = #tpu.pipeline_mode<synchronous>, transform_indices = @transform_2, window_bounds = array<i64: 1, 128>}, {pipeline_mode = #tpu.pipeline_mode<synchronous>, transform_indices = @transform_3, window_bounds = array<i64: 128, 128>}, {pipeline_mode = #tpu.pipeline_mode<synchronous>, transform_indices = @transform_4, window_bounds = array<i64: 1, 128>}, {transform_indices = @transform_5, window_bounds = array<i64: 128, 128>}, {transform_indices = @transform_6, window_bounds = array<i64: 128, 128>}]} {
    %c0 = arith.constant 0 : index
    %c0_0 = arith.constant 0 : index
    %0 = vector.load %arg1[%c0, %c0_0] : memref<128x1152xbf16, #tpu.memory_space<vmem>>, vector<128x1152xbf16>
    %c0_1 = arith.constant 0 : index
    %c0_2 = arith.constant 0 : index
    %1 = vector.load %arg2[%c0_1, %c0_2] : memref<1152x128xbf16, #tpu.memory_space<vmem>>, vector<1152x128xbf16>
    %cst = arith.constant dense<0.000000e+00> : vector<128x128xf32>
    %2 = tpu.matmul %0, %1, %cst {dimension_numbers = #tpu.dot_dimension_numbers<[1], [0], [0], [1], [0, 0, 1, 1], [], []>} : vector<128x1152xbf16>, vector<1152x128xbf16>, vector<128x128xf32> -> vector<128x128xf32>
    %c0_3 = arith.constant 0 : index
    %c0_4 = arith.constant 0 : index
    %3 = vector.load %arg3[%c0_3, %c0_4] : memref<1x128xf32, #tpu.memory_space<vmem>>, vector<1x128xf32>
    %4 = vector.broadcast %3 : vector<1x128xf32> to vector<128x128xf32>
    %5 = arith.addf %2, %4 : vector<128x128xf32>
    %cst_5 = arith.constant 0.000000e+00 : f32
    %6 = vector.broadcast %cst_5 : f32 to vector<128x128xf32>
    %7 = arith.maximumf %5, %6 : vector<128x128xf32>
    %8 = arith.truncf %7 : vector<128x128xf32> to vector<128x128xbf16>
    %c0_6 = arith.constant 0 : index
    %c0_7 = arith.constant 0 : index
    %9 = vector.load %arg6[%c0_6, %c0_7] : memref<128x128xbf16, #tpu.memory_space<vmem>>, vector<128x128xbf16>
    tpu.vector_store %arg6[%c0_6, %c0_7], %8 {strides = array<i32>} : memref<128x128xbf16, #tpu.memory_space<vmem>>, vector<128x128xbf16>,
    %10 = arith.truncf %7 : vector<128x128xf32> to vector<128x128xbf16>
    %c0_8 = arith.constant 0 : index
    %c0_9 = arith.constant 0 : index
    %11 = vector.load %arg4[%c0_8, %c0_9] : memref<128x128xbf16, #tpu.memory_space<vmem>>, vector<128x128xbf16>
    %cst_10 = arith.constant dense<0.000000e+00> : vector<128x128xf32>
    %12 = tpu.matmul %10, %11, %cst_10 {dimension_numbers = #tpu.dot_dimension_numbers<[1], [0], [0], [1], [0, 0, 1, 1], [], []>} : vector<128x128xbf16>, vector<128x128xbf16>, vector<128x128xf32> -> vector<128x128xf32>
    %c0_11 = arith.constant 0 : index
    %c0_12 = arith.constant 0 : index
    %13 = vector.load %arg5[%c0_11, %c0_12] : memref<1x128xf32, #tpu.memory_space<vmem>>, vector<1x128xf32>
    %14 = vector.broadcast %13 : vector<1x128xf32> to vector<128x128xf32>
    %15 = arith.addf %12, %14 : vector<128x128xf32>
    %c0_13 = arith.constant 0 : index
    %c0_14 = arith.constant 0 : index
    %16 = vector.load %arg7[%c0_13, %c0_14] : memref<128x128xf32, #tpu.memory_space<vmem>>, vector<128x128xf32>
    tpu.vector_store %arg7[%c0_13, %c0_14], %15 {strides = array<i32>} : memref<128x128xf32, #tpu.memory_space<vmem>>, vector<128x128xf32>,
    return
  }
  func.func @transform_0(%arg0: i32) -> (i32, i32) {
    %c0_i32 = arith.constant 0 : i32
    %c0_i32_0 = arith.constant 0 : i32
    return %arg0, %c0_i32 : i32, i32
  }
  func.func @transform_1(%arg0: i32) -> (i32, i32) {
    %c0_i32 = arith.constant 0 : i32
    %c0_i32_0 = arith.constant 0 : i32
    %c0_i32_1 = arith.constant 0 : i32
    return %c0_i32, %c0_i32_0 : i32, i32
  }
  func.func @transform_2(%arg0: i32) -> (i32, i32) {
    %c0_i32 = arith.constant 0 : i32
    %c0_i32_0 = arith.constant 0 : i32
    %c0_i32_1 = arith.constant 0 : i32
    return %c0_i32, %c0_i32_0 : i32, i32
  }
  func.func @transform_3(%arg0: i32) -> (i32, i32) {
    %c0_i32 = arith.constant 0 : i32
    %c0_i32_0 = arith.constant 0 : i32
    %c0_i32_1 = arith.constant 0 : i32
    return %c0_i32, %c0_i32_0 : i32, i32
  }
  func.func @transform_4(%arg0: i32) -> (i32, i32) {
    %c0_i32 = arith.constant 0 : i32
    %c0_i32_0 = arith.constant 0 : i32
    %c0_i32_1 = arith.constant 0 : i32
    return %c0_i32, %c0_i32_0 : i32, i32
  }
  func.func @transform_5(%arg0: i32) -> (i32, i32) {
    %c0_i32 = arith.constant 0 : i32
    %c0_i32_0 = arith.constant 0 : i32
    return %arg0, %c0_i32 : i32, i32
  }
  func.func @transform_6(%arg0: i32) -> (i32, i32) {
    %c0_i32 = arith.constant 0 : i32
    %c0_i32_0 = arith.constant 0 : i32
    return %arg0, %c0_i32 : i32, i32
  }
}

module attributes {stable_mosaic.version = 11 : i64} {
  func.func @_down_tidy_kernel(%arg0: i32, %arg1: memref<32x1152xbf16, #tpu.memory_space<vmem>>, %arg2: memref<1152x128xbf16, #tpu.memory_space<vmem>>, %arg3: memref<1x128xf32, #tpu.memory_space<vmem>>, %arg4: memref<128x128xbf16, #tpu.memory_space<vmem>>, %arg5: memref<1x128xf32, #tpu.memory_space<vmem>>, %arg6: memref<32x128xbf16, #tpu.memory_space<vmem>>, %arg7: memref<32x128xf32, #tpu.memory_space<vmem>>) attributes {dimension_semantics = [#tpu.dimension_semantics<parallel>], iteration_bounds = array<i64: 1>, scalar_prefetch = 0 : i64, scratch_operands = 0 : i64, tpu.core_type = #tpu.core_type<tc>, window_params = [{transform_indices = @transform_0, window_bounds = array<i64: 32, 1152>}, {pipeline_mode = #tpu.pipeline_mode<synchronous>, transform_indices = @transform_1, window_bounds = array<i64: 1152, 128>}, {pipeline_mode = #tpu.pipeline_mode<synchronous>, transform_indices = @transform_2, window_bounds = array<i64: 1, 128>}, {pipeline_mode = #tpu.pipeline_mode<synchronous>, transform_indices = @transform_3, window_bounds = array<i64: 128, 128>}, {pipeline_mode = #tpu.pipeline_mode<synchronous>, transform_indices = @transform_4, window_bounds = array<i64: 1, 128>}, {transform_indices = @transform_5, window_bounds = array<i64: 32, 128>}, {transform_indices = @transform_6, window_bounds = array<i64: 32, 128>}]} {
    %c0 = arith.constant 0 : index
    %c0_0 = arith.constant 0 : index
    %0 = vector.load %arg1[%c0, %c0_0] : memref<32x1152xbf16, #tpu.memory_space<vmem>>, vector<32x1152xbf16>
    %c0_1 = arith.constant 0 : index
    %c0_2 = arith.constant 0 : index
    %1 = vector.load %arg2[%c0_1, %c0_2] : memref<1152x128xbf16, #tpu.memory_space<vmem>>, vector<1152x128xbf16>
    %cst = arith.constant dense<0.000000e+00> : vector<32x128xf32>
    %2 = tpu.matmul %0, %1, %cst {dimension_numbers = #tpu.dot_dimension_numbers<[1], [0], [0], [1], [0, 0, 1, 1], [], []>} : vector<32x1152xbf16>, vector<1152x128xbf16>, vector<32x128xf32> -> vector<32x128xf32>
    %c0_3 = arith.constant 0 : index
    %c0_4 = arith.constant 0 : index
    %3 = vector.load %arg3[%c0_3, %c0_4] : memref<1x128xf32, #tpu.memory_space<vmem>>, vector<1x128xf32>
    %4 = vector.broadcast %3 : vector<1x128xf32> to vector<32x128xf32>
    %5 = arith.addf %2, %4 : vector<32x128xf32>
    %cst_5 = arith.constant 0.000000e+00 : f32
    %6 = vector.broadcast %cst_5 : f32 to vector<32x128xf32>
    %7 = arith.maximumf %5, %6 : vector<32x128xf32>
    %8 = arith.truncf %7 : vector<32x128xf32> to vector<32x128xbf16>
    %c0_6 = arith.constant 0 : index
    %c0_7 = arith.constant 0 : index
    %9 = vector.load %arg6[%c0_6, %c0_7] : memref<32x128xbf16, #tpu.memory_space<vmem>>, vector<32x128xbf16>
    tpu.vector_store %arg6[%c0_6, %c0_7], %8 {strides = array<i32>} : memref<32x128xbf16, #tpu.memory_space<vmem>>, vector<32x128xbf16>,
    %10 = arith.truncf %7 : vector<32x128xf32> to vector<32x128xbf16>
    %c0_8 = arith.constant 0 : index
    %c0_9 = arith.constant 0 : index
    %11 = vector.load %arg4[%c0_8, %c0_9] : memref<128x128xbf16, #tpu.memory_space<vmem>>, vector<128x128xbf16>
    %cst_10 = arith.constant dense<0.000000e+00> : vector<32x128xf32>
    %12 = tpu.matmul %10, %11, %cst_10 {dimension_numbers = #tpu.dot_dimension_numbers<[1], [0], [0], [1], [0, 0, 1, 1], [], []>} : vector<32x128xbf16>, vector<128x128xbf16>, vector<32x128xf32> -> vector<32x128xf32>
    %c0_11 = arith.constant 0 : index
    %c0_12 = arith.constant 0 : index
    %13 = vector.load %arg5[%c0_11, %c0_12] : memref<1x128xf32, #tpu.memory_space<vmem>>, vector<1x128xf32>
    %14 = vector.broadcast %13 : vector<1x128xf32> to vector<32x128xf32>
    %15 = arith.addf %12, %14 : vector<32x128xf32>
    %c0_13 = arith.constant 0 : index
    %c0_14 = arith.constant 0 : index
    %16 = vector.load %arg7[%c0_13, %c0_14] : memref<32x128xf32, #tpu.memory_space<vmem>>, vector<32x128xf32>
    tpu.vector_store %arg7[%c0_13, %c0_14], %15 {strides = array<i32>} : memref<32x128xf32, #tpu.memory_space<vmem>>, vector<32x128xf32>,
    return
  }
  func.func @transform_0(%arg0: i32) -> (i32, i32) {
    %c0_i32 = arith.constant 0 : i32
    %c0_i32_0 = arith.constant 0 : i32
    return %arg0, %c0_i32 : i32, i32
  }
  func.func @transform_1(%arg0: i32) -> (i32, i32) {
    %c0_i32 = arith.constant 0 : i32
    %c0_i32_0 = arith.constant 0 : i32
    %c0_i32_1 = arith.constant 0 : i32
    return %c0_i32, %c0_i32_0 : i32, i32
  }
  func.func @transform_2(%arg0: i32) -> (i32, i32) {
    %c0_i32 = arith.constant 0 : i32
    %c0_i32_0 = arith.constant 0 : i32
    %c0_i32_1 = arith.constant 0 : i32
    return %c0_i32, %c0_i32_0 : i32, i32
  }
  func.func @transform_3(%arg0: i32) -> (i32, i32) {
    %c0_i32 = arith.constant 0 : i32
    %c0_i32_0 = arith.constant 0 : i32
    %c0_i32_1 = arith.constant 0 : i32
    return %c0_i32, %c0_i32_0 : i32, i32
  }
  func.func @transform_4(%arg0: i32) -> (i32, i32) {
    %c0_i32 = arith.constant 0 : i32
    %c0_i32_0 = arith.constant 0 : i32
    %c0_i32_1 = arith.constant 0 : i32
    return %c0_i32, %c0_i32_0 : i32, i32
  }
  func.func @transform_5(%arg0: i32) -> (i32, i32) {
    %c0_i32 = arith.constant 0 : i32
    %c0_i32_0 = arith.constant 0 : i32
    return %arg0, %c0_i32 : i32, i32
  }
  func.func @transform_6(%arg0: i32) -> (i32, i32) {
    %c0_i32 = arith.constant 0 : i32
    %c0_i32_0 = arith.constant 0 : i32
    return %arg0, %c0_i32 : i32, i32
  }
}

module attributes {stable_mosaic.version = 11 : i64} {
  func.func @_down_tidy_kernel(%arg0: i32, %arg1: memref<16x1152xbf16, #tpu.memory_space<vmem>>, %arg2: memref<1152x128xbf16, #tpu.memory_space<vmem>>, %arg3: memref<1x128xf32, #tpu.memory_space<vmem>>, %arg4: memref<128x128xbf16, #tpu.memory_space<vmem>>, %arg5: memref<1x128xf32, #tpu.memory_space<vmem>>, %arg6: memref<16x128xbf16, #tpu.memory_space<vmem>>, %arg7: memref<16x128xf32, #tpu.memory_space<vmem>>) attributes {dimension_semantics = [#tpu.dimension_semantics<parallel>], iteration_bounds = array<i64: 1>, scalar_prefetch = 0 : i64, scratch_operands = 0 : i64, tpu.core_type = #tpu.core_type<tc>, window_params = [{transform_indices = @transform_0, window_bounds = array<i64: 16, 1152>}, {pipeline_mode = #tpu.pipeline_mode<synchronous>, transform_indices = @transform_1, window_bounds = array<i64: 1152, 128>}, {pipeline_mode = #tpu.pipeline_mode<synchronous>, transform_indices = @transform_2, window_bounds = array<i64: 1, 128>}, {pipeline_mode = #tpu.pipeline_mode<synchronous>, transform_indices = @transform_3, window_bounds = array<i64: 128, 128>}, {pipeline_mode = #tpu.pipeline_mode<synchronous>, transform_indices = @transform_4, window_bounds = array<i64: 1, 128>}, {transform_indices = @transform_5, window_bounds = array<i64: 16, 128>}, {transform_indices = @transform_6, window_bounds = array<i64: 16, 128>}]} {
    %c0 = arith.constant 0 : index
    %c0_0 = arith.constant 0 : index
    %0 = vector.load %arg1[%c0, %c0_0] : memref<16x1152xbf16, #tpu.memory_space<vmem>>, vector<16x1152xbf16>
    %c0_1 = arith.constant 0 : index
    %c0_2 = arith.constant 0 : index
    %1 = vector.load %arg2[%c0_1, %c0_2] : memref<1152x128xbf16, #tpu.memory_space<vmem>>, vector<1152x128xbf16>
    %cst = arith.constant dense<0.000000e+00> : vector<16x128xf32>
    %2 = tpu.matmul %0, %1, %cst {dimension_numbers = #tpu.dot_dimension_numbers<[1], [0], [0], [1], [0, 0, 1, 1], [], []>} : vector<16x1152xbf16>, vector<1152x128xbf16>, vector<16x128xf32> -> vector<16x128xf32>
    %c0_3 = arith.constant 0 : index
    %c0_4 = arith.constant 0 : index
    %3 = vector.load %arg3[%c0_3, %c0_4] : memref<1x128xf32, #tpu.memory_space<vmem>>, vector<1x128xf32>
    %4 = vector.broadcast %3 : vector<1x128xf32> to vector<16x128xf32>
    %5 = arith.addf %2, %4 : vector<16x128xf32>
    %cst_5 = arith.constant 0.000000e+00 : f32
    %6 = vector.broadcast %cst_5 : f32 to vector<16x128xf32>
    %7 = arith.maximumf %5, %6 : vector<16x128xf32>
    %8 = arith.truncf %7 : vector<16x128xf32> to vector<16x128xbf16>
    %c0_6 = arith.constant 0 : index
    %c0_7 = arith.constant 0 : index
    %9 = vector.load %arg6[%c0_6, %c0_7] : memref<16x128xbf16, #tpu.memory_space<vmem>>, vector<16x128xbf16>
    tpu.vector_store %arg6[%c0_6, %c0_7], %8 {strides = array<i32>} : memref<16x128xbf16, #tpu.memory_space<vmem>>, vector<16x128xbf16>,
    %10 = arith.truncf %7 : vector<16x128xf32> to vector<16x128xbf16>
    %c0_8 = arith.constant 0 : index
    %c0_9 = arith.constant 0 : index
    %11 = vector.load %arg4[%c0_8, %c0_9] : memref<128x128xbf16, #tpu.memory_space<vmem>>, vector<128x128xbf16>
    %cst_10 = arith.constant dense<0.000000e+00> : vector<16x128xf32>
    %12 = tpu.matmul %10, %11, %cst_10 {dimension_numbers = #tpu.dot_dimension_numbers<[1], [0], [0], [1], [0, 0, 1, 1], [], []>} : vector<16x128xbf16>, vector<128x128xbf16>, vector<16x128xf32> -> vector<16x128xf32>
    %c0_11 = arith.constant 0 : index
    %c0_12 = arith.constant 0 : index
    %13 = vector.load %arg5[%c0_11, %c0_12] : memref<1x128xf32, #tpu.memory_space<vmem>>, vector<1x128xf32>
    %14 = vector.broadcast %13 : vector<1x128xf32> to vector<16x128xf32>
    %15 = arith.addf %12, %14 : vector<16x128xf32>
    %c0_13 = arith.constant 0 : index
    %c0_14 = arith.constant 0 : index
    %16 = vector.load %arg7[%c0_13, %c0_14] : memref<16x128xf32, #tpu.memory_space<vmem>>, vector<16x128xf32>
    tpu.vector_store %arg7[%c0_13, %c0_14], %15 {strides = array<i32>} : memref<16x128xf32, #tpu.memory_space<vmem>>, vector<16x128xf32>,
    return
  }
  func.func @transform_0(%arg0: i32) -> (i32, i32) {
    %c0_i32 = arith.constant 0 : i32
    %c0_i32_0 = arith.constant 0 : i32
    return %arg0, %c0_i32 : i32, i32
  }
  func.func @transform_1(%arg0: i32) -> (i32, i32) {
    %c0_i32 = arith.constant 0 : i32
    %c0_i32_0 = arith.constant 0 : i32
    %c0_i32_1 = arith.constant 0 : i32
    return %c0_i32, %c0_i32_0 : i32, i32
  }
  func.func @transform_2(%arg0: i32) -> (i32, i32) {
    %c0_i32 = arith.constant 0 : i32
    %c0_i32_0 = arith.constant 0 : i32
    %c0_i32_1 = arith.constant 0 : i32
    return %c0_i32, %c0_i32_0 : i32, i32
  }
  func.func @transform_3(%arg0: i32) -> (i32, i32) {
    %c0_i32 = arith.constant 0 : i32
    %c0_i32_0 = arith.constant 0 : i32
    %c0_i32_1 = arith.constant 0 : i32
    return %c0_i32, %c0_i32_0 : i32, i32
  }
  func.func @transform_4(%arg0: i32) -> (i32, i32) {
    %c0_i32 = arith.constant 0 : i32
    %c0_i32_0 = arith.constant 0 : i32
    %c0_i32_1 = arith.constant 0 : i32
    return %c0_i32, %c0_i32_0 : i32, i32
  }
  func.func @transform_5(%arg0: i32) -> (i32, i32) {
    %c0_i32 = arith.constant 0 : i32
    %c0_i32_0 = arith.constant 0 : i32
    return %arg0, %c0_i32 : i32, i32
  }
  func.func @transform_6(%arg0: i32) -> (i32, i32) {
    %c0_i32 = arith.constant 0 : i32
    %c0_i32_0 = arith.constant 0 : i32
    return %arg0, %c0_i32 : i32, i32
  }
}

module attributes {stable_mosaic.version = 11 : i64} {
  func.func @_pool_cls_kernel(%arg0: i32, %arg1: memref<2x64x128xf32, #tpu.memory_space<vmem>>, %arg2: memref<128x128xbf16, #tpu.memory_space<vmem>>, %arg3: memref<1x128xf32, #tpu.memory_space<vmem>>, %arg4: memref<2x128xf32, #tpu.memory_space<vmem>>, %arg5: memref<2x128xf32, #tpu.memory_space<vmem>>) attributes {dimension_semantics = [#tpu.dimension_semantics<arbitrary>], iteration_bounds = array<i64: 1>, scalar_prefetch = 0 : i64, scratch_operands = 0 : i64, tpu.core_type = #tpu.core_type<tc>, window_params = [{pipeline_mode = #tpu.pipeline_mode<synchronous>, transform_indices = @transform_0, window_bounds = array<i64: 2, 64, 128>}, {pipeline_mode = #tpu.pipeline_mode<synchronous>, transform_indices = @transform_1, window_bounds = array<i64: 128, 128>}, {pipeline_mode = #tpu.pipeline_mode<synchronous>, transform_indices = @transform_2, window_bounds = array<i64: 1, 128>}, {pipeline_mode = #tpu.pipeline_mode<synchronous>, transform_indices = @transform_3, window_bounds = array<i64: 2, 128>}, {pipeline_mode = #tpu.pipeline_mode<synchronous>, transform_indices = @transform_4, window_bounds = array<i64: 2, 128>}]} {
    %c0 = arith.constant 0 : index
    %c0_0 = arith.constant 0 : index
    %c0_1 = arith.constant 0 : index
    %0 = vector.load %arg1[%c0, %c0_0, %c0_1] : memref<2x64x128xf32, #tpu.memory_space<vmem>>, vector<2x64x128xf32>
    %cst = arith.constant dense<0.000000e+00> : vector<2x128xf32>
    %1 = vector.multi_reduction <add>, %0, %cst [1] : vector<2x64x128xf32> to vector<2x128xf32>
    %cst_2 = arith.constant 6.400000e+01 : f32
    %2 = vector.broadcast %cst_2 : f32 to vector<2x128xf32>
    %3 = arith.divf %1, %2 : vector<2x128xf32>
    %c0_3 = arith.constant 0 : index
    %c0_4 = arith.constant 0 : index
    %4 = vector.load %arg4[%c0_3, %c0_4] : memref<2x128xf32, #tpu.memory_space<vmem>>, vector<2x128xf32>
    tpu.vector_store %arg4[%c0_3, %c0_4], %3 {strides = array<i32>} : memref<2x128xf32, #tpu.memory_space<vmem>>, vector<2x128xf32>,
    %5 = arith.truncf %3 : vector<2x128xf32> to vector<2x128xbf16>
    %c0_5 = arith.constant 0 : index
    %c0_6 = arith.constant 0 : index
    %6 = vector.load %arg2[%c0_5, %c0_6] : memref<128x128xbf16, #tpu.memory_space<vmem>>, vector<128x128xbf16>
    %cst_7 = arith.constant dense<0.000000e+00> : vector<2x128xf32>
    %7 = tpu.matmul %5, %6, %cst_7 {dimension_numbers = #tpu.dot_dimension_numbers<[1], [0], [0], [1], [0, 0, 1, 1], [], []>} : vector<2x128xbf16>, vector<128x128xbf16>, vector<2x128xf32> -> vector<2x128xf32>
    %c0_8 = arith.constant 0 : index
    %c0_9 = arith.constant 0 : index
    %8 = vector.load %arg3[%c0_8, %c0_9] : memref<1x128xf32, #tpu.memory_space<vmem>>, vector<1x128xf32>
    %9 = vector.broadcast %8 : vector<1x128xf32> to vector<2x128xf32>
    %10 = arith.addf %7, %9 : vector<2x128xf32>
    %c0_10 = arith.constant 0 : index
    %c0_11 = arith.constant 0 : index
    %11 = vector.load %arg5[%c0_10, %c0_11] : memref<2x128xf32, #tpu.memory_space<vmem>>, vector<2x128xf32>
    tpu.vector_store %arg5[%c0_10, %c0_11], %10 {strides = array<i32>} : memref<2x128xf32, #tpu.memory_space<vmem>>, vector<2x128xf32>,
    return
  }
  func.func @transform_0(%arg0: i32) -> (i32, i32, i32) {
    %c0_i32 = arith.constant 0 : i32
    %c0_i32_0 = arith.constant 0 : i32
    %c0_i32_1 = arith.constant 0 : i32
    %c0_i32_2 = arith.constant 0 : i32
    return %c0_i32, %c0_i32_0, %c0_i32_1 : i32, i32, i32
  }
  func.func @transform_1(%arg0: i32) -> (i32, i32) {
    %c0_i32 = arith.constant 0 : i32
    %c0_i32_0 = arith.constant 0 : i32
    %c0_i32_1 = arith.constant 0 : i32
    return %c0_i32, %c0_i32_0 : i32, i32
  }
  func.func @transform_2(%arg0: i32) -> (i32, i32) {
    %c0_i32 = arith.constant 0 : i32
    %c0_i32_0 = arith.constant 0 : i32
    %c0_i32_1 = arith.constant 0 : i32
    return %c0_i32, %c0_i32_0 : i32, i32
  }
  func.func @transform_3(%arg0: i32) -> (i32, i32) {
    %c0_i32 = arith.constant 0 : i32
    %c0_i32_0 = arith.constant 0 : i32
    %c0_i32_1 = arith.constant 0 : i32
    return %c0_i32, %c0_i32_0 : i32, i32
  }
  func.func @transform_4(%arg0: i32) -> (i32, i32) {
    %c0_i32 = arith.constant 0 : i32
    %c0_i32_0 = arith.constant 0 : i32
    %c0_i32_1 = arith.constant 0 : i32
    return %c0_i32, %c0_i32_0 : i32, i32
  }
}

</mosaic_0001>

<llo_original>
// kernel: _forward_front.5
$region0: #{_forward_front.5}
  #allocation0 [shape = 'u32[]', space=smem, size = 0x4, offset = 0x4, fixed_abs, tag = 'smem constant byte address 0x4 - core index']
  #allocation1 [shape = 'u32[144,128]{1,0:T(1,128)}', space=vmem, size = 0x12000, scoped, tag = 'internal scratch']
  %s0 = inlined_call_operand.vmem [shape: bf16[128,128], index: 0, kind: input, shape index: {}]
  %s1 = inlined_call_operand.vmem [shape: bf16[128,128], index: 1, kind: input, shape index: {}]
  %s2 = inlined_call_operand.vmem [shape: f32[1,128], index: 2, kind: input, shape index: {}]
  %s3 = inlined_call_operand.vmem [shape: f32[128,128], index: 3, kind: output, shape index: {}]
  %s4 = sld [smem:[#allocation0]]
  $region22: #{_forward_front.5} parent=0
    _
  %s6 = ssub.s32 1, %s4
  %s7 = scalar_select 0, %s6, %s4
  // Predicated region
  $region2: #{_forward_front.5} parent=0 // pred_check
    _
  $region3: #{_forward_front.5} parent=0 // pred_check_branch
    %9 = sbr.rel (0) target = $region5
  $region4: #{_forward_front.5} parent=0 // pred_region
    _
  $region5: #{_forward_front.5} parent=0 // pred_fallthru
    _
  // Predicated region
  $region6: #{_forward_front.5} parent=0 // pred_check
    _
  $region7: #{_forward_front.5} parent=0 // pred_check_branch
    %11 = sbr.rel (0) target = $region9
  $region8: #{_forward_front.5} parent=0 // pred_region
    _
  $region9: #{_forward_front.5} parent=0 // pred_fallthru
    _
  // Predicated region
  $region10: #{_forward_front.5} parent=0 // pred_check
    _
  $region11: #{_forward_front.5} parent=0 // pred_check_branch
    %13 = sbr.rel (0) target = $region13
  $region12: #{_forward_front.5} parent=0 // pred_region
    _
  $region13: #{_forward_front.5} parent=0 // pred_fallthru
    _
  %v15 = vld [vmem:[%s0] sm:$0xf]
  %v16 = vld [vmem:[%s0 + $0x4] sm:$0xf]
  %v17 = vld [vmem:[%s0 + $0x8] sm:$0xf]
  %v18 = vld [vmem:[%s0 + $0xc] sm:$0xf]
  %v19 = vld [vmem:[%s0 + $0x10] sm:$0xf]
  %v20 = vld [vmem:[%s0 + $0x14] sm:$0xf]
  %v21 = vld [vmem:[%s0 + $0x18] sm:$0xf]
  %v22 = vld [vmem:[%s0 + $0x1c] sm:$0xf]
  %v23 = vld [vmem:[%s0 + $0x20] sm:$0xf]
  %v24 = vld [vmem:[%s0 + $0x24] sm:$0xf]
  %v25 = vld [vmem:[%s0 + $0x28] sm:$0xf]
  %v26 = vld [vmem:[%s0 + $0x2c] sm:$0xf]
  %v27 = vld [vmem:[%s0 + $0x30] sm:$0xf]
  %v28 = vld [vmem:[%s0 + $0x34] sm:$0xf]
  %v29 = vld [vmem:[%s0 + $0x38] sm:$0xf]
  %v30 = vld [vmem:[%s0 + $0x3c] sm:$0xf]
  %v31 = vld [vmem:[%s1] sm:$0xf]
  %v32 = vld [vmem:[%s1 + $0x4] sm:$0xf]
  %v33 = vld [vmem:[%s1 + $0x8] sm:$0xf]
  %v34 = vld [vmem:[%s1 + $0xc] sm:$0xf]
  %v35 = vld [vmem:[%s1 + $0x10] sm:$0xf]
  %v36 = vld [vmem:[%s1 + $0x14] sm:$0xf]
  %v37 = vld [vmem:[%s1 + $0x18] sm:$0xf]
  %v38 = vld [vmem:[%s1 + $0x1c] sm:$0xf]
  %v39 = vld [vmem:[%s1 + $0x20] sm:$0xf]
  %v40 = vld [vmem:[%s1 + $0x24] sm:$0xf]
  %v41 = vld [vmem:[%s1 + $0x28] sm:$0xf]
  %v42 = vld [vmem:[%s1 + $0x2c] sm:$0xf]
  %v43 = vld [vmem:[%s1 + $0x30] sm:$0xf]
  %v44 = vld [vmem:[%s1 + $0x34] sm:$0xf]
  %v45 = vld [vmem:[%s1 + $0x38] sm:$0xf]
  %v46 = vld [vmem:[%s1 + $0x3c] sm:$0xf]
  %v47 = vld [vmem:[%s2] sm:$0x1]
  %v49 = vlaneseq
  %v50 = vshrl.u32 %v49, 7
  %v51 = vsub.s32 0, %v50
  %v52 = vrot.slane %v47, %v51
  %v70 = vunpack.c.l.b16 %v15
  %v71 = vunpack.c.l.b16 %v16
  %v72 = vunpack.c.l.b16 %v17
  %v73 = vunpack.c.l.b16 %v18
  %v74 = vunpack.c.l.b16 %v19
  %v75 = vunpack.c.l.b16 %v20
  %v76 = vunpack.c.l.b16 %v21
  %v77 = vunpack.c.l.b16 %v22
  %v78 = vunpack.c.l.b16 %v23
  %v79 = vunpack.c.l.b16 %v24
  %v80 = vunpack.c.l.b16 %v25
  %v81 = vunpack.c.l.b16 %v26
  %v82 = vunpack.c.l.b16 %v27
  %v83 = vunpack.c.l.b16 %v28
  %v84 = vunpack.c.l.b16 %v29
  %v85 = vunpack.c.l.b16 %v30
  %v86 = vpack.c.b16 %v71, %v70
  %v87 = vpack.c.b16 %v73, %v72
  %v88 = vpack.c.b16 %v75, %v74
  %v89 = vpack.c.b16 %v77, %v76
  %v90 = vpack.c.b16 %v79, %v78
  %v91 = vpack.c.b16 %v81, %v80
  %v92 = vpack.c.b16 %v83, %v82
  %v93 = vpack.c.b16 %v85, %v84
  %v118 = vunpack.c.l.b16 %v31
  %v119 = vunpack.c.l.b16 %v32
  %v120 = vunpack.c.l.b16 %v33
  %v121 = vunpack.c.l.b16 %v34
  %v122 = vunpack.c.l.b16 %v35
  %v123 = vunpack.c.l.b16 %v36
  %v124 = vunpack.c.l.b16 %v37
  %v125 = vunpack.c.l.b16 %v38
  %v126 = vunpack.c.l.b16 %v39
  %v127 = vunpack.c.l.b16 %v40
  %v128 = vunpack.c.l.b16 %v41
  %v129 = vunpack.c.l.b16 %v42
  %v130 = vunpack.c.l.b16 %v43
  %v131 = vunpack.c.l.b16 %v44
  %v132 = vunpack.c.l.b16 %v45
  %v133 = vunpack.c.l.b16 %v46
  %v134 = vpack.c.b16 %v119, %v118
  %v135 = vpack.c.b16 %v121, %v120
  %v136 = vpack.c.b16 %v123, %v122
  %v137 = vpack.c.b16 %v125, %v124
  %v138 = vpack.c.b16 %v127, %v126
  %v139 = vpack.c.b16 %v129, %v128
  %v140 = vpack.c.b16 %v131, %v130
  %v141 = vpack.c.b16 %v133, %v132
  %150 = vmatprep.subr.bf16.mxu0 0
  %151 = vmatpush1.bf16.msra.mxu0 %v134
  %152 = vmatprep.subr.bf16.mxu0 0
  %153 = vmatpush1.bf16.msra.mxu0 %v135
  %154 = vmatprep.subr.bf16.mxu0 0
  %155 = vmatpush1.bf16.msra.mxu0 %v136
  %156 = vmatprep.subr.bf16.mxu0 0
  %157 = vmatpush1.bf16.msra.mxu0 %v137
  %158 = vmatprep.subr.bf16.mxu0 0
  %159 = vmatpush1.bf16.msra.mxu0 %v138
  %160 = vmatprep.subr.bf16.mxu0 0
  %161 = vmatpush1.bf16.msra.mxu0 %v139
  %162 = vmatprep.subr.bf16.mxu0 0
  %163 = vmatpush1.bf16.msra.mxu0 %v140
  %164 = vmatprep.subr.bf16.mxu0 0
  %165 = vmatpush1.bf16.msra.mxu0 %v141
  %166 = vmatprep.subr.bf16.mxu0 0
  %167 = vmatpush1.bf16.msra.mxu0 0
  %168 = vmatprep.subr.bf16.mxu0 0
  %169 = vmatpush1.bf16.msra.mxu0 0
  %170 = vmatprep.subr.bf16.mxu0 0
  %171 = vmatpush1.bf16.msra.mxu0 0
  %172 = vmatprep.subr.bf16.mxu0 0
  %173 = vmatpush1.bf16.msra.mxu0 0
  %174 = vmatprep.subr.bf16.mxu0 0
  %175 = vmatpush1.bf16.msra.mxu0 0
  %176 = vmatprep.subr.bf16.mxu0 0
  %177 = vmatpush1.bf16.msra.mxu0 0
  %178 = vmatprep.subr.bf16.mxu0 0
  %179 = vmatpush1.bf16.msra.mxu0 0
  %180 = vmatprep.subr.bf16.mxu0 0
  %181 = vmatpush1.bf16.msra.mxu0 0
  %182 = vmatprep.mubr.bf16.mxu0 0
  %183 = vmatmul.mubr.bf16.gmra.mrb[0].mxu0 %v86
  %v184 = vpop.f32.mrb[0].mxu0
  %v185 = vadd.f32 %v52, %v184
  %v186 = vpop.f32.mrb[0].mxu0
  %v187 = vpop.f32.mrb[0].mxu0
  %v188 = vadd.f32 %v52, %v187
  %v189 = vpop.f32.mrb[0].mxu0
  %190 = vmatprep.mubr.bf16.mxu0 0
  %191 = vmatmul.mubr.bf16.gmra.mrb[0].mxu0 %v87
  %v192 = vpop.f32.mrb[0].mxu0
  %v193 = vadd.f32 %v52, %v192
  %v194 = vpop.f32.mrb[0].mxu0
  %v195 = vpop.f32.mrb[0].mxu0
  %v196 = vadd.f32 %v52, %v195
  %v197 = vpop.f32.mrb[0].mxu0
  %198 = vmatprep.mubr.bf16.mxu0 0
  %199 = vmatmul.mubr.bf16.gmra.mrb[0].mxu0 %v88
  %v200 = vpop.f32.mrb[0].mxu0
  %v201 = vadd.f32 %v52, %v200
  %v202 = vpop.f32.mrb[0].mxu0
  %v203 = vpop.f32.mrb[0].mxu0
  %v204 = vadd.f32 %v52, %v203
  %v205 = vpop.f32.mrb[0].mxu0
  %206 = vmatprep.mubr.bf16.mxu0 0
  %207 = vmatmul.mubr.bf16.gmra.mrb[0].mxu0 %v89
  %v208 = vpop.f32.mrb[0].mxu0
  %v209 = vadd.f32 %v52, %v208
  %v210 = vpop.f32.mrb[0].mxu0
  %v211 = vpop.f32.mrb[0].mxu0
  %v212 = vadd.f32 %v52, %v211
  %v213 = vpop.f32.mrb[0].mxu0
  %214 = vmatprep.mubr.bf16.mxu0 0
  %215 = vmatmul.mubr.bf16.gmra.mrb[0].mxu0 %v90
  %v216 = vpop.f32.mrb[0].mxu0
  %v217 = vadd.f32 %v52, %v216
  %v218 = vpop.f32.mrb[0].mxu0
  %v219 = vpop.f32.mrb[0].mxu0
  %v220 = vadd.f32 %v52, %v219
  %v221 = vpop.f32.mrb[0].mxu0
  %222 = vmatprep.mubr.bf16.mxu0 0
  %223 = vmatmul.mubr.bf16.gmra.mrb[0].mxu0 %v91
  %v224 = vpop.f32.mrb[0].mxu0
  %v225 = vadd.f32 %v52, %v224
  %v226 = vpop.f32.mrb[0].mxu0
  %v227 = vpop.f32.mrb[0].mxu0
  %v228 = vadd.f32 %v52, %v227
  %v229 = vpop.f32.mrb[0].mxu0
  %230 = vmatprep.mubr.bf16.mxu0 0
  %231 = vmatmul.mubr.bf16.gmra.mrb[0].mxu0 %v92
  %v232 = vpop.f32.mrb[0].mxu0
  %v233 = vadd.f32 %v52, %v232
  %v234 = vpop.f32.mrb[0].mxu0
  %v235 = vpop.f32.mrb[0].mxu0
  %v236 = vadd.f32 %v52, %v235
  %v237 = vpop.f32.mrb[0].mxu0
  %238 = vmatprep.mubr.bf16.mxu0 0
  %239 = vmatmul.mubr.bf16.gmra.mrb[0].mxu0 %v93
  %v240 = vpop.f32.mrb[0].mxu0
  %v241 = vadd.f32 %v52, %v240
  %v242 = vpop.f32.mrb[0].mxu0
  %v243 = vpop.f32.mrb[0].mxu0
  %v244 = vadd.f32 %v52, %v243
  %v245 = vpop.f32.mrb[0].mxu0
  %246 = vdwg.mxu0
  %v247 = vmax.f32 %v185, 0.0
  %v248 = vmax.f32 %v188, 0.0
  %v249 = vmax.f32 %v193, 0.0
  %v250 = vmax.f32 %v196, 0.0
  %v251 = vmax.f32 %v201, 0.0
  %v252 = vmax.f32 %v204, 0.0
  %v253 = vmax.f32 %v209, 0.0
  %v254 = vmax.f32 %v212, 0.0
  %v255 = vmax.f32 %v217, 0.0
  %v256 = vmax.f32 %v220, 0.0
  %v257 = vmax.f32 %v225, 0.0
  %v258 = vmax.f32 %v228, 0.0
  %v259 = vmax.f32 %v233, 0.0
  %v260 = vmax.f32 %v236, 0.0
  %v261 = vmax.f32 %v241, 0.0
  %v262 = vmax.f32 %v244, 0.0
  %263 = vst [vmem:[%s3] sm:$0xff] %v247
  %264 = vst [vmem:[%s3 + $0x8] sm:$0xff] %v248
  %265 = vst [vmem:[%s3 + $0x10] sm:$0xff] %v249
  %266 = vst [vmem:[%s3 + $0x18] sm:$0xff] %v250
  %267 = vst [vmem:[%s3 + $0x20] sm:$0xff] %v251
  %268 = vst [vmem:[%s3 + $0x28] sm:$0xff] %v252
  %269 = vst [vmem:[%s3 + $0x30] sm:$0xff] %v253
  %270 = vst [vmem:[%s3 + $0x38] sm:$0xff] %v254
  %271 = vst [vmem:[%s3 + $0x40] sm:$0xff] %v255
  %272 = vst [vmem:[%s3 + $0x48] sm:$0xff] %v256
  %273 = vst [vmem:[%s3 + $0x50] sm:$0xff] %v257
  %274 = vst [vmem:[%s3 + $0x58] sm:$0xff] %v258
  %275 = vst [vmem:[%s3 + $0x60] sm:$0xff] %v259
  %276 = vst [vmem:[%s3 + $0x68] sm:$0xff] %v260
  %277 = vst [vmem:[%s3 + $0x70] sm:$0xff] %v261
  %278 = vst [vmem:[%s3 + $0x78] sm:$0xff] %v262
  // Predicated region
  $region14: #{_forward_front.5} parent=0 // pred_check
    _
  $region15: #{_forward_front.5} parent=0 // pred_check_branch
    %280 = sbr.rel (0) target = $region17
  $region16: #{_forward_front.5} parent=0 // pred_region
    _
  $region17: #{_forward_front.5} parent=0 // pred_fallthru
    _
  // Predicated region
  $region18: #{_forward_front.5} parent=0 // pred_check
    _
  $region19: #{_forward_front.5} parent=0 // pred_check_branch
    %282 = sbr.rel (0) target = $region21
  $region20: #{_forward_front.5} parent=0 // pred_region
    _
  $region21: #{_forward_front.5} parent=0 // pred_fallthru
    _

// kernel: _forward_front.7
$region0: #{_forward_front.7}
  #allocation0 [shape = 'u32[]', space=smem, size = 0x4, offset = 0x4, fixed_abs, tag = 'smem constant byte address 0x4 - core index']
  #allocation1 [shape = 'u32[144,128]{1,0:T(1,128)}', space=vmem, size = 0x12000, scoped, tag = 'internal scratch']
  %s0 = inlined_call_operand.vmem [shape: bf16[128,1152], index: 0, kind: input, shape index: {}]
  %s1 = inlined_call_operand.vmem [shape: bf16[1152,128], index: 1, kind: input, shape index: {}]
  %s2 = inlined_call_operand.vmem [shape: f32[1,128], index: 2, kind: input, shape index: {}]
  %s3 = inlined_call_operand.vmem [shape: bf16[128,128], index: 3, kind: input, shape index: {}]
  %s4 = inlined_call_operand.vmem [shape: f32[1,128], index: 4, kind: input, shape index: {}]
  %s5 = inlined_call_operand.vmem [shape: bf16[128,128], index: 5, kind: output, shape index: {0}]
  %s6 = inlined_call_operand.vmem [shape: f32[128,128], index: 6, kind: output, shape index: {1}]
  %7 = xla_tuple %s5, %s6
  %s8 = sld [smem:[#allocation0]]
  $region38: #{_forward_front.7} parent=0
    _
  %s10 = ssub.s32 1, %s8
  %s11 = scalar_select 0, %s10, %s8
  // Predicated region
  $region2: #{_forward_front.7} parent=0 // pred_check
    _
  $region3: #{_forward_front.7} parent=0 // pred_check_branch
    %13 = sbr.rel (0) target = $region5
  $region4: #{_forward_front.7} parent=0 // pred_region
    _
  $region5: #{_forward_front.7} parent=0 // pred_fallthru
    _
  // Predicated region
  $region6: #{_forward_front.7} parent=0 // pred_check
    _
  $region7: #{_forward_front.7} parent=0 // pred_check_branch
    %15 = sbr.rel (0) target = $region9
  $region8: #{_forward_front.7} parent=0 // pred_region
    _
  $region9: #{_forward_front.7} parent=0 // pred_fallthru
    _
  // Predicated region
  $region10: #{_forward_front.7} parent=0 // pred_check
    _
  $region11: #{_forward_front.7} parent=0 // pred_check_branch
    %17 = sbr.rel (0) target = $region13
  $region12: #{_forward_front.7} parent=0 // pred_region
    _
  $region13: #{_forward_front.7} parent=0 // pred_fallthru
    _
  // Predicated region
  $region14: #{_forward_front.7} parent=0 // pred_check
    _
  $region15: #{_forward_front.7} parent=0 // pred_check_branch
    %19 = sbr.rel (0) target = $region17
  $region16: #{_forward_front.7} parent=0 // pred_region
    _
  $region17: #{_forward_front.7} parent=0 // pred_fallthru
    _
  // Predicated region
  $region18: #{_forward_front.7} parent=0 // pred_check
    _
  $region19: #{_forward_front.7} parent=0 // pred_check_branch
    %21 = sbr.rel (0) target = $region21
  $region20: #{_forward_front.7} parent=0 // pred_region
    _
  $region21: #{_forward_front.7} parent=0 // pred_fallthru
    _
  %v23 = vld [vmem:[%s0] sm:$0xff]
  %v24 = vld [vmem:[%s0 + $0x8] sm:$0xff]
  %v25 = vld [vmem:[%s0 + $0x10] sm:$0xff]
  %v26 = vld [vmem:[%s0 + $0x18] sm:$0xff]
  %v27 = vld [vmem:[%s0 + $0x20] sm:$0xf]
  %v28 = vld [vmem:[%s0 + $0x24] sm:$0xff]
  %v29 = vld [vmem:[%s0 + $0x2c] sm:$0xff]
  %v30 = vld [vmem:[%s0 + $0x34] sm:$0xff]
  %v31 = vld [vmem:[%s0 + $0x3c] sm:$0xff]
  %v32 = vld [vmem:[%s0 + $0x44] sm:$0xf]
  %v33 = vld [vmem:[%s0 + $0x48] sm:$0xff]
  %v34 = vld [vmem:[%s0 + $0x50] sm:$0xff]
  %v35 = vld [vmem:[%s0 + $0x58] sm:$0xff]
  %v36 = vld [vmem:[%s0 + $0x60] sm:$0xff]
  %v37 = vld [vmem:[%s0 + $0x68] sm:$0xf]
  %v38 = vld [vmem:[%s0 + $0x6c] sm:$0xff]
  %v39 = vld [vmem:[%s0 + $0x74] sm:$0xff]
  %v40 = vld [vmem:[%s0 + $0x7c] sm:$0xff]
  %v41 = vld [vmem:[%s0 + $0x84] sm:$0xff]
  %v42 = vld [vmem:[%s0 + $0x8c] sm:$0xf]
  %v43 = vld [vmem:[%s0 + $0x90] sm:$0xff]
  %v44 = vld [vmem:[%s0 + $0x98] sm:$0xff]
  %v45 = vld [vmem:[%s0 + $0xa0] sm:$0xff]
  %v46 = vld [vmem:[%s0 + $0xa8] sm:$0xff]
  %v47 = vld [vmem:[%s0 + $0xb0] sm:$0xf]
  %v48 = vld [vmem:[%s0 + $0xb4] sm:$0xff]
  %v49 = vld [vmem:[%s0 + $0xbc] sm:$0xff]
  %v50 = vld [vmem:[%s0 + $0xc4] sm:$0xff]
  %v51 = vld [vmem:[%s0 + $0xcc] sm:$0xff]
  %v52 = vld [vmem:[%s0 + $0xd4] sm:$0xf]
  %v53 = vld [vmem:[%s0 + $0xd8] sm:$0xff]
  %v54 = vld [vmem:[%s0 + $0xe0] sm:$0xff]
  %v55 = vld [vmem:[%s0 + $0xe8] sm:$0xff]
  %v56 = vld [vmem:[%s0 + $0xf0] sm:$0xff]
  %v57 = vld [vmem:[%s0 + $0xf8] sm:$0xf]
  %v58 = vld [vmem:[%s0 + $0xfc] sm:$0xff]
  %v59 = vld [vmem:[%s0 + $0x104] sm:$0xff]
  %v60 = vld [vmem:[%s0 + $0x10c] sm:$0xff]
  %v61 = vld [vmem:[%s0 + $0x114] sm:$0xff]
  %v62 = vld [vmem:[%s0 + $0x11c] sm:$0xf]
  %v63 = vld [vmem:[%s0 + $0x120] sm:$0xff]
  %v64 = vld [vmem:[%s0 + $0x128] sm:$0xff]
  %v65 = vld [vmem:[%s0 + $0x130] sm:$0xff]
  %v66 = vld [vmem:[%s0 + $0x138] sm:$0xff]
  %v67 = vld [vmem:[%s0 + $0x140] sm:$0xf]
  %v68 = vld [vmem:[%s0 + $0x144] sm:$0xff]
  %v69 = vld [vmem:[%s0 + $0x14c] sm:$0xff]
  %v70 = vld [vmem:[%s0 + $0x154] sm:$0xff]
  %v71 = vld [vmem:[%s0 + $0x15c] sm:$0xff]
  %v72 = vld [vmem:[%s0 + $0x164] sm:$0xf]
  %v73 = vld [vmem:[%s0 + $0x168] sm:$0xff]
  %v74 = vld [vmem:[%s0 + $0x170] sm:$0xff]
  %v75 = vld [vmem:[%s0 + $0x178] sm:$0xff]
  %v76 = vld [vmem:[%s0 + $0x180] sm:$0xff]
  %v77 = vld [vmem:[%s0 + $0x188] sm:$0xf]
  %v78 = vld [vmem:[%s0 + $0x18c] sm:$0xff]
  %v79 = vld [vmem:[%s0 + $0x194] sm:$0xff]
  %v80 = vld [vmem:[%s0 + $0x19c] sm:$0xff]
  %v81 = vld [vmem:[%s0 + $0x1a4] sm:$0xff]
  %v82 = vld [vmem:[%s0 + $0x1ac] sm:$0xf]
  %v83 = vld [vmem:[%s0 + $0x1b0] sm:$0xff]
  %v84 = vld [vmem:[%s0 + $0x1b8] sm:$0xff]
  %v85 = vld [vmem:[%s0 + $0x1c0] sm:$0xff]
  %v86 = vld [vmem:[%s0 + $0x1c8] sm:$0xff]
  %v87 = vld [vmem:[%s0 + $0x1d0] sm:$0xf]
  %v88 = vld [vmem:[%s0 + $0x1d4] sm:$0xff]
  %v89 = vld [vmem:[%s0 + $0x1dc] sm:$0xff]
  %v90 = vld [vmem:[%s0 + $0x1e4] sm:$0xff]
  %v91 = vld [vmem:[%s0 + $0x1ec] sm:$0xff]
  %v92 = vld [vmem:[%s0 + $0x1f4] sm:$0xf]
  %v93 = vld [vmem:[%s0 + $0x1f8] sm:$0xff]
  %v94 = vld [vmem:[%s0 + $0x200] sm:$0xff]
  %v95 = vld [vmem:[%s0 + $0x208] sm:$0xff]
  %v96 = vld [vmem:[%s0 + $0x210] sm:$0xff]
  %v97 = vld [vmem:[%s0 + $0x218] sm:$0xf]
  %v98 = vld [vmem:[%s0 + $0x21c] sm:$0xff]
  %v99 = vld [vmem:[%s0 + $0x224] sm:$0xff]
  %v100 = vld [vmem:[%s0 + $0x22c] sm:$0xff]
  %v101 = vld [vmem:[%s0 + $0x234] sm:$0xff]
  %v102 = vld [vmem:[%s0 + $0x23c] sm:$0xf]
  %v103 = vld [vmem:[%s1] sm:$0xf]
  %v104 = vld [vmem:[%s1 + $0x4] sm:$0xf]
  %v105 = vld [vmem:[%s1 + $0x8] sm:$0xf]
  %v106 = vld [vmem:[%s1 + $0xc] sm:$0xf]
  %v107 = vld [vmem:[%s1 + $0x10] sm:$0xf]
  %v108 = vld [vmem:[%s1 + $0x14] sm:$0xf]
  %v109 = vld [vmem:[%s1 + $0x18] sm:$0xf]
  %v110 = vld [vmem:[%s1 + $0x1c] sm:$0xf]
  %v111 = vld [vmem:[%s1 + $0x20] sm:$0xf]
  %v112 = vld [vmem:[%s1 + $0x24] sm:$0xf]
  %v113 = vld [vmem:[%s1 + $0x28] sm:$0xf]
  %v114 = vld [vmem:[%s1 + $0x2c] sm:$0xf]
  %v115 = vld [vmem:[%s1 + $0x30] sm:$0xf]
  %v116 = vld [vmem:[%s1 + $0x34] sm:$0xf]
  %v117 = vld [vmem:[%s1 + $0x38] sm:$0xf]
  %v118 = vld [vmem:[%s1 + $0x3c] sm:$0xf]
  %v119 = vld [vmem:[%s1 + $0x40] sm:$0xf]
  %v120 = vld [vmem:[%s1 + $0x44] sm:$0xf]
  %v121 = vld [vmem:[%s1 + $0x48] sm:$0xf]
  %v122 = vld [vmem:[%s1 + $0x4c] sm:$0xf]
  %v123 = vld [vmem:[%s1 + $0x50] sm:$0xf]
  %v124 = vld [vmem:[%s1 + $0x54] sm:$0xf]
  %v125 = vld [vmem:[%s1 + $0x58] sm:$0xf]
  %v126 = vld [vmem:[%s1 + $0x5c] sm:$0xf]
  %v127 = vld [vmem:[%s1 + $0x60] sm:$0xf]
  %v128 = vld [vmem:[%s1 + $0x64] sm:$0xf]
  %v129 = vld [vmem:[%s1 + $0x68] sm:$0xf]
  %v130 = vld [vmem:[%s1 + $0x6c] sm:$0xf]
  %v131 = vld [vmem:[%s1 + $0x70] sm:$0xf]
  %v132 = vld [vmem:[%s1 + $0x74] sm:$0xf]
  %v133 = vld [vmem:[%s1 + $0x78] sm:$0xf]
  %v134 = vld [vmem:[%s1 + $0x7c] sm:$0xf]
  %v135 = vld [vmem:[%s1 + $0x80] sm:$0xf]
  %v136 = vld [vmem:[%s1 + $0x84] sm:$0xf]
  %v137 = vld [vmem:[%s1 + $0x88] sm:$0xf]
  %v138 = vld [vmem:[%s1 + $0x8c] sm:$0xf]
  %v139 = vld [vmem:[%s1 + $0x90] sm:$0xf]
  %v140 = vld [vmem:[%s1 + $0x94] sm:$0xf]
  %v141 = vld [vmem:[%s1 + $0x98] sm:$0xf]
  %v142 = vld [vmem:[%s1 + $0x9c] sm:$0xf]
  %v143 = vld [vmem:[%s1 + $0xa0] sm:$0xf]
  %v144 = vld [vmem:[%s1 + $0xa4] sm:$0xf]
  %v145 = vld [vmem:[%s1 + $0xa8] sm:$0xf]
  %v146 = vld [vmem:[%s1 + $0xac] sm:$0xf]
  %v147 = vld [vmem:[%s1 + $0xb0] sm:$0xf]
  %v148 = vld [vmem:[%s1 + $0xb4] sm:$0xf]
  %v149 = vld [vmem:[%s1 + $0xb8] sm:$0xf]
  %v150 = vld [vmem:[%s1 + $0xbc] sm:$0xf]
  %v151 = vld [vmem:[%s1 + $0xc0] sm:$0xf]
  %v152 = vld [vmem:[%s1 + $0xc4] sm:$0xf]
  %v153 = vld [vmem:[%s1 + $0xc8] sm:$0xf]
  %v154 = vld [vmem:[%s1 + $0xcc] sm:$0xf]
  %v155 = vld [vmem:[%s1 + $0xd0] sm:$0xf]
  %v156 = vld [vmem:[%s1 + $0xd4] sm:$0xf]
  %v157 = vld [vmem:[%s1 + $0xd8] sm:$0xf]
  %v158 = vld [vmem:[%s1 + $0xdc] sm:$0xf]
  %v159 = vld [vmem:[%s1 + $0xe0] sm:$0xf]
  %v160 = vld [vmem:[%s1 + $0xe4] sm:$0xf]
  %v161 = vld [vmem:[%s1 + $0xe8] sm:$0xf]
  %v162 = vld [vmem:[%s1 + $0xec] sm:$0xf]
  %v163 = vld [vmem:[%s1 + $0xf0] sm:$0xf]
  %v164 = vld [vmem:[%s1 + $0xf4] sm:$0xf]
  %v165 = vld [vmem:[%s1 + $0xf8] sm:$0xf]
  %v166 = vld [vmem:[%s1 + $0xfc] sm:$0xf]
  %v167 = vld [vmem:[%s1 + $0x100] sm:$0xf]
  %v168 = vld [vmem:[%s1 + $0x104] sm:$0xf]
  %v169 = vld [vmem:[%s1 + $0x108] sm:$0xf]
  %v170 = vld [vmem:[%s1 + $0x10c] sm:$0xf]
  %v171 = vld [vmem:[%s1 + $0x110] sm:$0xf]
  %v172 = vld [vmem:[%s1 + $0x114] sm:$0xf]
  %v173 = vld [vmem:[%s1 + $0x118] sm:$0xf]
  %v174 = vld [vmem:[%s1 + $0x11c] sm:$0xf]
  %v175 = vld [vmem:[%s1 + $0x120] sm:$0xf]
  %v176 = vld [vmem:[%s1 + $0x124] sm:$0xf]
  %v177 = vld [vmem:[%s1 + $0x128] sm:$0xf]
  %v178 = vld [vmem:[%s1 + $0x12c] sm:$0xf]
  %v179 = vld [vmem:[%s1 + $0x130] sm:$0xf]
  %v180 = vld [vmem:[%s1 + $0x134] sm:$0xf]
  %v181 = vld [vmem:[%s1 + $0x138] sm:$0xf]
  %v182 = vld [vmem:[%s1 + $0x13c] sm:$0xf]
  %v183 = vld [vmem:[%s1 + $0x140] sm:$0xf]
  %v184 = vld [vmem:[%s1 + $0x144] sm:$0xf]
  %v185 = vld [vmem:[%s1 + $0x148] sm:$0xf]
  %v186 = vld [vmem:[%s1 + $0x14c] sm:$0xf]
  %v187 = vld [vmem:[%s1 + $0x150] sm:$0xf]
  %v188 = vld [vmem:[%s1 + $0x154] sm:$0xf]
  %v189 = vld [vmem:[%s1 + $0x158] sm:$0xf]
  %v190 = vld [vmem:[%s1 + $0x15c] sm:$0xf]
  %v191 = vld [vmem:[%s1 + $0x160] sm:$0xf]
  %v192 = vld [vmem:[%s1 + $0x164] sm:$0xf]
  %v193 = vld [vmem:[%s1 + $0x168] sm:$0xf]
  %v194 = vld [vmem:[%s1 + $0x16c] sm:$0xf]
  %v195 = vld [vmem:[%s1 + $0x170] sm:$0xf]
  %v196 = vld [vmem:[%s1 + $0x174] sm:$0xf]
  %v197 = vld [vmem:[%s1 + $0x178] sm:$0xf]
  %v198 = vld [vmem:[%s1 + $0x17c] sm:$0xf]
  %v199 = vld [vmem:[%s1 + $0x180] sm:$0xf]
  %v200 = vld [vmem:[%s1 + $0x184] sm:$0xf]
  %v201 = vld [vmem:[%s1 + $0x188] sm:$0xf]
  %v202 = vld [vmem:[%s1 + $0x18c] sm:$0xf]
  %v203 = vld [vmem:[%s1 + $0x190] sm:$0xf]
  %v204 = vld [vmem:[%s1 + $0x194] sm:$0xf]
  %v205 = vld [vmem:[%s1 + $0x198] sm:$0xf]
  %v206 = vld [vmem:[%s1 + $0x19c] sm:$0xf]
  %v207 = vld [vmem:[%s1 + $0x1a0] sm:$0xf]
  %v208 = vld [vmem:[%s1 + $0x1a4] sm:$0xf]
  %v209 = vld [vmem:[%s1 + $0x1a8] sm:$0xf]
  %v210 = vld [vmem:[%s1 + $0x1ac] sm:$0xf]
  %v211 = vld [vmem:[%s1 + $0x1b0] sm:$0xf]
  %v212 = vld [vmem:[%s1 + $0x1b4] sm:$0xf]
  %v213 = vld [vmem:[%s1 + $0x1b8] sm:$0xf]
  %v214 = vld [vmem:[%s1 + $0x1bc] sm:$0xf]
  %v215 = vld [vmem:[%s1 + $0x1c0] sm:$0xf]
  %v216 = vld [vmem:[%s1 + $0x1c4] sm:$0xf]
  %v217 = vld [vmem:[%s1 + $0x1c8] sm:$0xf]
  %v218 = vld [vmem:[%s1 + $0x1cc] sm:$0xf]
  %v219 = vld [vmem:[%s1 + $0x1d0] sm:$0xf]
  %v220 = vld [vmem:[%s1 + $0x1d4] sm:$0xf]
  %v221 = vld [vmem:[%s1 + $0x1d8] sm:$0xf]
  %v222 = vld [vmem:[%s1 + $0x1dc] sm:$0xf]
  %v223 = vld [vmem:[%s1 + $0x1e0] sm:$0xf]
  %v224 = vld [vmem:[%s1 + $0x1e4] sm:$0xf]
  %v225 = vld [vmem:[%s1 + $0x1e8] sm:$0xf]
  %v226 = vld [vmem:[%s1 + $0x1ec] sm:$0xf]
  %v227 = vld [vmem:[%s1 + $0x1f0] sm:$0xf]
  %v228 = vld [vmem:[%s1 + $0x1f4] sm:$0xf]
  %v229 = vld [vmem:[%s1 + $0x1f8] sm:$0xf]
  %v230 = vld [vmem:[%s1 + $0x1fc] sm:$0xf]
  %v231 = vld [vmem:[%s1 + $0x200] sm:$0xf]
  %v232 = vld [vmem:[%s1 + $0x204] sm:$0xf]
  %v233 = vld [vmem:[%s1 + $0x208] sm:$0xf]
  %v234 = vld [vmem:[%s1 + $0x20c] sm:$0xf]
  %v235 = vld [vmem:[%s1 + $0x210] sm:$0xf]
  %v236 = vld [vmem:[%s1 + $0x214] sm:$0xf]
  %v237 = vld [vmem:[%s1 + $0x218] sm:$0xf]
  %v238 = vld [vmem:[%s1 + $0x21c] sm:$0xf]
  %v239 = vld [vmem:[%s1 + $0x220] sm:$0xf]
  %v240 = vld [vmem:[%s1 + $0x224] sm:$0xf]
  %v241 = vld [vmem:[%s1 + $0x228] sm:$0xf]
  %v242 = vld [vmem:[%s1 + $0x22c] sm:$0xf]
  %v243 = vld [vmem:[%s1 + $0x230] sm:$0xf]
  %v244 = vld [vmem:[%s1 + $0x234] sm:$0xf]
  %v245 = vld [vmem:[%s1 + $0x238] sm:$0xf]
  %v246 = vld [vmem:[%s1 + $0x23c] sm:$0xf]
  %v247 = vld [vmem:[%s2] sm:$0x1]
  %v249 = vlaneseq
  %v250 = vshrl.u32 %v249, 7
  %v251 = vsub.s32 0, %v250
  %v252 = vrot.slane %v247, %v251
  %v334 = vunpack.c.l.b16 %v23
  %v335 = vunpack.c.h.b16 %v23
  %v336 = vunpack.c.l.b16 %v24
  %v337 = vunpack.c.h.b16 %v24
  %v338 = vunpack.c.l.b16 %v25
  %v339 = vunpack.c.h.b16 %v25
  %v340 = vunpack.c.l.b16 %v26
  %v341 = vunpack.c.h.b16 %v26
  %v342 = vunpack.c.l.b16 %v27
  %v343 = vunpack.c.l.b16 %v28
  %v344 = vunpack.c.h.b16 %v28
  %v345 = vunpack.c.l.b16 %v29
  %v346 = vunpack.c.h.b16 %v29
  %v347 = vunpack.c.l.b16 %v30
  %v348 = vunpack.c.h.b16 %v30
  %v349 = vunpack.c.l.b16 %v31
  %v350 = vunpack.c.h.b16 %v31
  %v351 = vunpack.c.l.b16 %v32
  %v352 = vunpack.c.l.b16 %v33
  %v353 = vunpack.c.h.b16 %v33
  %v354 = vunpack.c.l.b16 %v34
  %v355 = vunpack.c.h.b16 %v34
  %v356 = vunpack.c.l.b16 %v35
  %v357 = vunpack.c.h.b16 %v35
  %v358 = vunpack.c.l.b16 %v36
  %v359 = vunpack.c.h.b16 %v36
  %v360 = vunpack.c.l.b16 %v37
  %v361 = vunpack.c.l.b16 %v38
  %v362 = vunpack.c.h.b16 %v38
  %v363 = vunpack.c.l.b16 %v39
  %v364 = vunpack.c.h.b16 %v39
  %v365 = vunpack.c.l.b16 %v40
  %v366 = vunpack.c.h.b16 %v40
  %v367 = vunpack.c.l.b16 %v41
  %v368 = vunpack.c.h.b16 %v41
  %v369 = vunpack.c.l.b16 %v42
  %v370 = vunpack.c.l.b16 %v43
  %v371 = vunpack.c.h.b16 %v43
  %v372 = vunpack.c.l.b16 %v44
  %v373 = vunpack.c.h.b16 %v44
  %v374 = vunpack.c.l.b16 %v45
  %v375 = vunpack.c.h.b16 %v45
  %v376 = vunpack.c.l.b16 %v46
  %v377 = vunpack.c.h.b16 %v46
  %v378 = vunpack.c.l.b16 %v47
  %v379 = vunpack.c.l.b16 %v48
  %v380 = vunpack.c.h.b16 %v48
  %v381 = vunpack.c.l.b16 %v49
  %v382 = vunpack.c.h.b16 %v49
  %v383 = vunpack.c.l.b16 %v50
  %v384 = vunpack.c.h.b16 %v50
  %v385 = vunpack.c.l.b16 %v51
  %v386 = vunpack.c.h.b16 %v51
  %v387 = vunpack.c.l.b16 %v52
  %v388 = vunpack.c.l.b16 %v53
  %v389 = vunpack.c.h.b16 %v53
  %v390 = vunpack.c.l.b16 %v54
  %v391 = vunpack.c.h.b16 %v54
  %v392 = vunpack.c.l.b16 %v55
  %v393 = vunpack.c.h.b16 %v55
  %v394 = vunpack.c.l.b16 %v56
  %v395 = vunpack.c.h.b16 %v56
  %v396 = vunpack.c.l.b16 %v57
  %v397 = vunpack.c.l.b16 %v58
  %v398 = vunpack.c.h.b16 %v58
  %v399 = vunpack.c.l.b16 %v59
  %v400 = vunpack.c.h.b16 %v59
  %v401 = vunpack.c.l.b16 %v60
  %v402 = vunpack.c.h.b16 %v60
  %v403 = vunpack.c.l.b16 %v61
  %v404 = vunpack.c.h.b16 %v61
  %v405 = vunpack.c.l.b16 %v62
  %v406 = vunpack.c.l.b16 %v63
  %v407 = vunpack.c.h.b16 %v63
  %v408 = vunpack.c.l.b16 %v64
  %v409 = vunpack.c.h.b16 %v64
  %v410 = vunpack.c.l.b16 %v65
  %v411 = vunpack.c.h.b16 %v65
  %v412 = vunpack.c.l.b16 %v66
  %v413 = vunpack.c.h.b16 %v66
  %v414 = vunpack.c.l.b16 %v67
  %v415 = vunpack.c.l.b16 %v68
  %v416 = vunpack.c.h.b16 %v68
  %v417 = vunpack.c.l.b16 %v69
  %v418 = vunpack.c.h.b16 %v69
  %v419 = vunpack.c.l.b16 %v70
  %v420 = vunpack.c.h.b16 %v70
  %v421 = vunpack.c.l.b16 %v71
  %v422 = vunpack.c.h.b16 %v71
  %v423 = vunpack.c.l.b16 %v72
  %v424 = vunpack.c.l.b16 %v73
  %v425 = vunpack.c.h.b16 %v73
  %v426 = vunpack.c.l.b16 %v74
  %v427 = vunpack.c.h.b16 %v74
  %v428 = vunpack.c.l.b16 %v75
  %v429 = vunpack.c.h.b16 %v75
  %v430 = vunpack.c.l.b16 %v76
  %v431 = vunpack.c.h.b16 %v76
  %v432 = vunpack.c.l.b16 %v77
  %v433 = vunpack.c.l.b16 %v78
  %v434 = vunpack.c.h.b16 %v78
  %v435 = vunpack.c.l.b16 %v79
  %v436 = vunpack.c.h.b16 %v79
  %v437 = vunpack.c.l.b16 %v80
  %v438 = vunpack.c.h.b16 %v80
  %v439 = vunpack.c.l.b16 %v81
  %v440 = vunpack.c.h.b16 %v81
  %v441 = vunpack.c.l.b16 %v82
  %v442 = vunpack.c.l.b16 %v83
  %v443 = vunpack.c.h.b16 %v83
  %v444 = vunpack.c.l.b16 %v84
  %v445 = vunpack.c.h.b16 %v84
  %v446 = vunpack.c.l.b16 %v85
  %v447 = vunpack.c.h.b16 %v85
  %v448 = vunpack.c.l.b16 %v86
  %v449 = vunpack.c.h.b16 %v86
  %v450 = vunpack.c.l.b16 %v87
  %v451 = vunpack.c.l.b16 %v88
  %v452 = vunpack.c.h.b16 %v88
  %v453 = vunpack.c.l.b16 %v89
  %v454 = vunpack.c.h.b16 %v89
  %v455 = vunpack.c.l.b16 %v90
  %v456 = vunpack.c.h.b16 %v90
  %v457 = vunpack.c.l.b16 %v91
  %v458 = vunpack.c.h.b16 %v91
  %v459 = vunpack.c.l.b16 %v92
  %v460 = vunpack.c.l.b16 %v93
  %v461 = vunpack.c.h.b16 %v93
  %v462 = vunpack.c.l.b16 %v94
  %v463 = vunpack.c.h.b16 %v94
  %v464 = vunpack.c.l.b16 %v95
  %v465 = vunpack.c.h.b16 %v95
  %v466 = vunpack.c.l.b16 %v96
  %v467 = vunpack.c.h.b16 %v96
  %v468 = vunpack.c.l.b16 %v97
  %v469 = vunpack.c.l.b16 %v98
  %v470 = vunpack.c.h.b16 %v98
  %v471 = vunpack.c.l.b16 %v99
  %v472 = vunpack.c.h.b16 %v99
  %v473 = vunpack.c.l.b16 %v100
  %v474 = vunpack.c.h.b16 %v100
  %v475 = vunpack.c.l.b16 %v101
  %v476 = vunpack.c.h.b16 %v101
  %v477 = vunpack.c.l.b16 %v102
  %v478 = vpack.c.b16 %v343, %v334
  %v479 = vpack.c.b16 %v344, %v335
  %v480 = vpack.c.b16 %v345, %v336
  %v481 = vpack.c.b16 %v346, %v337
  %v482 = vpack.c.b16 %v347, %v338
  %v483 = vpack.c.b16 %v348, %v339
  %v484 = vpack.c.b16 %v349, %v340
  %v485 = vpack.c.b16 %v350, %v341
  %v486 = vpack.c.b16 %v351, %v342
  %v487 = vpack.c.b16 %v361, %v352
  %v488 = vpack.c.b16 %v362, %v353
  %v489 = vpack.c.b16 %v363, %v354
  %v490 = vpack.c.b16 %v364, %v355
  %v491 = vpack.c.b16 %v365, %v356
  %v492 = vpack.c.b16 %v366, %v357
  %v493 = vpack.c.b16 %v367, %v358
  %v494 = vpack.c.b16 %v368, %v359
  %v495 = vpack.c.b16 %v369, %v360
  %v496 = vpack.c.b16 %v379, %v370
  %v497 = vpack.c.b16 %v380, %v371
  %v498 = vpack.c.b16 %v381, %v372
  %v499 = vpack.c.b16 %v382, %v373
  %v500 = vpack.c.b16 %v383, %v374
  %v501 = vpack.c.b16 %v384, %v375
  %v502 = vpack.c.b16 %v385, %v376
  %v503 = vpack.c.b16 %v386, %v377
  %v504 = vpack.c.b16 %v387, %v378
  %v505 = vpack.c.b16 %v397, %v388
  %v506 = vpack.c.b16 %v398, %v389
  %v507 = vpack.c.b16 %v399, %v390
  %v508 = vpack.c.b16 %v400, %v391
  %v509 = vpack.c.b16 %v401, %v392
  %v510 = vpack.c.b16 %v402, %v393
  %v511 = vpack.c.b16 %v403, %v394
  %v512 = vpack.c.b16 %v404, %v395
  %v513 = vpack.c.b16 %v405, %v396
  %v514 = vpack.c.b16 %v415, %v406
  %v515 = vpack.c.b16 %v416, %v407
  %v516 = vpack.c.b16 %v417, %v408
  %v517 = vpack.c.b16 %v418, %v409
  %v518 = vpack.c.b16 %v419, %v410
  %v519 = vpack.c.b16 %v420, %v411
  %v520 = vpack.c.b16 %v421, %v412
  %v521 = vpack.c.b16 %v422, %v413
  %v522 = vpack.c.b16 %v423, %v414
  %v523 = vpack.c.b16 %v433, %v424
  %v524 = vpack.c.b16 %v434, %v425
  %v525 = vpack.c.b16 %v435, %v426
  %v526 = vpack.c.b16 %v436, %v427
  %v527 = vpack.c.b16 %v437, %v428
  %v528 = vpack.c.b16 %v438, %v429
  %v529 = vpack.c.b16 %v439, %v430
  %v530 = vpack.c.b16 %v440, %v431
  %v531 = vpack.c.b16 %v441, %v432
  %v532 = vpack.c.b16 %v451, %v442
  %v533 = vpack.c.b16 %v452, %v443
  %v534 = vpack.c.b16 %v453, %v444
  %v535 = vpack.c.b16 %v454, %v445
  %v536 = vpack.c.b16 %v455, %v446
  %v537 = vpack.c.b16 %v456, %v447
  %v538 = vpack.c.b16 %v457, %v448
  %v539 = vpack.c.b16 %v458, %v449
  %v540 = vpack.c.b16 %v459, %v450
  %v541 = vpack.c.b16 %v469, %v460
  %v542 = vpack.c.b16 %v470, %v461
  %v543 = vpack.c.b16 %v471, %v462
  %v544 = vpack.c.b16 %v472, %v463
  %v545 = vpack.c.b16 %v473, %v464
  %v546 = vpack.c.b16 %v474, %v465
  %v547 = vpack.c.b16 %v475, %v466
  %v548 = vpack.c.b16 %v476, %v467
  %v549 = vpack.c.b16 %v477, %v468
  %v766 = vunpack.c.l.b16 %v103
  %v767 = vunpack.c.l.b16 %v104
  %v768 = vunpack.c.l.b16 %v105
  %v769 = vunpack.c.l.b16 %v106
  %v770 = vunpack.c.l.b16 %v107
  %v771 = vunpack.c.l.b16 %v108
  %v772 = vunpack.c.l.b16 %v109
  %v773 = vunpack.c.l.b16 %v110
  %v774 = vunpack.c.l.b16 %v111
  %v775 = vunpack.c.l.b16 %v112
  %v776 = vunpack.c.l.b16 %v113
  %v777 = vunpack.c.l.b16 %v114
  %v778 = vunpack.c.l.b16 %v115
  %v779 = vunpack.c.l.b16 %v116
  %v780 = vunpack.c.l.b16 %v117
  %v781 = vunpack.c.l.b16 %v118
  %v782 = vunpack.c.l.b16 %v119
  %v783 = vunpack.c.l.b16 %v120
  %v784 = vunpack.c.l.b16 %v121
  %v785 = vunpack.c.l.b16 %v122
  %v786 = vunpack.c.l.b16 %v123
  %v787 = vunpack.c.l.b16 %v124
  %v788 = vunpack.c.l.b16 %v125
  %v789 = vunpack.c.l.b16 %v126
  %v790 = vunpack.c.l.b16 %v127
  %v791 = vunpack.c.l.b16 %v128
  %v792 = vunpack.c.l.b16 %v129
  %v793 = vunpack.c.l.b16 %v130
  %v794 = vunpack.c.l.b16 %v131
  %v795 = vunpack.c.l.b16 %v132
  %v796 = vunpack.c.l.b16 %v133
  %v797 = vunpack.c.l.b16 %v134
  %v798 = vunpack.c.l.b16 %v135
  %v799 = vunpack.c.l.b16 %v136
  %v800 = vunpack.c.l.b16 %v137
  %v801 = vunpack.c.l.b16 %v138
  %v802 = vunpack.c.l.b16 %v139
  %v803 = vunpack.c.l.b16 %v140
  %v804 = vunpack.c.l.b16 %v141
  %v805 = vunpack.c.l.b16 %v142
  %v806 = vunpack.c.l.b16 %v143
  %v807 = vunpack.c.l.b16 %v144
  %v808 = vunpack.c.l.b16 %v145
  %v809 = vunpack.c.l.b16 %v146
  %v810 = vunpack.c.l.b16 %v147
  %v811 = vunpack.c.l.b16 %v148
  %v812 = vunpack.c.l.b16 %v149
  %v813 = vunpack.c.l.b16 %v150
  %v814 = vunpack.c.l.b16 %v151
  %v815 = vunpack.c.l.b16 %v152
  %v816 = vunpack.c.l.b16 %v153
  %v817 = vunpack.c.l.b16 %v154
  %v818 = vunpack.c.l.b16 %v155
  %v819 = vunpack.c.l.b16 %v156
  %v820 = vunpack.c.l.b16 %v157
  %v821 = vunpack.c.l.b16 %v158
  %v822 = vunpack.c.l.b16 %v159
  %v823 = vunpack.c.l.b16 %v160
  %v824 = vunpack.c.l.b16 %v161
  %v825 = vunpack.c.l.b16 %v162
  %v826 = vunpack.c.l.b16 %v163
  %v827 = vunpack.c.l.b16 %v164
  %v828 = vunpack.c.l.b16 %v165
  %v829 = vunpack.c.l.b16 %v166
  %v830 = vunpack.c.l.b16 %v167
  %v831 = vunpack.c.l.b16 %v168
  %v832 = vunpack.c.l.b16 %v169
  %v833 = vunpack.c.l.b16 %v170
  %v834 = vunpack.c.l.b16 %v171
  %v835 = vunpack.c.l.b16 %v172
  %v836 = vunpack.c.l.b16 %v173
  %v837 = vunpack.c.l.b16 %v174
  %v838 = vunpack.c.l.b16 %v175
  %v839 = vunpack.c.l.b16 %v176
  %v840 = vunpack.c.l.b16 %v177
  %v841 = vunpack.c.l.b16 %v178
  %v842 = vunpack.c.l.b16 %v179
  %v843 = vunpack.c.l.b16 %v180
  %v844 = vunpack.c.l.b16 %v181
  %v845 = vunpack.c.l.b16 %v182
  %v846 = vunpack.c.l.b16 %v183
  %v847 = vunpack.c.l.b16 %v184
  %v848 = vunpack.c.l.b16 %v185
  %v849 = vunpack.c.l.b16 %v186
  %v850 = vunpack.c.l.b16 %v187
  %v851 = vunpack.c.l.b16 %v188
  %v852 = vunpack.c.l.b16 %v189
  %v853 = vunpack.c.l.b16 %v190
  %v854 = vunpack.c.l.b16 %v191
  %v855 = vunpack.c.l.b16 %v192
  %v856 = vunpack.c.l.b16 %v193
  %v857 = vunpack.c.l.b16 %v194
  %v858 = vunpack.c.l.b16 %v195
  %v859 = vunpack.c.l.b16 %v196
  %v860 = vunpack.c.l.b16 %v197
  %v861 = vunpack.c.l.b16 %v198
  %v862 = vunpack.c.l.b16 %v199
  %v863 = vunpack.c.l.b16 %v200
  %v864 = vunpack.c.l.b16 %v201
  %v865 = vunpack.c.l.b16 %v202
  %v866 = vunpack.c.l.b16 %v203
  %v867 = vunpack.c.l.b16 %v204
  %v868 = vunpack.c.l.b16 %v205
  %v869 = vunpack.c.l.b16 %v206
  %v870 = vunpack.c.l.b16 %v207
  %v871 = vunpack.c.l.b16 %v208
  %v872 = vunpack.c.l.b16 %v209
  %v873 = vunpack.c.l.b16 %v210
  %v874 = vunpack.c.l.b16 %v211
  %v875 = vunpack.c.l.b16 %v212
  %v876 = vunpack.c.l.b16 %v213
  %v877 = vunpack.c.l.b16 %v214
  %v878 = vunpack.c.l.b16 %v215
  %v879 = vunpack.c.l.b16 %v216
  %v880 = vunpack.c.l.b16 %v217
  %v881 = vunpack.c.l.b16 %v218
  %v882 = vunpack.c.l.b16 %v219
  %v883 = vunpack.c.l.b16 %v220
  %v884 = vunpack.c.l.b16 %v221
  %v885 = vunpack.c.l.b16 %v222
  %v886 = vunpack.c.l.b16 %v223
  %v887 = vunpack.c.l.b16 %v224
  %v888 = vunpack.c.l.b16 %v225
  %v889 = vunpack.c.l.b16 %v226
  %v890 = vunpack.c.l.b16 %v227
  %v891 = vunpack.c.l.b16 %v228
  %v892 = vunpack.c.l.b16 %v229
  %v893 = vunpack.c.l.b16 %v230
  %v894 = vunpack.c.l.b16 %v231
  %v895 = vunpack.c.l.b16 %v232
  %v896 = vunpack.c.l.b16 %v233
  %v897 = vunpack.c.l.b16 %v234
  %v898 = vunpack.c.l.b16 %v235
  %v899 = vunpack.c.l.b16 %v236
  %v900 = vunpack.c.l.b16 %v237
  %v901 = vunpack.c.l.b16 %v238
  %v902 = vunpack.c.l.b16 %v239
  %v903 = vunpack.c.l.b16 %v240
  %v904 = vunpack.c.l.b16 %v241
  %v905 = vunpack.c.l.b16 %v242
  %v906 = vunpack.c.l.b16 %v243
  %v907 = vunpack.c.l.b16 %v244
  %v908 = vunpack.c.l.b16 %v245
  %v909 = vunpack.c.l.b16 %v246
  %v910 = vpack.c.b16 %v767, %v766
  %v911 = vpack.c.b16 %v769, %v768
  %v912 = vpack.c.b16 %v771, %v770
  %v913 = vpack.c.b16 %v773, %v772
  %v914 = vpack.c.b16 %v775, %v774
  %v915 = vpack.c.b16 %v777, %v776
  %v916 = vpack.c.b16 %v779, %v778
  %v917 = vpack.c.b16 %v781, %v780
  %v918 = vpack.c.b16 %v783, %v782
  %v919 = vpack.c.b16 %v785, %v784
  %v920 = vpack.c.b16 %v787, %v786
  %v921 = vpack.c.b16 %v789, %v788
  %v922 = vpack.c.b16 %v791, %v790
  %v923 = vpack.c.b16 %v793, %v792
  %v924 = vpack.c.b16 %v795, %v794
  %v925 = vpack.c.b16 %v797, %v796
  %v926 = vpack.c.b16 %v799, %v798
  %v927 = vpack.c.b16 %v801, %v800
  %v928 = vpack.c.b16 %v803, %v802
  %v929 = vpack.c.b16 %v805, %v804
  %v930 = vpack.c.b16 %v807, %v806
  %v931 = vpack.c.b16 %v809, %v808
  %v932 = vpack.c.b16 %v811, %v810
  %v933 = vpack.c.b16 %v813, %v812
  %v934 = vpack.c.b16 %v815, %v814
  %v935 = vpack.c.b16 %v817, %v816
  %v936 = vpack.c.b16 %v819, %v818
  %v937 = vpack.c.b16 %v821, %v820
  %v938 = vpack.c.b16 %v823, %v822
  %v939 = vpack.c.b16 %v825, %v824
  %v940 = vpack.c.b16 %v827, %v826
  %v941 = vpack.c.b16 %v829, %v828
  %v942 = vpack.c.b16 %v831, %v830
  %v943 = vpack.c.b16 %v833, %v832
  %v944 = vpack.c.b16 %v835, %v834
  %v945 = vpack.c.b16 %v837, %v836
  %v946 = vpack.c.b16 %v839, %v838
  %v947 = vpack.c.b16 %v841, %v840
  %v948 = vpack.c.b16 %v843, %v842
  %v949 = vpack.c.b16 %v845, %v844
  %v950 = vpack.c.b16 %v847, %v846
  %v951 = vpack.c.b16 %v849, %v848
  %v952 = vpack.c.b16 %v851, %v850
  %v953 = vpack.c.b16 %v853, %v852
  %v954 = vpack.c.b16 %v855, %v854
  %v955 = vpack.c.b16 %v857, %v856
  %v956 = vpack.c.b16 %v859, %v858
  %v957 = vpack.c.b16 %v861, %v860
  %v958 = vpack.c.b16 %v863, %v862
  %v959 = vpack.c.b16 %v865, %v864
  %v960 = vpack.c.b16 %v867, %v866
  %v961 = vpack.c.b16 %v869, %v868
  %v962 = vpack.c.b16 %v871, %v870
  %v963 = vpack.c.b16 %v873, %v872
  %v964 = vpack.c.b16 %v875, %v874
  %v965 = vpack.c.b16 %v877, %v876
  %v966 = vpack.c.b16 %v879, %v878
  %v967 = vpack.c.b16 %v881, %v880
  %v968 = vpack.c.b16 %v883, %v882
  %v969 = vpack.c.b16 %v885, %v884
  %v970 = vpack.c.b16 %v887, %v886
  %v971 = vpack.c.b16 %v889, %v888
  %v972 = vpack.c.b16 %v891, %v890
  %v973 = vpack.c.b16 %v893, %v892
  %v974 = vpack.c.b16 %v895, %v894
  %v975 = vpack.c.b16 %v897, %v896
  %v976 = vpack.c.b16 %v899, %v898
  %v977 = vpack.c.b16 %v901, %v900
  %v978 = vpack.c.b16 %v903, %v902
  %v979 = vpack.c.b16 %v905, %v904
  %v980 = vpack.c.b16 %v907, %v906
  %v981 = vpack.c.b16 %v909, %v908
  %1054 = vmatprep.subr.bf16.mxu0 0
  %1055 = vmatpush1.bf16.msra.mxu0 %v910
  %1056 = vmatprep.subr.bf16.mxu0 0
  %1057 = vmatpush1.bf16.msra.mxu0 %v911
  %1058 = vmatprep.subr.bf16.mxu0 0
  %1059 = vmatpush1.bf16.msra.mxu0 %v912
  %1060 = vmatprep.subr.bf16.mxu0 0
  %1061 = vmatpush1.bf16.msra.mxu0 %v913
  %1062 = vmatprep.subr.bf16.mxu0 0
  %1063 = vmatpush1.bf16.msra.mxu0 %v914
  %1064 = vmatprep.subr.bf16.mxu0 0
  %1065 = vmatpush1.bf16.msra.mxu0 %v915
  %1066 = vmatprep.subr.bf16.mxu0 0
  %1067 = vmatpush1.bf16.msra.mxu0 %v916
  %1068 = vmatprep.subr.bf16.mxu0 0
  %1069 = vmatpush1.bf16.msra.mxu0 %v917
  %1070 = vmatprep.subr.bf16.mxu0 0
  %1071 = vmatpush1.bf16.msra.mxu0 %v918
  %1072 = vmatprep.subr.bf16.mxu0 0
  %1073 = vmatpush1.bf16.msra.mxu0 %v919
  %1074 = vmatprep.subr.bf16.mxu0 0
  %1075 = vmatpush1.bf16.msra.mxu0 %v920
  %1076 = vmatprep.subr.bf16.mxu0 0
  %1077 = vmatpush1.bf16.msra.mxu0 %v921
  %1078 = vmatprep.subr.bf16.mxu0 0
  %1079 = vmatpush1.bf16.msra.mxu0 %v922
  %1080 = vmatprep.subr.bf16.mxu0 0
  %1081 = vmatpush1.bf16.msra.mxu0 %v923
  %1082 = vmatprep.subr.bf16.mxu0 0
  %1083 = vmatpush1.bf16.msra.mxu0 %v924
  %1084 = vmatprep.subr.bf16.mxu0 0
  %1085 = vmatpush1.bf16.msra.mxu0 %v925
  %1086 = vmatprep.mubr.bf16.mxu0 %v479
  %1087 = vmatmul.mubr.bf16.gmra.mrb[0].mxu0 %v478
  %v1088 = vpop.f32.mrb[0].mxu0
  %v1089 = vadd.f32 %v252, %v1088
  %v1090 = vpop.f32.mrb[0].mxu0
  %v1091 = vpop.f32.mrb[0].mxu0
  %v1092 = vadd.f32 %v252, %v1091
  %v1093 = vpop.f32.mrb[0].mxu0
  %1094 = vmatprep.mubr.bf16.mxu0 %v488
  %1095 = vmatmul.mubr.bf16.gmra.mrb[0].mxu0 %v487
  %v1096 = vpop.f32.mrb[0].mxu0
  %v1097 = vadd.f32 %v252, %v1096
  %v1098 = vpop.f32.mrb[0].mxu0
  %v1099 = vpop.f32.mrb[0].mxu0
  %v1100 = vadd.f32 %v252, %v1099
  %v1101 = vpop.f32.mrb[0].mxu0
  %1102 = vmatprep.mubr.bf16.mxu0 %v497
  %1103 = vmatmul.mubr.bf16.gmra.mrb[0].mxu0 %v496
  %v1104 = vpop.f32.mrb[0].mxu0
  %v1105 = vadd.f32 %v252, %v1104
  %v1106 = vpop.f32.mrb[0].mxu0
  %v1107 = vpop.f32.mrb[0].mxu0
  %v1108 = vadd.f32 %v252, %v1107
  %v1109 = vpop.f32.mrb[0].mxu0
  %1110 = vmatprep.mubr.bf16.mxu0 %v506
  %1111 = vmatmul.mubr.bf16.gmra.mrb[0].mxu0 %v505
  %v1112 = vpop.f32.mrb[0].mxu0
  %v1113 = vadd.f32 %v252, %v1112
  %v1114 = vpop.f32.mrb[0].mxu0
  %v1115 = vpop.f32.mrb[0].mxu0
  %v1116 = vadd.f32 %v252, %v1115
  %v1117 = vpop.f32.mrb[0].mxu0
  %1118 = vmatprep.mubr.bf16.mxu0 %v515
  %1119 = vmatmul.mubr.bf16.gmra.mrb[0].mxu0 %v514
  %v1120 = vpop.f32.mrb[0].mxu0
  %v1121 = vadd.f32 %v252, %v1120
  %v1122 = vpop.f32.mrb[0].mxu0
  %v1123 = vpop.f32.mrb[0].mxu0
  %v1124 = vadd.f32 %v252, %v1123
  %v1125 = vpop.f32.mrb[0].mxu0
  %1126 = vmatprep.mubr.bf16.mxu0 %v524
  %1127 = vmatmul.mubr.bf16.gmra.mrb[0].mxu0 %v523
  %v1128 = vpop.f32.mrb[0].mxu0
  %v1129 = vadd.f32 %v252, %v1128
  %v1130 = vpop.f32.mrb[0].mxu0
  %v1131 = vpop.f32.mrb[0].mxu0
  %v1132 = vadd.f32 %v252, %v1131
  %v1133 = vpop.f32.mrb[0].mxu0
  %1134 = vmatprep.mubr.bf16.mxu0 %v533
  %1135 = vmatmul.mubr.bf16.gmra.mrb[0].mxu0 %v532
  %v1136 = vpop.f32.mrb[0].mxu0
  %v1137 = vadd.f32 %v252, %v1136
  %v1138 = vpop.f32.mrb[0].mxu0
  %v1139 = vpop.f32.mrb[0].mxu0
  %v1140 = vadd.f32 %v252, %v1139
  %v1141 = vpop.f32.mrb[0].mxu0
  %1142 = vmatprep.mubr.bf16.mxu0 %v542
  %1143 = vmatmul.mubr.bf16.gmra.mrb[0].mxu0 %v541
  %v1144 = vpop.f32.mrb[0].mxu0
  %v1145 = vadd.f32 %v252, %v1144
  %v1146 = vpop.f32.mrb[0].mxu0
  %v1147 = vpop.f32.mrb[0].mxu0
  %v1148 = vadd.f32 %v252, %v1147
  %v1149 = vpop.f32.mrb[0].mxu0
  %1150 = vdwg.mxu0
  %1151 = vmatprep.subr.bf16.mxu0 0
  %1152 = vmatpush1.bf16.msra.mxu0 %v926
  %1153 = vmatprep.subr.bf16.mxu0 0
  %1154 = vmatpush1.bf16.msra.mxu0 %v927
  %1155 = vmatprep.subr.bf16.mxu0 0
  %1156 = vmatpush1.bf16.msra.mxu0 %v928
  %1157 = vmatprep.subr.bf16.mxu0 0
  %1158 = vmatpush1.bf16.msra.mxu0 %v929
  %1159 = vmatprep.subr.bf16.mxu0 0
  %1160 = vmatpush1.bf16.msra.mxu0 %v930
  %1161 = vmatprep.subr.bf16.mxu0 0
  %1162 = vmatpush1.bf16.msra.mxu0 %v931
  %1163 = vmatprep.subr.bf16.mxu0 0
  %1164 = vmatpush1.bf16.msra.mxu0 %v932
  %1165 = vmatprep.subr.bf16.mxu0 0
  %1166 = vmatpush1.bf16.msra.mxu0 %v933
  %1167 = vmatprep.subr.bf16.mxu0 0
  %1168 = vmatpush1.bf16.msra.mxu0 %v934
  %1169 = vmatprep.subr.bf16.mxu0 0
  %1170 = vmatpush1.bf16.msra.mxu0 %v935
  %1171 = vmatprep.subr.bf16.mxu0 0
  %1172 = vmatpush1.bf16.msra.mxu0 %v936
  %1173 = vmatprep.subr.bf16.mxu0 0
  %1174 = vmatpush1.bf16.msra.mxu0 %v937
  %1175 = vmatprep.subr.bf16.mxu0 0
  %1176 = vmatpush1.bf16.msra.mxu0 %v938
  %1177 = vmatprep.subr.bf16.mxu0 0
  %1178 = vmatpush1.bf16.msra.mxu0 %v939
  %1179 = vmatprep.subr.bf16.mxu0 0
  %1180 = vmatpush1.bf16.msra.mxu0 %v940
  %1181 = vmatprep.subr.bf16.mxu0 0
  %1182 = vmatpush1.bf16.msra.mxu0 %v941
  %1183 = vmatprep.mubr.bf16.mxu0 %v481
  %1184 = vmatmul.mubr.bf16.gmra.mrb[0].mxu0 %v480
  %v1185 = vpop.f32.mrb[0].mxu0
  %v1186 = vadd.f32 %v1089, %v1185
  %v1187 = vpop.f32.mrb[0].mxu0
  %v1188 = vpop.f32.mrb[0].mxu0
  %v1189 = vadd.f32 %v1092, %v1188
  %v1190 = vpop.f32.mrb[0].mxu0
  %1191 = vmatprep.mubr.bf16.mxu0 %v490
  %1192 = vmatmul.mubr.bf16.gmra.mrb[0].mxu0 %v489
  %v1193 = vpop.f32.mrb[0].mxu0
  %v1194 = vadd.f32 %v1097, %v1193
  %v1195 = vpop.f32.mrb[0].mxu0
  %v1196 = vpop.f32.mrb[0].mxu0
  %v1197 = vadd.f32 %v1100, %v1196
  %v1198 = vpop.f32.mrb[0].mxu0
  %1199 = vmatprep.mubr.bf16.mxu0 %v499
  %1200 = vmatmul.mubr.bf16.gmra.mrb[0].mxu0 %v498
  %v1201 = vpop.f32.mrb[0].mxu0
  %v1202 = vadd.f32 %v1105, %v1201
  %v1203 = vpop.f32.mrb[0].mxu0
  %v1204 = vpop.f32.mrb[0].mxu0
  %v1205 = vadd.f32 %v1108, %v1204
  %v1206 = vpop.f32.mrb[0].mxu0
  %1207 = vmatprep.mubr.bf16.mxu0 %v508
  %1208 = vmatmul.mubr.bf16.gmra.mrb[0].mxu0 %v507
  %v1209 = vpop.f32.mrb[0].mxu0
  %v1210 = vadd.f32 %v1113, %v1209
  %v1211 = vpop.f32.mrb[0].mxu0
  %v1212 = vpop.f32.mrb[0].mxu0
  %v1213 = vadd.f32 %v1116, %v1212
  %v1214 = vpop.f32.mrb[0].mxu0
  %1215 = vmatprep.mubr.bf16.mxu0 %v517
  %1216 = vmatmul.mubr.bf16.gmra.mrb[0].mxu0 %v516
  %v1217 = vpop.f32.mrb[0].mxu0
  %v1218 = vadd.f32 %v1121, %v1217
  %v1219 = vpop.f32.mrb[0].mxu0
  %v1220 = vpop.f32.mrb[0].mxu0
  %v1221 = vadd.f32 %v1124, %v1220
  %v1222 = vpop.f32.mrb[0].mxu0
  %1223 = vmatprep.mubr.bf16.mxu0 %v526
  %1224 = vmatmul.mubr.bf16.gmra.mrb[0].mxu0 %v525
  %v1225 = vpop.f32.mrb[0].mxu0
  %v1226 = vadd.f32 %v1129, %v1225
  %v1227 = vpop.f32.mrb[0].mxu0
  %v1228 = vpop.f32.mrb[0].mxu0
  %v1229 = vadd.f32 %v1132, %v1228
  %v1230 = vpop.f32.mrb[0].mxu0
  %1231 = vmatprep.mubr.bf16.mxu0 %v535
  %1232 = vmatmul.mubr.bf16.gmra.mrb[0].mxu0 %v534
  %v1233 = vpop.f32.mrb[0].mxu0
  %v1234 = vadd.f32 %v1137, %v1233
  %v1235 = vpop.f32.mrb[0].mxu0
  %v1236 = vpop.f32.mrb[0].mxu0
  %v1237 = vadd.f32 %v1140, %v1236
  %v1238 = vpop.f32.mrb[0].mxu0
  %1239 = vmatprep.mubr.bf16.mxu0 %v544
  %1240 = vmatmul.mubr.bf16.gmra.mrb[0].mxu0 %v543
  %v1241 = vpop.f32.mrb[0].mxu0
  %v1242 = vadd.f32 %v1145, %v1241
  %v1243 = vpop.f32.mrb[0].mxu0
  %v1244 = vpop.f32.mrb[0].mxu0
  %v1245 = vadd.f32 %v1148, %v1244
  %v1246 = vpop.f32.mrb[0].mxu0
  %1247 = vdwg.mxu0
  %1248 = vmatprep.subr.bf16.mxu0 0
  %1249 = vmatpush1.bf16.msra.mxu0 %v942
  %1250 = vmatprep.subr.bf16.mxu0 0
  %1251 = vmatpush1.bf16.msra.mxu0 %v943
  %1252 = vmatprep.subr.bf16.mxu0 0
  %1253 = vmatpush1.bf16.msra.mxu0 %v944
  %1254 = vmatprep.subr.bf16.mxu0 0
  %1255 = vmatpush1.bf16.msra.mxu0 %v945
  %1256 = vmatprep.subr.bf16.mxu0 0
  %1257 = vmatpush1.bf16.msra.mxu0 %v946
  %1258 = vmatprep.subr.bf16.mxu0 0
  %1259 = vmatpush1.bf16.msra.mxu0 %v947
  %1260 = vmatprep.subr.bf16.mxu0 0
  %1261 = vmatpush1.bf16.msra.mxu0 %v948
  %1262 = vmatprep.subr.bf16.mxu0 0
  %1263 = vmatpush1.bf16.msra.mxu0 %v949
  %1264 = vmatprep.subr.bf16.mxu0 0
  %1265 = vmatpush1.bf16.msra.mxu0 %v950
  %1266 = vmatprep.subr.bf16.mxu0 0
  %1267 = vmatpush1.bf16.msra.mxu0 %v951
  %1268 = vmatprep.subr.bf16.mxu0 0
  %1269 = vmatpush1.bf16.msra.mxu0 %v952
  %1270 = vmatprep.subr.bf16.mxu0 0
  %1271 = vmatpush1.bf16.msra.mxu0 %v953
  %1272 = vmatprep.subr.bf16.mxu0 0
  %1273 = vmatpush1.bf16.msra.mxu0 %v954
  %1274 = vmatprep.subr.bf16.mxu0 0
  %1275 = vmatpush1.bf16.msra.mxu0 %v955
  %1276 = vmatprep.subr.bf16.mxu0 0
  %1277 = vmatpush1.bf16.msra.mxu0 %v956
  %1278 = vmatprep.subr.bf16.mxu0 0
  %1279 = vmatpush1.bf16.msra.mxu0 %v957
  %1280 = vmatprep.mubr.bf16.mxu0 %v483
  %1281 = vmatmul.mubr.bf16.gmra.mrb[0].mxu0 %v482
  %v1282 = vpop.f32.mrb[0].mxu0
  %v1283 = vadd.f32 %v1186, %v1282
  %v1284 = vpop.f32.mrb[0].mxu0
  %v1285 = vpop.f32.mrb[0].mxu0
  %v1286 = vadd.f32 %v1189, %v1285
  %v1287 = vpop.f32.mrb[0].mxu0
  %1288 = vmatprep.mubr.bf16.mxu0 %v492
  %1289 = vmatmul.mubr.bf16.gmra.mrb[0].mxu0 %v491
  %v1290 = vpop.f32.mrb[0].mxu0
  %v1291 = vadd.f32 %v1194, %v1290
  %v1292 = vpop.f32.mrb[0].mxu0
  %v1293 = vpop.f32.mrb[0].mxu0
  %v1294 = vadd.f32 %v1197, %v1293
  %v1295 = vpop.f32.mrb[0].mxu0
  %1296 = vmatprep.mubr.bf16.mxu0 %v501
  %1297 = vmatmul.mubr.bf16.gmra.mrb[0].mxu0 %v500
  %v1298 = vpop.f32.mrb[0].mxu0
  %v1299 = vadd.f32 %v1202, %v1298
  %v1300 = vpop.f32.mrb[0].mxu0
  %v1301 = vpop.f32.mrb[0].mxu0
  %v1302 = vadd.f32 %v1205, %v1301
  %v1303 = vpop.f32.mrb[0].mxu0
  %1304 = vmatprep.mubr.bf16.mxu0 %v510
  %1305 = vmatmul.mubr.bf16.gmra.mrb[0].mxu0 %v509
  %v1306 = vpop.f32.mrb[0].mxu0
  %v1307 = vadd.f32 %v1210, %v1306
  %v1308 = vpop.f32.mrb[0].mxu0
  %v1309 = vpop.f32.mrb[0].mxu0
  %v1310 = vadd.f32 %v1213, %v1309
  %v1311 = vpop.f32.mrb[0].mxu0
  %1312 = vmatprep.mubr.bf16.mxu0 %v519
  %1313 = vmatmul.mubr.bf16.gmra.mrb[0].mxu0 %v518
  %v1314 = vpop.f32.mrb[0].mxu0
  %v1315 = vadd.f32 %v1218, %v1314
  %v1316 = vpop.f32.mrb[0].mxu0
  %v1317 = vpop.f32.mrb[0].mxu0
  %v1318 = vadd.f32 %v1221, %v1317
  %v1319 = vpop.f32.mrb[0].mxu0
  %1320 = vmatprep.mubr.bf16.mxu0 %v528
  %1321 = vmatmul.mubr.bf16.gmra.mrb[0].mxu0 %v527
  %v1322 = vpop.f32.mrb[0].mxu0
  %v1323 = vadd.f32 %v1226, %v1322
  %v1324 = vpop.f32.mrb[0].mxu0
  %v1325 = vpop.f32.mrb[0].mxu0
  %v1326 = vadd.f32 %v1229, %v1325
  %v1327 = vpop.f32.mrb[0].mxu0
  %1328 = vmatprep.mubr.bf16.mxu0 %v537
  %1329 = vmatmul.mubr.bf16.gmra.mrb[0].mxu0 %v536
  %v1330 = vpop.f32.mrb[0].mxu0
  %v1331 = vadd.f32 %v1234, %v1330
  %v1332 = vpop.f32.mrb[0].mxu0
  %v1333 = vpop.f32.mrb[0].mxu0
  %v1334 = vadd.f32 %v1237, %v1333
  %v1335 = vpop.f32.mrb[0].mxu0
  %1336 = vmatprep.mubr.bf16.mxu0 %v546
  %1337 = vmatmul.mubr.bf16.gmra.mrb[0].mxu0 %v545
  %v1338 = vpop.f32.mrb[0].mxu0
  %v1339 = vadd.f32 %v1242, %v1338
  %v1340 = vpop.f32.mrb[0].mxu0
  %v1341 = vpop.f32.mrb[0].mxu0
  %v1342 = vadd.f32 %v1245, %v1341
  %v1343 = vpop.f32.mrb[0].mxu0
  %1344 = vdwg.mxu0
  %1345 = vmatprep.subr.bf16.mxu0 0
  %1346 = vmatpush1.bf16.msra.mxu0 %v958
  %1347 = vmatprep.subr.bf16.mxu0 0
  %1348 = vmatpush1.bf16.msra.mxu0 %v959
  %1349 = vmatprep.subr.bf16.mxu0 0
  %1350 = vmatpush1.bf16.msra.mxu0 %v960
  %1351 = vmatprep.subr.bf16.mxu0 0
  %1352 = vmatpush1.bf16.msra.mxu0 %v961
  %1353 = vmatprep.subr.bf16.mxu0 0
  %1354 = vmatpush1.bf16.msra.mxu0 %v962
  %1355 = vmatprep.subr.bf16.mxu0 0
  %1356 = vmatpush1.bf16.msra.mxu0 %v963
  %1357 = vmatprep.subr.bf16.mxu0 0
  %1358 = vmatpush1.bf16.msra.mxu0 %v964
  %1359 = vmatprep.subr.bf16.mxu0 0
  %1360 = vmatpush1.bf16.msra.mxu0 %v965
  %1361 = vmatprep.subr.bf16.mxu0 0
  %1362 = vmatpush1.bf16.msra.mxu0 %v966
  %1363 = vmatprep.subr.bf16.mxu0 0
  %1364 = vmatpush1.bf16.msra.mxu0 %v967
  %1365 = vmatprep.subr.bf16.mxu0 0
  %1366 = vmatpush1.bf16.msra.mxu0 %v968
  %1367 = vmatprep.subr.bf16.mxu0 0
  %1368 = vmatpush1.bf16.msra.mxu0 %v969
  %1369 = vmatprep.subr.bf16.mxu0 0
  %1370 = vmatpush1.bf16.msra.mxu0 %v970
  %1371 = vmatprep.subr.bf16.mxu0 0
  %1372 = vmatpush1.bf16.msra.mxu0 %v971
  %1373 = vmatprep.subr.bf16.mxu0 0
  %1374 = vmatpush1.bf16.msra.mxu0 %v972
  %1375 = vmatprep.subr.bf16.mxu0 0
  %1376 = vmatpush1.bf16.msra.mxu0 %v973
  %1377 = vmatprep.mubr.bf16.mxu0 %v485
  %1378 = vmatmul.mubr.bf16.gmra.mrb[0].mxu0 %v484
  %v1379 = vpop.f32.mrb[0].mxu0
  %v1380 = vadd.f32 %v1283, %v1379
  %v1381 = vpop.f32.mrb[0].mxu0
  %v1382 = vpop.f32.mrb[0].mxu0
  %v1383 = vadd.f32 %v1286, %v1382
  %v1384 = vpop.f32.mrb[0].mxu0
  %1385 = vmatprep.mubr.bf16.mxu0 %v494
  %1386 = vmatmul.mubr.bf16.gmra.mrb[0].mxu0 %v493
  %v1387 = vpop.f32.mrb[0].mxu0
  %v1388 = vadd.f32 %v1291, %v1387
  %v1389 = vpop.f32.mrb[0].mxu0
  %v1390 = vpop.f32.mrb[0].mxu0
  %v1391 = vadd.f32 %v1294, %v1390
  %v1392 = vpop.f32.mrb[0].mxu0
  %1393 = vmatprep.mubr.bf16.mxu0 %v503
  %1394 = vmatmul.mubr.bf16.gmra.mrb[0].mxu0 %v502
  %v1395 = vpop.f32.mrb[0].mxu0
  %v1396 = vadd.f32 %v1299, %v1395
  %v1397 = vpop.f32.mrb[0].mxu0
  %v1398 = vpop.f32.mrb[0].mxu0
  %v1399 = vadd.f32 %v1302, %v1398
  %v1400 = vpop.f32.mrb[0].mxu0
  %1401 = vmatprep.mubr.bf16.mxu0 %v512
  %1402 = vmatmul.mubr.bf16.gmra.mrb[0].mxu0 %v511
  %v1403 = vpop.f32.mrb[0].mxu0
  %v1404 = vadd.f32 %v1307, %v1403
  %v1405 = vpop.f32.mrb[0].mxu0
  %v1406 = vpop.f32.mrb[0].mxu0
  %v1407 = vadd.f32 %v1310, %v1406
  %v1408 = vpop.f32.mrb[0].mxu0
  %1409 = vmatprep.mubr.bf16.mxu0 %v521
  %1410 = vmatmul.mubr.bf16.gmra.mrb[0].mxu0 %v520
  %v1411 = vpop.f32.mrb[0].mxu0
  %v1412 = vadd.f32 %v1315, %v1411
  %v1413 = vpop.f32.mrb[0].mxu0
  %v1414 = vpop.f32.mrb[0].mxu0
  %v1415 = vadd.f32 %v1318, %v1414
  %v1416 = vpop.f32.mrb[0].mxu0
  %1417 = vmatprep.mubr.bf16.mxu0 %v530
  %1418 = vmatmul.mubr.bf16.gmra.mrb[0].mxu0 %v529
  %v1419 = vpop.f32.mrb[0].mxu0
  %v1420 = vadd.f32 %v1323, %v1419
  %v1421 = vpop.f32.mrb[0].mxu0
  %v1422 = vpop.f32.mrb[0].mxu0
  %v1423 = vadd.f32 %v1326, %v1422
  %v1424 = vpop.f32.mrb[0].mxu0
  %1425 = vmatprep.mubr.bf16.mxu0 %v539
  %1426 = vmatmul.mubr.bf16.gmra.mrb[0].mxu0 %v538
  %v1427 = vpop.f32.mrb[0].mxu0
  %v1428 = vadd.f32 %v1331, %v1427
  %v1429 = vpop.f32.mrb[0].mxu0
  %v1430 = vpop.f32.mrb[0].mxu0
  %v1431 = vadd.f32 %v1334, %v1430
  %v1432 = vpop.f32.mrb[0].mxu0
  %1433 = vmatprep.mubr.bf16.mxu0 %v548
  %1434 = vmatmul.mubr.bf16.gmra.mrb[0].mxu0 %v547
  %v1435 = vpop.f32.mrb[0].mxu0
  %v1436 = vadd.f32 %v1339, %v1435
  %v1437 = vpop.f32.mrb[0].mxu0
  %v1438 = vpop.f32.mrb[0].mxu0
  %v1439 = vadd.f32 %v1342, %v1438
  %v1440 = vpop.f32.mrb[0].mxu0
  %1441 = vdwg.mxu0
  %1442 = vmatprep.subr.bf16.mxu0 0
  %1443 = vmatpush1.bf16.msra.mxu0 %v974
  %1444 = vmatprep.subr.bf16.mxu0 0
  %1445 = vmatpush1.bf16.msra.mxu0 %v975
  %1446 = vmatprep.subr.bf16.mxu0 0
  %1447 = vmatpush1.bf16.msra.mxu0 %v976
  %1448 = vmatprep.subr.bf16.mxu0 0
  %1449 = vmatpush1.bf16.msra.mxu0 %v977
  %1450 = vmatprep.subr.bf16.mxu0 0
  %1451 = vmatpush1.bf16.msra.mxu0 %v978
  %1452 = vmatprep.subr.bf16.mxu0 0
  %1453 = vmatpush1.bf16.msra.mxu0 %v979
  %1454 = vmatprep.subr.bf16.mxu0 0
  %1455 = vmatpush1.bf16.msra.mxu0 %v980
  %1456 = vmatprep.subr.bf16.mxu0 0
  %1457 = vmatpush1.bf16.msra.mxu0 %v981
  %1458 = vmatprep.subr.bf16.mxu0 0
  %1459 = vmatpush1.bf16.msra.mxu0 0
  %1460 = vmatprep.subr.bf16.mxu0 0
  %1461 = vmatpush1.bf16.msra.mxu0 0
  %1462 = vmatprep.subr.bf16.mxu0 0
  %1463 = vmatpush1.bf16.msra.mxu0 0
  %1464 = vmatprep.subr.bf16.mxu0 0
  %1465 = vmatpush1.bf16.msra.mxu0 0
  %1466 = vmatprep.subr.bf16.mxu0 0
  %1467 = vmatpush1.bf16.msra.mxu0 0
  %1468 = vmatprep.subr.bf16.mxu0 0
  %1469 = vmatpush1.bf16.msra.mxu0 0
  %1470 = vmatprep.subr.bf16.mxu0 0
  %1471 = vmatpush1.bf16.msra.mxu0 0
  %1472 = vmatprep.subr.bf16.mxu0 0
  %1473 = vmatpush1.bf16.msra.mxu0 0
  %1474 = vmatprep.mubr.bf16.mxu0 0
  %1475 = vmatmul.mubr.bf16.gmra.mrb[0].mxu0 %v486
  %v1476 = vpop.f32.mrb[0].mxu0
  %v1477 = vadd.f32 %v1380, %v1476
  %v1478 = vpop.f32.mrb[0].mxu0
  %v1479 = vpop.f32.mrb[0].mxu0
  %v1480 = vadd.f32 %v1383, %v1479
  %v1481 = vpop.f32.mrb[0].mxu0
  %1482 = vmatprep.mubr.bf16.mxu0 0
  %1483 = vmatmul.mubr.bf16.gmra.mrb[0].mxu0 %v495
  %v1484 = vpop.f32.mrb[0].mxu0
  %v1485 = vadd.f32 %v1388, %v1484
  %v1486 = vpop.f32.mrb[0].mxu0
  %v1487 = vpop.f32.mrb[0].mxu0
  %v1488 = vadd.f32 %v1391, %v1487
  %v1489 = vpop.f32.mrb[0].mxu0
  %1490 = vmatprep.mubr.bf16.mxu0 0
  %1491 = vmatmul.mubr.bf16.gmra.mrb[0].mxu0 %v504
  %v1492 = vpop.f32.mrb[0].mxu0
  %v1493 = vadd.f32 %v1396, %v1492
  %v1494 = vpop.f32.mrb[0].mxu0
  %v1495 = vpop.f32.mrb[0].mxu0
  %v1496 = vadd.f32 %v1399, %v1495
  %v1497 = vpop.f32.mrb[0].mxu0
  %1498 = vmatprep.mubr.bf16.mxu0 0
  %1499 = vmatmul.mubr.bf16.gmra.mrb[0].mxu0 %v513
  %v1500 = vpop.f32.mrb[0].mxu0
  %v1501 = vadd.f32 %v1404, %v1500
  %v1502 = vpop.f32.mrb[0].mxu0
  %v1503 = vpop.f32.mrb[0].mxu0
  %v1504 = vadd.f32 %v1407, %v1503
  %v1505 = vpop.f32.mrb[0].mxu0
  %1506 = vmatprep.mubr.bf16.mxu0 0
  %1507 = vmatmul.mubr.bf16.gmra.mrb[0].mxu0 %v522
  %v1508 = vpop.f32.mrb[0].mxu0
  %v1509 = vadd.f32 %v1412, %v1508
  %v1510 = vpop.f32.mrb[0].mxu0
  %v1511 = vpop.f32.mrb[0].mxu0
  %v1512 = vadd.f32 %v1415, %v1511
  %v1513 = vpop.f32.mrb[0].mxu0
  %1514 = vmatprep.mubr.bf16.mxu0 0
  %1515 = vmatmul.mubr.bf16.gmra.mrb[0].mxu0 %v531
  %v1516 = vpop.f32.mrb[0].mxu0
  %v1517 = vadd.f32 %v1420, %v1516
  %v1518 = vpop.f32.mrb[0].mxu0
  %v1519 = vpop.f32.mrb[0].mxu0
  %v1520 = vadd.f32 %v1423, %v1519
  %v1521 = vpop.f32.mrb[0].mxu0
  %1522 = vmatprep.mubr.bf16.mxu0 0
  %1523 = vmatmul.mubr.bf16.gmra.mrb[0].mxu0 %v540
  %v1524 = vpop.f32.mrb[0].mxu0
  %v1525 = vadd.f32 %v1428, %v1524
  %v1526 = vpop.f32.mrb[0].mxu0
  %v1527 = vpop.f32.mrb[0].mxu0
  %v1528 = vadd.f32 %v1431, %v1527
  %v1529 = vpop.f32.mrb[0].mxu0
  %1530 = vmatprep.mubr.bf16.mxu0 0
  %1531 = vmatmul.mubr.bf16.gmra.mrb[0].mxu0 %v549
  %v1532 = vpop.f32.mrb[0].mxu0
  %v1533 = vadd.f32 %v1436, %v1532
  %v1534 = vpop.f32.mrb[0].mxu0
  %v1535 = vpop.f32.mrb[0].mxu0
  %v1536 = vadd.f32 %v1439, %v1535
  %v1537 = vpop.f32.mrb[0].mxu0
  %1538 = vdwg.mxu0
  %v1539 = vmax.f32 %v1477, 0.0
  %v1540 = vmax.f32 %v1480, 0.0
  %v1541 = vmax.f32 %v1485, 0.0
  %v1542 = vmax.f32 %v1488, 0.0
  %v1543 = vmax.f32 %v1493, 0.0
  %v1544 = vmax.f32 %v1496, 0.0
  %v1545 = vmax.f32 %v1501, 0.0
  %v1546 = vmax.f32 %v1504, 0.0
  %v1547 = vmax.f32 %v1509, 0.0
  %v1548 = vmax.f32 %v1512, 0.0
  %v1549 = vmax.f32 %v1517, 0.0
  %v1550 = vmax.f32 %v1520, 0.0
  %v1551 = vmax.f32 %v1525, 0.0
  %v1552 = vmax.f32 %v1528, 0.0
  %v1553 = vmax.f32 %v1533, 0.0
  %v1554 = vmax.f32 %v1536, 0.0
  %v1555 = vpack.c.bf16 %v1540, %v1539
  %v1556 = vpack.c.bf16 %v1542, %v1541
  %v1557 = vpack.c.bf16 %v1544, %v1543
  %v1558 = vpack.c.bf16 %v1546, %v1545
  %v1559 = vpack.c.bf16 %v1548, %v1547
  %v1560 = vpack.c.bf16 %v1550, %v1549
  %v1561 = vpack.c.bf16 %v1552, %v1551
  %v1562 = vpack.c.bf16 %v1554, %v1553
  %v1571 = vunpack.c.l.b16 %v1555
  %v1572 = vunpack.c.h.b16 %v1555
  %v1573 = vunpack.c.l.b16 %v1556
  %v1574 = vunpack.c.h.b16 %v1556
  %v1575 = vunpack.c.l.b16 %v1557
  %v1576 = vunpack.c.h.b16 %v1557
  %v1577 = vunpack.c.l.b16 %v1558
  %v1578 = vunpack.c.h.b16 %v1558
  %v1579 = vunpack.c.l.b16 %v1559
  %v1580 = vunpack.c.h.b16 %v1559
  %v1581 = vunpack.c.l.b16 %v1560
  %v1582 = vunpack.c.h.b16 %v1560
  %v1583 = vunpack.c.l.b16 %v1561
  %v1584 = vunpack.c.h.b16 %v1561
  %v1585 = vunpack.c.l.b16 %v1562
  %v1586 = vunpack.c.h.b16 %v1562
  %v1587 = vpack.c.b16 %v1571, %v1571
  %v1588 = vpack.c.b16 %v1572, %v1572
  %v1589 = vpack.c.b16 %v1573, %v1573
  %v1590 = vpack.c.b16 %v1574, %v1574
  %v1591 = vpack.c.b16 %v1575, %v1575
  %v1592 = vpack.c.b16 %v1576, %v1576
  %v1593 = vpack.c.b16 %v1577, %v1577
  %v1594 = vpack.c.b16 %v1578, %v1578
  %v1595 = vpack.c.b16 %v1579, %v1579
  %v1596 = vpack.c.b16 %v1580, %v1580
  %v1597 = vpack.c.b16 %v1581, %v1581
  %v1598 = vpack.c.b16 %v1582, %v1582
  %v1599 = vpack.c.b16 %v1583, %v1583
  %v1600 = vpack.c.b16 %v1584, %v1584
  %v1601 = vpack.c.b16 %v1585, %v1585
  %v1602 = vpack.c.b16 %v1586, %v1586
  %1619 = vst [vmem:[%s5] sm:$0xf] %v1587
  %1620 = vst [vmem:[%s5 + $0x4] sm:$0xf] %v1588
  %1621 = vst [vmem:[%s5 + $0x8] sm:$0xf] %v1589
  %1622 = vst [vmem:[%s5 + $0xc] sm:$0xf] %v1590
  %1623 = vst [vmem:[%s5 + $0x10] sm:$0xf] %v1591
  %1624 = vst [vmem:[%s5 + $0x14] sm:$0xf] %v1592
  %1625 = vst [vmem:[%s5 + $0x18] sm:$0xf] %v1593
  %1626 = vst [vmem:[%s5 + $0x1c] sm:$0xf] %v1594
  %1627 = vst [vmem:[%s5 + $0x20] sm:$0xf] %v1595
  %1628 = vst [vmem:[%s5 + $0x24] sm:$0xf] %v1596
  %1629 = vst [vmem:[%s5 + $0x28] sm:$0xf] %v1597
  %1630 = vst [vmem:[%s5 + $0x2c] sm:$0xf] %v1598
  %1631 = vst [vmem:[%s5 + $0x30] sm:$0xf] %v1599
  %1632 = vst [vmem:[%s5 + $0x34] sm:$0xf] %v1600
  %1633 = vst [vmem:[%s5 + $0x38] sm:$0xf] %v1601
  %1634 = vst [vmem:[%s5 + $0x3c] sm:$0xf] %v1602
  %v1635 = vld [vmem:[%s3] sm:$0xf]
  %v1636 = vld [vmem:[%s3 + $0x4] sm:$0xf]
  %v1637 = vld [vmem:[%s3 + $0x8] sm:$0xf]
  %v1638 = vld [vmem:[%s3 + $0xc] sm:$0xf]
  %v1639 = vld [vmem:[%s3 + $0x10] sm:$0xf]
  %v1640 = vld [vmem:[%s3 + $0x14] sm:$0xf]
  %v1641 = vld [vmem:[%s3 + $0x18] sm:$0xf]
  %v1642 = vld [vmem:[%s3 + $0x1c] sm:$0xf]
  %v1643 = vld [vmem:[%s3 + $0x20] sm:$0xf]
  %v1644 = vld [vmem:[%s3 + $0x24] sm:$0xf]
  %v1645 = vld [vmem:[%s3 + $0x28] sm:$0xf]
  %v1646 = vld [vmem:[%s3 + $0x2c] sm:$0xf]
  %v1647 = vld [vmem:[%s3 + $0x30] sm:$0xf]
  %v1648 = vld [vmem:[%s3 + $0x34] sm:$0xf]
  %v1649 = vld [vmem:[%s3 + $0x38] sm:$0xf]
  %v1650 = vld [vmem:[%s3 + $0x3c] sm:$0xf]
  %v1651 = vld [vmem:[%s4] sm:$0x1]
  %v1653 = vlaneseq
  %v1654 = vshrl.u32 %v1653, 7
  %v1655 = vsub.s32 0, %v1654
  %v1656 = vrot.slane %v1651, %v1655
  %v1674 = vunpack.c.l.b16 %v1635
  %v1675 = vunpack.c.l.b16 %v1636
  %v1676 = vunpack.c.l.b16 %v1637
  %v1677 = vunpack.c.l.b16 %v1638
  %v1678 = vunpack.c.l.b16 %v1639
  %v1679 = vunpack.c.l.b16 %v1640
  %v1680 = vunpack.c.l.b16 %v1641
  %v1681 = vunpack.c.l.b16 %v1642
  %v1682 = vunpack.c.l.b16 %v1643
  %v1683 = vunpack.c.l.b16 %v1644
  %v1684 = vunpack.c.l.b16 %v1645
  %v1685 = vunpack.c.l.b16 %v1646
  %v1686 = vunpack.c.l.b16 %v1647
  %v1687 = vunpack.c.l.b16 %v1648
  %v1688 = vunpack.c.l.b16 %v1649
  %v1689 = vunpack.c.l.b16 %v1650
  %v1690 = vpack.c.b16 %v1675, %v1674
  %v1691 = vpack.c.b16 %v1677, %v1676
  %v1692 = vpack.c.b16 %v1679, %v1678
  %v1693 = vpack.c.b16 %v1681, %v1680
  %v1694 = vpack.c.b16 %v1683, %v1682
  %v1695 = vpack.c.b16 %v1685, %v1684
  %v1696 = vpack.c.b16 %v1687, %v1686
  %v1697 = vpack.c.b16 %v1689, %v1688
  %1706 = vmatprep.subr.bf16.mxu0 0
  %1707 = vmatpush1.bf16.msra.mxu0 %v1690
  %1708 = vmatprep.subr.bf16.mxu0 0
  %1709 = vmatpush1.bf16.msra.mxu0 %v1691
  %1710 = vmatprep.subr.bf16.mxu0 0
  %1711 = vmatpush1.bf16.msra.mxu0 %v1692
  %1712 = vmatprep.subr.bf16.mxu0 0
  %1713 = vmatpush1.bf16.msra.mxu0 %v1693
  %1714 = vmatprep.subr.bf16.mxu0 0
  %1715 = vmatpush1.bf16.msra.mxu0 %v1694
  %1716 = vmatprep.subr.bf16.mxu0 0
  %1717 = vmatpush1.bf16.msra.mxu0 %v1695
  %1718 = vmatprep.subr.bf16.mxu0 0
  %1719 = vmatpush1.bf16.msra.mxu0 %v1696
  %1720 = vmatprep.subr.bf16.mxu0 0
  %1721 = vmatpush1.bf16.msra.mxu0 %v1697
  %1722 = vmatprep.subr.bf16.mxu0 0
  %1723 = vmatpush1.bf16.msra.mxu0 0
  %1724 = vmatprep.subr.bf16.mxu0 0
  %1725 = vmatpush1.bf16.msra.mxu0 0
  %1726 = vmatprep.subr.bf16.mxu0 0
  %1727 = vmatpush1.bf16.msra.mxu0 0
  %1728 = vmatprep.subr.bf16.mxu0 0
  %1729 = vmatpush1.bf16.msra.mxu0 0
  %1730 = vmatprep.subr.bf16.mxu0 0
  %1731 = vmatpush1.bf16.msra.mxu0 0
  %1732 = vmatprep.subr.bf16.mxu0 0
  %1733 = vmatpush1.bf16.msra.mxu0 0
  %1734 = vmatprep.subr.bf16.mxu0 0
  %1735 = vmatpush1.bf16.msra.mxu0 0
  %1736 = vmatprep.subr.bf16.mxu0 0
  %1737 = vmatpush1.bf16.msra.mxu0 0
  %1738 = vmatprep.mubr.bf16.mxu0 0
  %1739 = vmatmul.mubr.bf16.gmra.mrb[0].mxu0 %v1555
  %v1740 = vpop.f32.mrb[0].mxu0
  %v1741 = vadd.f32 %v1656, %v1740
  %v1742 = vpop.f32.mrb[0].mxu0
  %v1743 = vpop.f32.mrb[0].mxu0
  %v1744 = vadd.f32 %v1656, %v1743
  %v1745 = vpop.f32.mrb[0].mxu0
  %1746 = vmatprep.mubr.bf16.mxu0 0
  %1747 = vmatmul.mubr.bf16.gmra.mrb[0].mxu0 %v1556
  %v1748 = vpop.f32.mrb[0].mxu0
  %v1749 = vadd.f32 %v1656, %v1748
  %v1750 = vpop.f32.mrb[0].mxu0
  %v1751 = vpop.f32.mrb[0].mxu0
  %v1752 = vadd.f32 %v1656, %v1751
  %v1753 = vpop.f32.mrb[0].mxu0
  %1754 = vmatprep.mubr.bf16.mxu0 0
  %1755 = vmatmul.mubr.bf16.gmra.mrb[0].mxu0 %v1557
  %v1756 = vpop.f32.mrb[0].mxu0
  %v1757 = vadd.f32 %v1656, %v1756
  %v1758 = vpop.f32.mrb[0].mxu0
  %v1759 = vpop.f32.mrb[0].mxu0
  %v1760 = vadd.f32 %v1656, %v1759
  %v1761 = vpop.f32.mrb[0].mxu0
  %1762 = vmatprep.mubr.bf16.mxu0 0
  %1763 = vmatmul.mubr.bf16.gmra.mrb[0].mxu0 %v1558
  %v1764 = vpop.f32.mrb[0].mxu0
  %v1765 = vadd.f32 %v1656, %v1764
  %v1766 = vpop.f32.mrb[0].mxu0
  %v1767 = vpop.f32.mrb[0].mxu0
  %v1768 = vadd.f32 %v1656, %v1767
  %v1769 = vpop.f32.mrb[0].mxu0
  %1770 = vmatprep.mubr.bf16.mxu0 0
  %1771 = vmatmul.mubr.bf16.gmra.mrb[0].mxu0 %v1559
  %v1772 = vpop.f32.mrb[0].mxu0
  %v1773 = vadd.f32 %v1656, %v1772
  %v1774 = vpop.f32.mrb[0].mxu0
  %v1775 = vpop.f32.mrb[0].mxu0
  %v1776 = vadd.f32 %v1656, %v1775
  %v1777 = vpop.f32.mrb[0].mxu0
  %1778 = vmatprep.mubr.bf16.mxu0 0
  %1779 = vmatmul.mubr.bf16.gmra.mrb[0].mxu0 %v1560
  %v1780 = vpop.f32.mrb[0].mxu0
  %v1781 = vadd.f32 %v1656, %v1780
  %v1782 = vpop.f32.mrb[0].mxu0
  %v1783 = vpop.f32.mrb[0].mxu0
  %v1784 = vadd.f32 %v1656, %v1783
  %v1785 = vpop.f32.mrb[0].mxu0
  %1786 = vmatprep.mubr.bf16.mxu0 0
  %1787 = vmatmul.mubr.bf16.gmra.mrb[0].mxu0 %v1561
  %v1788 = vpop.f32.mrb[0].mxu0
  %v1789 = vadd.f32 %v1656, %v1788
  %v1790 = vpop.f32.mrb[0].mxu0
  %v1791 = vpop.f32.mrb[0].mxu0
  %v1792 = vadd.f32 %v1656, %v1791
  %v1793 = vpop.f32.mrb[0].mxu0
  %1794 = vmatprep.mubr.bf16.mxu0 0
  %1795 = vmatmul.mubr.bf16.gmra.mrb[0].mxu0 %v1562
  %v1796 = vpop.f32.mrb[0].mxu0
  %v1797 = vadd.f32 %v1656, %v1796
  %v1798 = vpop.f32.mrb[0].mxu0
  %v1799 = vpop.f32.mrb[0].mxu0
  %v1800 = vadd.f32 %v1656, %v1799
  %v1801 = vpop.f32.mrb[0].mxu0
  %1802 = vdwg.mxu0
  %1803 = vst [vmem:[%s6] sm:$0xff] %v1741
  %1804 = vst [vmem:[%s6 + $0x8] sm:$0xff] %v1744
  %1805 = vst [vmem:[%s6 + $0x10] sm:$0xff] %v1749
  %1806 = vst [vmem:[%s6 + $0x18] sm:$0xff] %v1752
  %1807 = vst [vmem:[%s6 + $0x20] sm:$0xff] %v1757
  %1808 = vst [vmem:[%s6 + $0x28] sm:$0xff] %v1760
  %1809 = vst [vmem:[%s6 + $0x30] sm:$0xff] %v1765
  %1810 = vst [vmem:[%s6 + $0x38] sm:$0xff] %v1768
  %1811 = vst [vmem:[%s6 + $0x40] sm:$0xff] %v1773
  %1812 = vst [vmem:[%s6 + $0x48] sm:$0xff] %v1776
  %1813 = vst [vmem:[%s6 + $0x50] sm:$0xff] %v1781
  %1814 = vst [vmem:[%s6 + $0x58] sm:$0xff] %v1784
  %1815 = vst [vmem:[%s6 + $0x60] sm:$0xff] %v1789
  %1816 = vst [vmem:[%s6 + $0x68] sm:$0xff] %v1792
  %1817 = vst [vmem:[%s6 + $0x70] sm:$0xff] %v1797
  %1818 = vst [vmem:[%s6 + $0x78] sm:$0xff] %v1800
  // Predicated region
  $region22: #{_forward_front.7} parent=0 // pred_check
    _
  $region23: #{_forward_front.7} parent=0 // pred_check_branch
    %1820 = sbr.rel (0) target = $region25
  $region24: #{_forward_front.7} parent=0 // pred_region
    _
  $region25: #{_forward_front.7} parent=0 // pred_fallthru
    _
  // Predicated region
  $region26: #{_forward_front.7} parent=0 // pred_check
    _
  $region27: #{_forward_front.7} parent=0 // pred_check_branch
    %1822 = sbr.rel (0) target = $region29
  $region28: #{_forward_front.7} parent=0 // pred_region
    _
  $region29: #{_forward_front.7} parent=0 // pred_fallthru
    _
  // Predicated region
  $region30: #{_forward_front.7} parent=0 // pred_check
    _
  $region31: #{_forward_front.7} parent=0 // pred_check_branch
    %1824 = sbr.rel (0) target = $region33
  $region32: #{_forward_front.7} parent=0 // pred_region
    _
  $region33: #{_forward_front.7} parent=0 // pred_fallthru
    _
  // Predicated region
  $region34: #{_forward_front.7} parent=0 // pred_check
    _
  $region35: #{_forward_front.7} parent=0 // pred_check_branch
    %1826 = sbr.rel (0) target = $region37
  $region36: #{_forward_front.7} parent=0 // pred_region
    _
  $region37: #{_forward_front.7} parent=0 // pred_fallthru
    _

// kernel: _forward_front.8
$region0: #{_forward_front.8}
  #allocation0 [shape = 'u32[]', space=smem, size = 0x4, offset = 0x4, fixed_abs, tag = 'smem constant byte address 0x4 - core index']
  #allocation1 [shape = 'u32[144,128]{1,0:T(1,128)}', space=vmem, size = 0x12000, scoped, tag = 'internal scratch']
  %s0 = inlined_call_operand.vmem [shape: bf16[32,1152], index: 0, kind: input, shape index: {}]
  %s1 = inlined_call_operand.vmem [shape: bf16[1152,128], index: 1, kind: input, shape index: {}]
  %s2 = inlined_call_operand.vmem [shape: f32[1,128], index: 2, kind: input, shape index: {}]
  %s3 = inlined_call_operand.vmem [shape: bf16[128,128], index: 3, kind: input, shape index: {}]
  %s4 = inlined_call_operand.vmem [shape: f32[1,128], index: 4, kind: input, shape index: {}]
  %s5 = inlined_call_operand.vmem [shape: bf16[32,128], index: 5, kind: output, shape index: {0}]
  %s6 = inlined_call_operand.vmem [shape: f32[32,128], index: 6, kind: output, shape index: {1}]
  %7 = xla_tuple %s5, %s6
  %s8 = sld [smem:[#allocation0]]
  $region38: #{_forward_front.8} parent=0
    _
  %s10 = ssub.s32 1, %s8
  %s11 = scalar_select 0, %s10, %s8
  // Predicated region
  $region2: #{_forward_front.8} parent=0 // pred_check
    _
  $region3: #{_forward_front.8} parent=0 // pred_check_branch
    %13 = sbr.rel (0) target = $region5
  $region4: #{_forward_front.8} parent=0 // pred_region
    _
  $region5: #{_forward_front.8} parent=0 // pred_fallthru
    _
  // Predicated region
  $region6: #{_forward_front.8} parent=0 // pred_check
    _
  $region7: #{_forward_front.8} parent=0 // pred_check_branch
    %15 = sbr.rel (0) target = $region9
  $region8: #{_forward_front.8} parent=0 // pred_region
    _
  $region9: #{_forward_front.8} parent=0 // pred_fallthru
    _
  // Predicated region
  $region10: #{_forward_front.8} parent=0 // pred_check
    _
  $region11: #{_forward_front.8} parent=0 // pred_check_branch
    %17 = sbr.rel (0) target = $region13
  $region12: #{_forward_front.8} parent=0 // pred_region
    _
  $region13: #{_forward_front.8} parent=0 // pred_fallthru
    _
  // Predicated region
  $region14: #{_forward_front.8} parent=0 // pred_check
    _
  $region15: #{_forward_front.8} parent=0 // pred_check_branch
    %19 = sbr.rel (0) target = $region17
  $region16: #{_forward_front.8} parent=0 // pred_region
    _
  $region17: #{_forward_front.8} parent=0 // pred_fallthru
    _
  // Predicated region
  $region18: #{_forward_front.8} parent=0 // pred_check
    _
  $region19: #{_forward_front.8} parent=0 // pred_check_branch
    %21 = sbr.rel (0) target = $region21
  $region20: #{_forward_front.8} parent=0 // pred_region
    _
  $region21: #{_forward_front.8} parent=0 // pred_fallthru
    _
  %v23 = vld [vmem:[%s0] sm:$0xff]
  %v24 = vld [vmem:[%s0 + $0x8] sm:$0xff]
  %v25 = vld [vmem:[%s0 + $0x10] sm:$0xff]
  %v26 = vld [vmem:[%s0 + $0x18] sm:$0xff]
  %v27 = vld [vmem:[%s0 + $0x20] sm:$0xf]
  %v28 = vld [vmem:[%s0 + $0x24] sm:$0xff]
  %v29 = vld [vmem:[%s0 + $0x2c] sm:$0xff]
  %v30 = vld [vmem:[%s0 + $0x34] sm:$0xff]
  %v31 = vld [vmem:[%s0 + $0x3c] sm:$0xff]
  %v32 = vld [vmem:[%s0 + $0x44] sm:$0xf]
  %v33 = vld [vmem:[%s0 + $0x48] sm:$0xff]
  %v34 = vld [vmem:[%s0 + $0x50] sm:$0xff]
  %v35 = vld [vmem:[%s0 + $0x58] sm:$0xff]
  %v36 = vld [vmem:[%s0 + $0x60] sm:$0xff]
  %v37 = vld [vmem:[%s0 + $0x68] sm:$0xf]
  %v38 = vld [vmem:[%s0 + $0x6c] sm:$0xff]
  %v39 = vld [vmem:[%s0 + $0x74] sm:$0xff]
  %v40 = vld [vmem:[%s0 + $0x7c] sm:$0xff]
  %v41 = vld [vmem:[%s0 + $0x84] sm:$0xff]
  %v42 = vld [vmem:[%s0 + $0x8c] sm:$0xf]
  %v43 = vld [vmem:[%s1] sm:$0xf]
  %v44 = vld [vmem:[%s1 + $0x4] sm:$0xf]
  %v45 = vld [vmem:[%s1 + $0x8] sm:$0xf]
  %v46 = vld [vmem:[%s1 + $0xc] sm:$0xf]
  %v47 = vld [vmem:[%s1 + $0x10] sm:$0xf]
  %v48 = vld [vmem:[%s1 + $0x14] sm:$0xf]
  %v49 = vld [vmem:[%s1 + $0x18] sm:$0xf]
  %v50 = vld [vmem:[%s1 + $0x1c] sm:$0xf]
  %v51 = vld [vmem:[%s1 + $0x20] sm:$0xf]
  %v52 = vld [vmem:[%s1 + $0x24] sm:$0xf]
  %v53 = vld [vmem:[%s1 + $0x28] sm:$0xf]
  %v54 = vld [vmem:[%s1 + $0x2c] sm:$0xf]
  %v55 = vld [vmem:[%s1 + $0x30] sm:$0xf]
  %v56 = vld [vmem:[%s1 + $0x34] sm:$0xf]
  %v57 = vld [vmem:[%s1 + $0x38] sm:$0xf]
  %v58 = vld [vmem:[%s1 + $0x3c] sm:$0xf]
  %v59 = vld [vmem:[%s1 + $0x40] sm:$0xf]
  %v60 = vld [vmem:[%s1 + $0x44] sm:$0xf]
  %v61 = vld [vmem:[%s1 + $0x48] sm:$0xf]
  %v62 = vld [vmem:[%s1 + $0x4c] sm:$0xf]
  %v63 = vld [vmem:[%s1 + $0x50] sm:$0xf]
  %v64 = vld [vmem:[%s1 + $0x54] sm:$0xf]
  %v65 = vld [vmem:[%s1 + $0x58] sm:$0xf]
  %v66 = vld [vmem:[%s1 + $0x5c] sm:$0xf]
  %v67 = vld [vmem:[%s1 + $0x60] sm:$0xf]
  %v68 = vld [vmem:[%s1 + $0x64] sm:$0xf]
  %v69 = vld [vmem:[%s1 + $0x68] sm:$0xf]
  %v70 = vld [vmem:[%s1 + $0x6c] sm:$0xf]
  %v71 = vld [vmem:[%s1 + $0x70] sm:$0xf]
  %v72 = vld [vmem:[%s1 + $0x74] sm:$0xf]
  %v73 = vld [vmem:[%s1 + $0x78] sm:$0xf]
  %v74 = vld [vmem:[%s1 + $0x7c] sm:$0xf]
  %v75 = vld [vmem:[%s1 + $0x80] sm:$0xf]
  %v76 = vld [vmem:[%s1 + $0x84] sm:$0xf]
  %v77 = vld [vmem:[%s1 + $0x88] sm:$0xf]
  %v78 = vld [vmem:[%s1 + $0x8c] sm:$0xf]
  %v79 = vld [vmem:[%s1 + $0x90] sm:$0xf]
  %v80 = vld [vmem:[%s1 + $0x94] sm:$0xf]
  %v81 = vld [vmem:[%s1 + $0x98] sm:$0xf]
  %v82 = vld [vmem:[%s1 + $0x9c] sm:$0xf]
  %v83 = vld [vmem:[%s1 + $0xa0] sm:$0xf]
  %v84 = vld [vmem:[%s1 + $0xa4] sm:$0xf]
  %v85 = vld [vmem:[%s1 + $0xa8] sm:$0xf]
  %v86 = vld [vmem:[%s1 + $0xac] sm:$0xf]
  %v87 = vld [vmem:[%s1 + $0xb0] sm:$0xf]
  %v88 = vld [vmem:[%s1 + $0xb4] sm:$0xf]
  %v89 = vld [vmem:[%s1 + $0xb8] sm:$0xf]
  %v90 = vld [vmem:[%s1 + $0xbc] sm:$0xf]
  %v91 = vld [vmem:[%s1 + $0xc0] sm:$0xf]
  %v92 = vld [vmem:[%s1 + $0xc4] sm:$0xf]
  %v93 = vld [vmem:[%s1 + $0xc8] sm:$0xf]
  %v94 = vld [vmem:[%s1 + $0xcc] sm:$0xf]
  %v95 = vld [vmem:[%s1 + $0xd0] sm:$0xf]
  %v96 = vld [vmem:[%s1 + $0xd4] sm:$0xf]
  %v97 = vld [vmem:[%s1 + $0xd8] sm:$0xf]
  %v98 = vld [vmem:[%s1 + $0xdc] sm:$0xf]
  %v99 = vld [vmem:[%s1 + $0xe0] sm:$0xf]
  %v100 = vld [vmem:[%s1 + $0xe4] sm:$0xf]
  %v101 = vld [vmem:[%s1 + $0xe8] sm:$0xf]
  %v102 = vld [vmem:[%s1 + $0xec] sm:$0xf]
  %v103 = vld [vmem:[%s1 + $0xf0] sm:$0xf]
  %v104 = vld [vmem:[%s1 + $0xf4] sm:$0xf]
  %v105 = vld [vmem:[%s1 + $0xf8] sm:$0xf]
  %v106 = vld [vmem:[%s1 + $0xfc] sm:$0xf]
  %v107 = vld [vmem:[%s1 + $0x100] sm:$0xf]
  %v108 = vld [vmem:[%s1 + $0x104] sm:$0xf]
  %v109 = vld [vmem:[%s1 + $0x108] sm:$0xf]
  %v110 = vld [vmem:[%s1 + $0x10c] sm:$0xf]
  %v111 = vld [vmem:[%s1 + $0x110] sm:$0xf]
  %v112 = vld [vmem:[%s1 + $0x114] sm:$0xf]
  %v113 = vld [vmem:[%s1 + $0x118] sm:$0xf]
  %v114 = vld [vmem:[%s1 + $0x11c] sm:$0xf]
  %v115 = vld [vmem:[%s1 + $0x120] sm:$0xf]
  %v116 = vld [vmem:[%s1 + $0x124] sm:$0xf]
  %v117 = vld [vmem:[%s1 + $0x128] sm:$0xf]
  %v118 = vld [vmem:[%s1 + $0x12c] sm:$0xf]
  %v119 = vld [vmem:[%s1 + $0x130] sm:$0xf]
  %v120 = vld [vmem:[%s1 + $0x134] sm:$0xf]
  %v121 = vld [vmem:[%s1 + $0x138] sm:$0xf]
  %v122 = vld [vmem:[%s1 + $0x13c] sm:$0xf]
  %v123 = vld [vmem:[%s1 + $0x140] sm:$0xf]
  %v124 = vld [vmem:[%s1 + $0x144] sm:$0xf]
  %v125 = vld [vmem:[%s1 + $0x148] sm:$0xf]
  %v126 = vld [vmem:[%s1 + $0x14c] sm:$0xf]
  %v127 = vld [vmem:[%s1 + $0x150] sm:$0xf]
  %v128 = vld [vmem:[%s1 + $0x154] sm:$0xf]
  %v129 = vld [vmem:[%s1 + $0x158] sm:$0xf]
  %v130 = vld [vmem:[%s1 + $0x15c] sm:$0xf]
  %v131 = vld [vmem:[%s1 + $0x160] sm:$0xf]
  %v132 = vld [vmem:[%s1 + $0x164] sm:$0xf]
  %v133 = vld [vmem:[%s1 + $0x168] sm:$0xf]
  %v134 = vld [vmem:[%s1 + $0x16c] sm:$0xf]
  %v135 = vld [vmem:[%s1 + $0x170] sm:$0xf]
  %v136 = vld [vmem:[%s1 + $0x174] sm:$0xf]
  %v137 = vld [vmem:[%s1 + $0x178] sm:$0xf]
  %v138 = vld [vmem:[%s1 + $0x17c] sm:$0xf]
  %v139 = vld [vmem:[%s1 + $0x180] sm:$0xf]
  %v140 = vld [vmem:[%s1 + $0x184] sm:$0xf]
  %v141 = vld [vmem:[%s1 + $0x188] sm:$0xf]
  %v142 = vld [vmem:[%s1 + $0x18c] sm:$0xf]
  %v143 = vld [vmem:[%s1 + $0x190] sm:$0xf]
  %v144 = vld [vmem:[%s1 + $0x194] sm:$0xf]
  %v145 = vld [vmem:[%s1 + $0x198] sm:$0xf]
  %v146 = vld [vmem:[%s1 + $0x19c] sm:$0xf]
  %v147 = vld [vmem:[%s1 + $0x1a0] sm:$0xf]
  %v148 = vld [vmem:[%s1 + $0x1a4] sm:$0xf]
  %v149 = vld [vmem:[%s1 + $0x1a8] sm:$0xf]
  %v150 = vld [vmem:[%s1 + $0x1ac] sm:$0xf]
  %v151 = vld [vmem:[%s1 + $0x1b0] sm:$0xf]
  %v152 = vld [vmem:[%s1 + $0x1b4] sm:$0xf]
  %v153 = vld [vmem:[%s1 + $0x1b8] sm:$0xf]
  %v154 = vld [vmem:[%s1 + $0x1bc] sm:$0xf]
  %v155 = vld [vmem:[%s1 + $0x1c0] sm:$0xf]
  %v156 = vld [vmem:[%s1 + $0x1c4] sm:$0xf]
  %v157 = vld [vmem:[%s1 + $0x1c8] sm:$0xf]
  %v158 = vld [vmem:[%s1 + $0x1cc] sm:$0xf]
  %v159 = vld [vmem:[%s1 + $0x1d0] sm:$0xf]
  %v160 = vld [vmem:[%s1 + $0x1d4] sm:$0xf]
  %v161 = vld [vmem:[%s1 + $0x1d8] sm:$0xf]
  %v162 = vld [vmem:[%s1 + $0x1dc] sm:$0xf]
  %v163 = vld [vmem:[%s1 + $0x1e0] sm:$0xf]
  %v164 = vld [vmem:[%s1 + $0x1e4] sm:$0xf]
  %v165 = vld [vmem:[%s1 + $0x1e8] sm:$0xf]
  %v166 = vld [vmem:[%s1 + $0x1ec] sm:$0xf]
  %v167 = vld [vmem:[%s1 + $0x1f0] sm:$0xf]
  %v168 = vld [vmem:[%s1 + $0x1f4] sm:$0xf]
  %v169 = vld [vmem:[%s1 + $0x1f8] sm:$0xf]
  %v170 = vld [vmem:[%s1 + $0x1fc] sm:$0xf]
  %v171 = vld [vmem:[%s1 + $0x200] sm:$0xf]
  %v172 = vld [vmem:[%s1 + $0x204] sm:$0xf]
  %v173 = vld [vmem:[%s1 + $0x208] sm:$0xf]
  %v174 = vld [vmem:[%s1 + $0x20c] sm:$0xf]
  %v175 = vld [vmem:[%s1 + $0x210] sm:$0xf]
  %v176 = vld [vmem:[%s1 + $0x214] sm:$0xf]
  %v177 = vld [vmem:[%s1 + $0x218] sm:$0xf]
  %v178 = vld [vmem:[%s1 + $0x21c] sm:$0xf]
  %v179 = vld [vmem:[%s1 + $0x220] sm:$0xf]
  %v180 = vld [vmem:[%s1 + $0x224] sm:$0xf]
  %v181 = vld [vmem:[%s1 + $0x228] sm:$0xf]
  %v182 = vld [vmem:[%s1 + $0x22c] sm:$0xf]
  %v183 = vld [vmem:[%s1 + $0x230] sm:$0xf]
  %v184 = vld [vmem:[%s1 + $0x234] sm:$0xf]
  %v185 = vld [vmem:[%s1 + $0x238] sm:$0xf]
  %v186 = vld [vmem:[%s1 + $0x23c] sm:$0xf]
  %v187 = vld [vmem:[%s2] sm:$0x1]
  %v189 = vlaneseq
  %v190 = vshrl.u32 %v189, 7
  %v191 = vsub.s32 0, %v190
  %v192 = vrot.slane %v187, %v191
  %v214 = vunpack.c.l.b16 %v23
  %v215 = vunpack.c.h.b16 %v23
  %v216 = vunpack.c.l.b16 %v24
  %v217 = vunpack.c.h.b16 %v24
  %v218 = vunpack.c.l.b16 %v25
  %v219 = vunpack.c.h.b16 %v25
  %v220 = vunpack.c.l.b16 %v26
  %v221 = vunpack.c.h.b16 %v26
  %v222 = vunpack.c.l.b16 %v27
  %v223 = vunpack.c.l.b16 %v28
  %v224 = vunpack.c.h.b16 %v28
  %v225 = vunpack.c.l.b16 %v29
  %v226 = vunpack.c.h.b16 %v29
  %v227 = vunpack.c.l.b16 %v30
  %v228 = vunpack.c.h.b16 %v30
  %v229 = vunpack.c.l.b16 %v31
  %v230 = vunpack.c.h.b16 %v31
  %v231 = vunpack.c.l.b16 %v32
  %v232 = vunpack.c.l.b16 %v33
  %v233 = vunpack.c.h.b16 %v33
  %v234 = vunpack.c.l.b16 %v34
  %v235 = vunpack.c.h.b16 %v34
  %v236 = vunpack.c.l.b16 %v35
  %v237 = vunpack.c.h.b16 %v35
  %v238 = vunpack.c.l.b16 %v36
  %v239 = vunpack.c.h.b16 %v36
  %v240 = vunpack.c.l.b16 %v37
  %v241 = vunpack.c.l.b16 %v38
  %v242 = vunpack.c.h.b16 %v38
  %v243 = vunpack.c.l.b16 %v39
  %v244 = vunpack.c.h.b16 %v39
  %v245 = vunpack.c.l.b16 %v40
  %v246 = vunpack.c.h.b16 %v40
  %v247 = vunpack.c.l.b16 %v41
  %v248 = vunpack.c.h.b16 %v41
  %v249 = vunpack.c.l.b16 %v42
  %v250 = vpack.c.b16 %v223, %v214
  %v251 = vpack.c.b16 %v224, %v215
  %v252 = vpack.c.b16 %v225, %v216
  %v253 = vpack.c.b16 %v226, %v217
  %v254 = vpack.c.b16 %v227, %v218
  %v255 = vpack.c.b16 %v228, %v219
  %v256 = vpack.c.b16 %v229, %v220
  %v257 = vpack.c.b16 %v230, %v221
  %v258 = vpack.c.b16 %v231, %v222
  %v259 = vpack.c.b16 %v241, %v232
  %v260 = vpack.c.b16 %v242, %v233
  %v261 = vpack.c.b16 %v243, %v234
  %v262 = vpack.c.b16 %v244, %v235
  %v263 = vpack.c.b16 %v245, %v236
  %v264 = vpack.c.b16 %v246, %v237
  %v265 = vpack.c.b16 %v247, %v238
  %v266 = vpack.c.b16 %v248, %v239
  %v267 = vpack.c.b16 %v249, %v240
  %v430 = vunpack.c.l.b16 %v43
  %v431 = vunpack.c.l.b16 %v44
  %v432 = vunpack.c.l.b16 %v45
  %v433 = vunpack.c.l.b16 %v46
  %v434 = vunpack.c.l.b16 %v47
  %v435 = vunpack.c.l.b16 %v48
  %v436 = vunpack.c.l.b16 %v49
  %v437 = vunpack.c.l.b16 %v50
  %v438 = vunpack.c.l.b16 %v51
  %v439 = vunpack.c.l.b16 %v52
  %v440 = vunpack.c.l.b16 %v53
  %v441 = vunpack.c.l.b16 %v54
  %v442 = vunpack.c.l.b16 %v55
  %v443 = vunpack.c.l.b16 %v56
  %v444 = vunpack.c.l.b16 %v57
  %v445 = vunpack.c.l.b16 %v58
  %v446 = vunpack.c.l.b16 %v59
  %v447 = vunpack.c.l.b16 %v60
  %v448 = vunpack.c.l.b16 %v61
  %v449 = vunpack.c.l.b16 %v62
  %v450 = vunpack.c.l.b16 %v63
  %v451 = vunpack.c.l.b16 %v64
  %v452 = vunpack.c.l.b16 %v65
  %v453 = vunpack.c.l.b16 %v66
  %v454 = vunpack.c.l.b16 %v67
  %v455 = vunpack.c.l.b16 %v68
  %v456 = vunpack.c.l.b16 %v69
  %v457 = vunpack.c.l.b16 %v70
  %v458 = vunpack.c.l.b16 %v71
  %v459 = vunpack.c.l.b16 %v72
  %v460 = vunpack.c.l.b16 %v73
  %v461 = vunpack.c.l.b16 %v74
  %v462 = vunpack.c.l.b16 %v75
  %v463 = vunpack.c.l.b16 %v76
  %v464 = vunpack.c.l.b16 %v77
  %v465 = vunpack.c.l.b16 %v78
  %v466 = vunpack.c.l.b16 %v79
  %v467 = vunpack.c.l.b16 %v80
  %v468 = vunpack.c.l.b16 %v81
  %v469 = vunpack.c.l.b16 %v82
  %v470 = vunpack.c.l.b16 %v83
  %v471 = vunpack.c.l.b16 %v84
  %v472 = vunpack.c.l.b16 %v85
  %v473 = vunpack.c.l.b16 %v86
  %v474 = vunpack.c.l.b16 %v87
  %v475 = vunpack.c.l.b16 %v88
  %v476 = vunpack.c.l.b16 %v89
  %v477 = vunpack.c.l.b16 %v90
  %v478 = vunpack.c.l.b16 %v91
  %v479 = vunpack.c.l.b16 %v92
  %v480 = vunpack.c.l.b16 %v93
  %v481 = vunpack.c.l.b16 %v94
  %v482 = vunpack.c.l.b16 %v95
  %v483 = vunpack.c.l.b16 %v96
  %v484 = vunpack.c.l.b16 %v97
  %v485 = vunpack.c.l.b16 %v98
  %v486 = vunpack.c.l.b16 %v99
  %v487 = vunpack.c.l.b16 %v100
  %v488 = vunpack.c.l.b16 %v101
  %v489 = vunpack.c.l.b16 %v102
  %v490 = vunpack.c.l.b16 %v103
  %v491 = vunpack.c.l.b16 %v104
  %v492 = vunpack.c.l.b16 %v105
  %v493 = vunpack.c.l.b16 %v106
  %v494 = vunpack.c.l.b16 %v107
  %v495 = vunpack.c.l.b16 %v108
  %v496 = vunpack.c.l.b16 %v109
  %v497 = vunpack.c.l.b16 %v110
  %v498 = vunpack.c.l.b16 %v111
  %v499 = vunpack.c.l.b16 %v112
  %v500 = vunpack.c.l.b16 %v113
  %v501 = vunpack.c.l.b16 %v114
  %v502 = vunpack.c.l.b16 %v115
  %v503 = vunpack.c.l.b16 %v116
  %v504 = vunpack.c.l.b16 %v117
  %v505 = vunpack.c.l.b16 %v118
  %v506 = vunpack.c.l.b16 %v119
  %v507 = vunpack.c.l.b16 %v120
  %v508 = vunpack.c.l.b16 %v121
  %v509 = vunpack.c.l.b16 %v122
  %v510 = vunpack.c.l.b16 %v123
  %v511 = vunpack.c.l.b16 %v124
  %v512 = vunpack.c.l.b16 %v125
  %v513 = vunpack.c.l.b16 %v126
  %v514 = vunpack.c.l.b16 %v127
  %v515 = vunpack.c.l.b16 %v128
  %v516 = vunpack.c.l.b16 %v129
  %v517 = vunpack.c.l.b16 %v130
  %v518 = vunpack.c.l.b16 %v131
  %v519 = vunpack.c.l.b16 %v132
  %v520 = vunpack.c.l.b16 %v133
  %v521 = vunpack.c.l.b16 %v134
  %v522 = vunpack.c.l.b16 %v135
  %v523 = vunpack.c.l.b16 %v136
  %v524 = vunpack.c.l.b16 %v137
  %v525 = vunpack.c.l.b16 %v138
  %v526 = vunpack.c.l.b16 %v139
  %v527 = vunpack.c.l.b16 %v140
  %v528 = vunpack.c.l.b16 %v141
  %v529 = vunpack.c.l.b16 %v142
  %v530 = vunpack.c.l.b16 %v143
  %v531 = vunpack.c.l.b16 %v144
  %v532 = vunpack.c.l.b16 %v145
  %v533 = vunpack.c.l.b16 %v146
  %v534 = vunpack.c.l.b16 %v147
  %v535 = vunpack.c.l.b16 %v148
  %v536 = vunpack.c.l.b16 %v149
  %v537 = vunpack.c.l.b16 %v150
  %v538 = vunpack.c.l.b16 %v151
  %v539 = vunpack.c.l.b16 %v152
  %v540 = vunpack.c.l.b16 %v153
  %v541 = vunpack.c.l.b16 %v154
  %v542 = vunpack.c.l.b16 %v155
  %v543 = vunpack.c.l.b16 %v156
  %v544 = vunpack.c.l.b16 %v157
  %v545 = vunpack.c.l.b16 %v158
  %v546 = vunpack.c.l.b16 %v159
  %v547 = vunpack.c.l.b16 %v160
  %v548 = vunpack.c.l.b16 %v161
  %v549 = vunpack.c.l.b16 %v162
  %v550 = vunpack.c.l.b16 %v163
  %v551 = vunpack.c.l.b16 %v164
  %v552 = vunpack.c.l.b16 %v165
  %v553 = vunpack.c.l.b16 %v166
  %v554 = vunpack.c.l.b16 %v167
  %v555 = vunpack.c.l.b16 %v168
  %v556 = vunpack.c.l.b16 %v169
  %v557 = vunpack.c.l.b16 %v170
  %v558 = vunpack.c.l.b16 %v171
  %v559 = vunpack.c.l.b16 %v172
  %v560 = vunpack.c.l.b16 %v173
  %v561 = vunpack.c.l.b16 %v174
  %v562 = vunpack.c.l.b16 %v175
  %v563 = vunpack.c.l.b16 %v176
  %v564 = vunpack.c.l.b16 %v177
  %v565 = vunpack.c.l.b16 %v178
  %v566 = vunpack.c.l.b16 %v179
  %v567 = vunpack.c.l.b16 %v180
  %v568 = vunpack.c.l.b16 %v181
  %v569 = vunpack.c.l.b16 %v182
  %v570 = vunpack.c.l.b16 %v183
  %v571 = vunpack.c.l.b16 %v184
  %v572 = vunpack.c.l.b16 %v185
  %v573 = vunpack.c.l.b16 %v186
  %v574 = vpack.c.b16 %v431, %v430
  %v575 = vpack.c.b16 %v433, %v432
  %v576 = vpack.c.b16 %v435, %v434
  %v577 = vpack.c.b16 %v437, %v436
  %v578 = vpack.c.b16 %v439, %v438
  %v579 = vpack.c.b16 %v441, %v440
  %v580 = vpack.c.b16 %v443, %v442
  %v581 = vpack.c.b16 %v445, %v444
  %v582 = vpack.c.b16 %v447, %v446
  %v583 = vpack.c.b16 %v449, %v448
  %v584 = vpack.c.b16 %v451, %v450
  %v585 = vpack.c.b16 %v453, %v452
  %v586 = vpack.c.b16 %v455, %v454
  %v587 = vpack.c.b16 %v457, %v456
  %v588 = vpack.c.b16 %v459, %v458
  %v589 = vpack.c.b16 %v461, %v460
  %v590 = vpack.c.b16 %v463, %v462
  %v591 = vpack.c.b16 %v465, %v464
  %v592 = vpack.c.b16 %v467, %v466
  %v593 = vpack.c.b16 %v469, %v468
  %v594 = vpack.c.b16 %v471, %v470
  %v595 = vpack.c.b16 %v473, %v472
  %v596 = vpack.c.b16 %v475, %v474
  %v597 = vpack.c.b16 %v477, %v476
  %v598 = vpack.c.b16 %v479, %v478
  %v599 = vpack.c.b16 %v481, %v480
  %v600 = vpack.c.b16 %v483, %v482
  %v601 = vpack.c.b16 %v485, %v484
  %v602 = vpack.c.b16 %v487, %v486
  %v603 = vpack.c.b16 %v489, %v488
  %v604 = vpack.c.b16 %v491, %v490
  %v605 = vpack.c.b16 %v493, %v492
  %v606 = vpack.c.b16 %v495, %v494
  %v607 = vpack.c.b16 %v497, %v496
  %v608 = vpack.c.b16 %v499, %v498
  %v609 = vpack.c.b16 %v501, %v500
  %v610 = vpack.c.b16 %v503, %v502
  %v611 = vpack.c.b16 %v505, %v504
  %v612 = vpack.c.b16 %v507, %v506
  %v613 = vpack.c.b16 %v509, %v508
  %v614 = vpack.c.b16 %v511, %v510
  %v615 = vpack.c.b16 %v513, %v512
  %v616 = vpack.c.b16 %v515, %v514
  %v617 = vpack.c.b16 %v517, %v516
  %v618 = vpack.c.b16 %v519, %v518
  %v619 = vpack.c.b16 %v521, %v520
  %v620 = vpack.c.b16 %v523, %v522
  %v621 = vpack.c.b16 %v525, %v524
  %v622 = vpack.c.b16 %v527, %v526
  %v623 = vpack.c.b16 %v529, %v528
  %v624 = vpack.c.b16 %v531, %v530
  %v625 = vpack.c.b16 %v533, %v532
  %v626 = vpack.c.b16 %v535, %v534
  %v627 = vpack.c.b16 %v537, %v536
  %v628 = vpack.c.b16 %v539, %v538
  %v629 = vpack.c.b16 %v541, %v540
  %v630 = vpack.c.b16 %v543, %v542
  %v631 = vpack.c.b16 %v545, %v544
  %v632 = vpack.c.b16 %v547, %v546
  %v633 = vpack.c.b16 %v549, %v548
  %v634 = vpack.c.b16 %v551, %v550
  %v635 = vpack.c.b16 %v553, %v552
  %v636 = vpack.c.b16 %v555, %v554
  %v637 = vpack.c.b16 %v557, %v556
  %v638 = vpack.c.b16 %v559, %v558
  %v639 = vpack.c.b16 %v561, %v560
  %v640 = vpack.c.b16 %v563, %v562
  %v641 = vpack.c.b16 %v565, %v564
  %v642 = vpack.c.b16 %v567, %v566
  %v643 = vpack.c.b16 %v569, %v568
  %v644 = vpack.c.b16 %v571, %v570
  %v645 = vpack.c.b16 %v573, %v572
  %718 = vmatprep.subr.bf16.mxu0 0
  %719 = vmatpush1.bf16.msra.mxu0 %v574
  %720 = vmatprep.subr.bf16.mxu0 0
  %721 = vmatpush1.bf16.msra.mxu0 %v575
  %722 = vmatprep.subr.bf16.mxu0 0
  %723 = vmatpush1.bf16.msra.mxu0 %v576
  %724 = vmatprep.subr.bf16.mxu0 0
  %725 = vmatpush1.bf16.msra.mxu0 %v577
  %726 = vmatprep.subr.bf16.mxu0 0
  %727 = vmatpush1.bf16.msra.mxu0 %v578
  %728 = vmatprep.subr.bf16.mxu0 0
  %729 = vmatpush1.bf16.msra.mxu0 %v579
  %730 = vmatprep.subr.bf16.mxu0 0
  %731 = vmatpush1.bf16.msra.mxu0 %v580
  %732 = vmatprep.subr.bf16.mxu0 0
  %733 = vmatpush1.bf16.msra.mxu0 %v581
  %734 = vmatprep.subr.bf16.mxu0 0
  %735 = vmatpush1.bf16.msra.mxu0 %v582
  %736 = vmatprep.subr.bf16.mxu0 0
  %737 = vmatpush1.bf16.msra.mxu0 %v583
  %738 = vmatprep.subr.bf16.mxu0 0
  %739 = vmatpush1.bf16.msra.mxu0 %v584
  %740 = vmatprep.subr.bf16.mxu0 0
  %741 = vmatpush1.bf16.msra.mxu0 %v585
  %742 = vmatprep.subr.bf16.mxu0 0
  %743 = vmatpush1.bf16.msra.mxu0 %v586
  %744 = vmatprep.subr.bf16.mxu0 0
  %745 = vmatpush1.bf16.msra.mxu0 %v587
  %746 = vmatprep.subr.bf16.mxu0 0
  %747 = vmatpush1.bf16.msra.mxu0 %v588
  %748 = vmatprep.subr.bf16.mxu0 0
  %749 = vmatpush1.bf16.msra.mxu0 %v589
  %750 = vmatprep.mubr.bf16.mxu0 %v251
  %751 = vmatmul.mubr.bf16.gmra.mrb[0].mxu0 %v250
  %v752 = vpop.f32.mrb[0].mxu0
  %v753 = vadd.f32 %v192, %v752
  %v754 = vpop.f32.mrb[0].mxu0
  %v755 = vpop.f32.mrb[0].mxu0
  %v756 = vadd.f32 %v192, %v755
  %v757 = vpop.f32.mrb[0].mxu0
  %758 = vmatprep.mubr.bf16.mxu0 %v260
  %759 = vmatmul.mubr.bf16.gmra.mrb[0].mxu0 %v259
  %v760 = vpop.f32.mrb[0].mxu0
  %v761 = vadd.f32 %v192, %v760
  %v762 = vpop.f32.mrb[0].mxu0
  %v763 = vpop.f32.mrb[0].mxu0
  %v764 = vadd.f32 %v192, %v763
  %v765 = vpop.f32.mrb[0].mxu0
  %766 = vdwg.mxu0
  %767 = vmatprep.subr.bf16.mxu0 0
  %768 = vmatpush1.bf16.msra.mxu0 %v590
  %769 = vmatprep.subr.bf16.mxu0 0
  %770 = vmatpush1.bf16.msra.mxu0 %v591
  %771 = vmatprep.subr.bf16.mxu0 0
  %772 = vmatpush1.bf16.msra.mxu0 %v592
  %773 = vmatprep.subr.bf16.mxu0 0
  %774 = vmatpush1.bf16.msra.mxu0 %v593
  %775 = vmatprep.subr.bf16.mxu0 0
  %776 = vmatpush1.bf16.msra.mxu0 %v594
  %777 = vmatprep.subr.bf16.mxu0 0
  %778 = vmatpush1.bf16.msra.mxu0 %v595
  %779 = vmatprep.subr.bf16.mxu0 0
  %780 = vmatpush1.bf16.msra.mxu0 %v596
  %781 = vmatprep.subr.bf16.mxu0 0
  %782 = vmatpush1.bf16.msra.mxu0 %v597
  %783 = vmatprep.subr.bf16.mxu0 0
  %784 = vmatpush1.bf16.msra.mxu0 %v598
  %785 = vmatprep.subr.bf16.mxu0 0
  %786 = vmatpush1.bf16.msra.mxu0 %v599
  %787 = vmatprep.subr.bf16.mxu0 0
  %788 = vmatpush1.bf16.msra.mxu0 %v600
  %789 = vmatprep.subr.bf16.mxu0 0
  %790 = vmatpush1.bf16.msra.mxu0 %v601
  %791 = vmatprep.subr.bf16.mxu0 0
  %792 = vmatpush1.bf16.msra.mxu0 %v602
  %793 = vmatprep.subr.bf16.mxu0 0
  %794 = vmatpush1.bf16.msra.mxu0 %v603
  %795 = vmatprep.subr.bf16.mxu0 0
  %796 = vmatpush1.bf16.msra.mxu0 %v604
  %797 = vmatprep.subr.bf16.mxu0 0
  %798 = vmatpush1.bf16.msra.mxu0 %v605
  %799 = vmatprep.mubr.bf16.mxu0 %v253
  %800 = vmatmul.mubr.bf16.gmra.mrb[0].mxu0 %v252
  %v801 = vpop.f32.mrb[0].mxu0
  %v802 = vadd.f32 %v753, %v801
  %v803 = vpop.f32.mrb[0].mxu0
  %v804 = vpop.f32.mrb[0].mxu0
  %v805 = vadd.f32 %v756, %v804
  %v806 = vpop.f32.mrb[0].mxu0
  %807 = vmatprep.mubr.bf16.mxu0 %v262
  %808 = vmatmul.mubr.bf16.gmra.mrb[0].mxu0 %v261
  %v809 = vpop.f32.mrb[0].mxu0
  %v810 = vadd.f32 %v761, %v809
  %v811 = vpop.f32.mrb[0].mxu0
  %v812 = vpop.f32.mrb[0].mxu0
  %v813 = vadd.f32 %v764, %v812
  %v814 = vpop.f32.mrb[0].mxu0
  %815 = vdwg.mxu0
  %816 = vmatprep.subr.bf16.mxu0 0
  %817 = vmatpush1.bf16.msra.mxu0 %v606
  %818 = vmatprep.subr.bf16.mxu0 0
  %819 = vmatpush1.bf16.msra.mxu0 %v607
  %820 = vmatprep.subr.bf16.mxu0 0
  %821 = vmatpush1.bf16.msra.mxu0 %v608
  %822 = vmatprep.subr.bf16.mxu0 0
  %823 = vmatpush1.bf16.msra.mxu0 %v609
  %824 = vmatprep.subr.bf16.mxu0 0
  %825 = vmatpush1.bf16.msra.mxu0 %v610
  %826 = vmatprep.subr.bf16.mxu0 0
  %827 = vmatpush1.bf16.msra.mxu0 %v611
  %828 = vmatprep.subr.bf16.mxu0 0
  %829 = vmatpush1.bf16.msra.mxu0 %v612
  %830 = vmatprep.subr.bf16.mxu0 0
  %831 = vmatpush1.bf16.msra.mxu0 %v613
  %832 = vmatprep.subr.bf16.mxu0 0
  %833 = vmatpush1.bf16.msra.mxu0 %v614
  %834 = vmatprep.subr.bf16.mxu0 0
  %835 = vmatpush1.bf16.msra.mxu0 %v615
  %836 = vmatprep.subr.bf16.mxu0 0
  %837 = vmatpush1.bf16.msra.mxu0 %v616
  %838 = vmatprep.subr.bf16.mxu0 0
  %839 = vmatpush1.bf16.msra.mxu0 %v617
  %840 = vmatprep.subr.bf16.mxu0 0
  %841 = vmatpush1.bf16.msra.mxu0 %v618
  %842 = vmatprep.subr.bf16.mxu0 0
  %843 = vmatpush1.bf16.msra.mxu0 %v619
  %844 = vmatprep.subr.bf16.mxu0 0
  %845 = vmatpush1.bf16.msra.mxu0 %v620
  %846 = vmatprep.subr.bf16.mxu0 0
  %847 = vmatpush1.bf16.msra.mxu0 %v621
  %848 = vmatprep.mubr.bf16.mxu0 %v255
  %849 = vmatmul.mubr.bf16.gmra.mrb[0].mxu0 %v254
  %v850 = vpop.f32.mrb[0].mxu0
  %v851 = vadd.f32 %v802, %v850
  %v852 = vpop.f32.mrb[0].mxu0
  %v853 = vpop.f32.mrb[0].mxu0
  %v854 = vadd.f32 %v805, %v853
  %v855 = vpop.f32.mrb[0].mxu0
  %856 = vmatprep.mubr.bf16.mxu0 %v264
  %857 = vmatmul.mubr.bf16.gmra.mrb[0].mxu0 %v263
  %v858 = vpop.f32.mrb[0].mxu0
  %v859 = vadd.f32 %v810, %v858
  %v860 = vpop.f32.mrb[0].mxu0
  %v861 = vpop.f32.mrb[0].mxu0
  %v862 = vadd.f32 %v813, %v861
  %v863 = vpop.f32.mrb[0].mxu0
  %864 = vdwg.mxu0
  %865 = vmatprep.subr.bf16.mxu0 0
  %866 = vmatpush1.bf16.msra.mxu0 %v622
  %867 = vmatprep.subr.bf16.mxu0 0
  %868 = vmatpush1.bf16.msra.mxu0 %v623
  %869 = vmatprep.subr.bf16.mxu0 0
  %870 = vmatpush1.bf16.msra.mxu0 %v624
  %871 = vmatprep.subr.bf16.mxu0 0
  %872 = vmatpush1.bf16.msra.mxu0 %v625
  %873 = vmatprep.subr.bf16.mxu0 0
  %874 = vmatpush1.bf16.msra.mxu0 %v626
  %875 = vmatprep.subr.bf16.mxu0 0
  %876 = vmatpush1.bf16.msra.mxu0 %v627
  %877 = vmatprep.subr.bf16.mxu0 0
  %878 = vmatpush1.bf16.msra.mxu0 %v628
  %879 = vmatprep.subr.bf16.mxu0 0
  %880 = vmatpush1.bf16.msra.mxu0 %v629
  %881 = vmatprep.subr.bf16.mxu0 0
  %882 = vmatpush1.bf16.msra.mxu0 %v630
  %883 = vmatprep.subr.bf16.mxu0 0
  %884 = vmatpush1.bf16.msra.mxu0 %v631
  %885 = vmatprep.subr.bf16.mxu0 0
  %886 = vmatpush1.bf16.msra.mxu0 %v632
  %887 = vmatprep.subr.bf16.mxu0 0
  %888 = vmatpush1.bf16.msra.mxu0 %v633
  %889 = vmatprep.subr.bf16.mxu0 0
  %890 = vmatpush1.bf16.msra.mxu0 %v634
  %891 = vmatprep.subr.bf16.mxu0 0
  %892 = vmatpush1.bf16.msra.mxu0 %v635
  %893 = vmatprep.subr.bf16.mxu0 0
  %894 = vmatpush1.bf16.msra.mxu0 %v636
  %895 = vmatprep.subr.bf16.mxu0 0
  %896 = vmatpush1.bf16.msra.mxu0 %v637
  %897 = vmatprep.mubr.bf16.mxu0 %v257
  %898 = vmatmul.mubr.bf16.gmra.mrb[0].mxu0 %v256
  %v899 = vpop.f32.mrb[0].mxu0
  %v900 = vadd.f32 %v851, %v899
  %v901 = vpop.f32.mrb[0].mxu0
  %v902 = vpop.f32.mrb[0].mxu0
  %v903 = vadd.f32 %v854, %v902
  %v904 = vpop.f32.mrb[0].mxu0
  %905 = vmatprep.mubr.bf16.mxu0 %v266
  %906 = vmatmul.mubr.bf16.gmra.mrb[0].mxu0 %v265
  %v907 = vpop.f32.mrb[0].mxu0
  %v908 = vadd.f32 %v859, %v907
  %v909 = vpop.f32.mrb[0].mxu0
  %v910 = vpop.f32.mrb[0].mxu0
  %v911 = vadd.f32 %v862, %v910
  %v912 = vpop.f32.mrb[0].mxu0
  %913 = vdwg.mxu0
  %914 = vmatprep.subr.bf16.mxu0 0
  %915 = vmatpush1.bf16.msra.mxu0 %v638
  %916 = vmatprep.subr.bf16.mxu0 0
  %917 = vmatpush1.bf16.msra.mxu0 %v639
  %918 = vmatprep.subr.bf16.mxu0 0
  %919 = vmatpush1.bf16.msra.mxu0 %v640
  %920 = vmatprep.subr.bf16.mxu0 0
  %921 = vmatpush1.bf16.msra.mxu0 %v641
  %922 = vmatprep.subr.bf16.mxu0 0
  %923 = vmatpush1.bf16.msra.mxu0 %v642
  %924 = vmatprep.subr.bf16.mxu0 0
  %925 = vmatpush1.bf16.msra.mxu0 %v643
  %926 = vmatprep.subr.bf16.mxu0 0
  %927 = vmatpush1.bf16.msra.mxu0 %v644
  %928 = vmatprep.subr.bf16.mxu0 0
  %929 = vmatpush1.bf16.msra.mxu0 %v645
  %930 = vmatprep.subr.bf16.mxu0 0
  %931 = vmatpush1.bf16.msra.mxu0 0
  %932 = vmatprep.subr.bf16.mxu0 0
  %933 = vmatpush1.bf16.msra.mxu0 0
  %934 = vmatprep.subr.bf16.mxu0 0
  %935 = vmatpush1.bf16.msra.mxu0 0
  %936 = vmatprep.subr.bf16.mxu0 0
  %937 = vmatpush1.bf16.msra.mxu0 0
  %938 = vmatprep.subr.bf16.mxu0 0
  %939 = vmatpush1.bf16.msra.mxu0 0
  %940 = vmatprep.subr.bf16.mxu0 0
  %941 = vmatpush1.bf16.msra.mxu0 0
  %942 = vmatprep.subr.bf16.mxu0 0
  %943 = vmatpush1.bf16.msra.mxu0 0
  %944 = vmatprep.subr.bf16.mxu0 0
  %945 = vmatpush1.bf16.msra.mxu0 0
  %946 = vmatprep.mubr.bf16.mxu0 0
  %947 = vmatmul.mubr.bf16.gmra.mrb[0].mxu0 %v258
  %v948 = vpop.f32.mrb[0].mxu0
  %v949 = vadd.f32 %v900, %v948
  %v950 = vpop.f32.mrb[0].mxu0
  %v951 = vpop.f32.mrb[0].mxu0
  %v952 = vadd.f32 %v903, %v951
  %v953 = vpop.f32.mrb[0].mxu0
  %954 = vmatprep.mubr.bf16.mxu0 0
  %955 = vmatmul.mubr.bf16.gmra.mrb[0].mxu0 %v267
  %v956 = vpop.f32.mrb[0].mxu0
  %v957 = vadd.f32 %v908, %v956
  %v958 = vpop.f32.mrb[0].mxu0
  %v959 = vpop.f32.mrb[0].mxu0
  %v960 = vadd.f32 %v911, %v959
  %v961 = vpop.f32.mrb[0].mxu0
  %962 = vdwg.mxu0
  %v963 = vmax.f32 %v949, 0.0
  %v964 = vmax.f32 %v952, 0.0
  %v965 = vmax.f32 %v957, 0.0
  %v966 = vmax.f32 %v960, 0.0
  %v967 = vpack.c.bf16 %v964, %v963
  %v968 = vpack.c.bf16 %v966, %v965
  %v971 = vunpack.c.l.b16 %v967
  %v972 = vunpack.c.h.b16 %v967
  %v973 = vunpack.c.l.b16 %v968
  %v974 = vunpack.c.h.b16 %v968
  %v975 = vpack.c.b16 %v971, %v971
  %v976 = vpack.c.b16 %v972, %v972
  %v977 = vpack.c.b16 %v973, %v973
  %v978 = vpack.c.b16 %v974, %v974
  %983 = vst [vmem:[%s5] sm:$0xf] %v975
  %984 = vst [vmem:[%s5 + $0x4] sm:$0xf] %v976
  %985 = vst [vmem:[%s5 + $0x8] sm:$0xf] %v977
  %986 = vst [vmem:[%s5 + $0xc] sm:$0xf] %v978
  %v987 = vld [vmem:[%s3] sm:$0xf]
  %v988 = vld [vmem:[%s3 + $0x4] sm:$0xf]
  %v989 = vld [vmem:[%s3 + $0x8] sm:$0xf]
  %v990 = vld [vmem:[%s3 + $0xc] sm:$0xf]
  %v991 = vld [vmem:[%s3 + $0x10] sm:$0xf]
  %v992 = vld [vmem:[%s3 + $0x14] sm:$0xf]
  %v993 = vld [vmem:[%s3 + $0x18] sm:$0xf]
  %v994 = vld [vmem:[%s3 + $0x1c] sm:$0xf]
  %v995 = vld [vmem:[%s3 + $0x20] sm:$0xf]
  %v996 = vld [vmem:[%s3 + $0x24] sm:$0xf]
  %v997 = vld [vmem:[%s3 + $0x28] sm:$0xf]
  %v998 = vld [vmem:[%s3 + $0x2c] sm:$0xf]
  %v999 = vld [vmem:[%s3 + $0x30] sm:$0xf]
  %v1000 = vld [vmem:[%s3 + $0x34] sm:$0xf]
  %v1001 = vld [vmem:[%s3 + $0x38] sm:$0xf]
  %v1002 = vld [vmem:[%s3 + $0x3c] sm:$0xf]
  %v1003 = vld [vmem:[%s4] sm:$0x1]
  %v1005 = vlaneseq
  %v1006 = vshrl.u32 %v1005, 7
  %v1007 = vsub.s32 0, %v1006
  %v1008 = vrot.slane %v1003, %v1007
  %v1026 = vunpack.c.l.b16 %v987
  %v1027 = vunpack.c.l.b16 %v988
  %v1028 = vunpack.c.l.b16 %v989
  %v1029 = vunpack.c.l.b16 %v990
  %v1030 = vunpack.c.l.b16 %v991
  %v1031 = vunpack.c.l.b16 %v992
  %v1032 = vunpack.c.l.b16 %v993
  %v1033 = vunpack.c.l.b16 %v994
  %v1034 = vunpack.c.l.b16 %v995
  %v1035 = vunpack.c.l.b16 %v996
  %v1036 = vunpack.c.l.b16 %v997
  %v1037 = vunpack.c.l.b16 %v998
  %v1038 = vunpack.c.l.b16 %v999
  %v1039 = vunpack.c.l.b16 %v1000
  %v1040 = vunpack.c.l.b16 %v1001
  %v1041 = vunpack.c.l.b16 %v1002
  %v1042 = vpack.c.b16 %v1027, %v1026
  %v1043 = vpack.c.b16 %v1029, %v1028
  %v1044 = vpack.c.b16 %v1031, %v1030
  %v1045 = vpack.c.b16 %v1033, %v1032
  %v1046 = vpack.c.b16 %v1035, %v1034
  %v1047 = vpack.c.b16 %v1037, %v1036
  %v1048 = vpack.c.b16 %v1039, %v1038
  %v1049 = vpack.c.b16 %v1041, %v1040
  %1058 = vmatprep.subr.bf16.mxu0 0
  %1059 = vmatpush1.bf16.msra.mxu0 %v1042
  %1060 = vmatprep.subr.bf16.mxu0 0
  %1061 = vmatpush1.bf16.msra.mxu0 %v1043
  %1062 = vmatprep.subr.bf16.mxu0 0
  %1063 = vmatpush1.bf16.msra.mxu0 %v1044
  %1064 = vmatprep.subr.bf16.mxu0 0
  %1065 = vmatpush1.bf16.msra.mxu0 %v1045
  %1066 = vmatprep.subr.bf16.mxu0 0
  %1067 = vmatpush1.bf16.msra.mxu0 %v1046
  %1068 = vmatprep.subr.bf16.mxu0 0
  %1069 = vmatpush1.bf16.msra.mxu0 %v1047
  %1070 = vmatprep.subr.bf16.mxu0 0
  %1071 = vmatpush1.bf16.msra.mxu0 %v1048
  %1072 = vmatprep.subr.bf16.mxu0 0
  %1073 = vmatpush1.bf16.msra.mxu0 %v1049
  %1074 = vmatprep.subr.bf16.mxu0 0
  %1075 = vmatpush1.bf16.msra.mxu0 0
  %1076 = vmatprep.subr.bf16.mxu0 0
  %1077 = vmatpush1.bf16.msra.mxu0 0
  %1078 = vmatprep.subr.bf16.mxu0 0
  %1079 = vmatpush1.bf16.msra.mxu0 0
  %1080 = vmatprep.subr.bf16.mxu0 0
  %1081 = vmatpush1.bf16.msra.mxu0 0
  %1082 = vmatprep.subr.bf16.mxu0 0
  %1083 = vmatpush1.bf16.msra.mxu0 0
  %1084 = vmatprep.subr.bf16.mxu0 0
  %1085 = vmatpush1.bf16.msra.mxu0 0
  %1086 = vmatprep.subr.bf16.mxu0 0
  %1087 = vmatpush1.bf16.msra.mxu0 0
  %1088 = vmatprep.subr.bf16.mxu0 0
  %1089 = vmatpush1.bf16.msra.mxu0 0
  %1090 = vmatprep.mubr.bf16.mxu0 0
  %1091 = vmatmul.mubr.bf16.gmra.mrb[0].mxu0 %v967
  %v1092 = vpop.f32.mrb[0].mxu0
  %v1093 = vadd.f32 %v1008, %v1092
  %v1094 = vpop.f32.mrb[0].mxu0
  %v1095 = vpop.f32.mrb[0].mxu0
  %v1096 = vadd.f32 %v1008, %v1095
  %v1097 = vpop.f32.mrb[0].mxu0
  %1098 = vmatprep.mubr.bf16.mxu0 0
  %1099 = vmatmul.mubr.bf16.gmra.mrb[0].mxu0 %v968
  %v1100 = vpop.f32.mrb[0].mxu0
  %v1101 = vadd.f32 %v1008, %v1100
  %v1102 = vpop.f32.mrb[0].mxu0
  %v1103 = vpop.f32.mrb[0].mxu0
  %v1104 = vadd.f32 %v1008, %v1103
  %v1105 = vpop.f32.mrb[0].mxu0
  %1106 = vdwg.mxu0
  %1107 = vst [vmem:[%s6] sm:$0xff] %v1093
  %1108 = vst [vmem:[%s6 + $0x8] sm:$0xff] %v1096
  %1109 = vst [vmem:[%s6 + $0x10] sm:$0xff] %v1101
  %1110 = vst [vmem:[%s6 + $0x18] sm:$0xff] %v1104
  // Predicated region
  $region22: #{_forward_front.8} parent=0 // pred_check
    _
  $region23: #{_forward_front.8} parent=0 // pred_check_branch
    %1112 = sbr.rel (0) target = $region25
  $region24: #{_forward_front.8} parent=0 // pred_region
    _
  $region25: #{_forward_front.8} parent=0 // pred_fallthru
    _
  // Predicated region
  $region26: #{_forward_front.8} parent=0 // pred_check
    _
  $region27: #{_forward_front.8} parent=0 // pred_check_branch
    %1114 = sbr.rel (0) target = $region29
  $region28: #{_forward_front.8} parent=0 // pred_region
    _
  $region29: #{_forward_front.8} parent=0 // pred_fallthru
    _
  // Predicated region
  $region30: #{_forward_front.8} parent=0 // pred_check
    _
  $region31: #{_forward_front.8} parent=0 // pred_check_branch
    %1116 = sbr.rel (0) target = $region33
  $region32: #{_forward_front.8} parent=0 // pred_region
    _
  $region33: #{_forward_front.8} parent=0 // pred_fallthru
    _
  // Predicated region
  $region34: #{_forward_front.8} parent=0 // pred_check
    _
  $region35: #{_forward_front.8} parent=0 // pred_check_branch
    %1118 = sbr.rel (0) target = $region37
  $region36: #{_forward_front.8} parent=0 // pred_region
    _
  $region37: #{_forward_front.8} parent=0 // pred_fallthru
    _

// kernel: _forward_front.6
$region0: #{_forward_front.6}
  #allocation0 [shape = 'u32[]', space=smem, size = 0x4, offset = 0x4, fixed_abs, tag = 'smem constant byte address 0x4 - core index']
  #allocation1 [shape = 'u32[144,128]{1,0:T(1,128)}', space=vmem, size = 0x12000, scoped, tag = 'internal scratch']
  %s0 = inlined_call_operand.vmem [shape: f32[2,64,128], index: 0, kind: input, shape index: {}]
  %s1 = inlined_call_operand.vmem [shape: bf16[128,128], index: 1, kind: input, shape index: {}]
  %s2 = inlined_call_operand.vmem [shape: f32[1,128], index: 2, kind: input, shape index: {}]
  %s3 = inlined_call_operand.hbm [shape: f32[2,128], index: 3, kind: output, shape index: {0}]
  %s4 = inlined_call_operand.hbm [shape: f32[2,128], index: 4, kind: output, shape index: {1}]
  %5 = xla_tuple %s3, %s4
  %s6 = sld [smem:[#allocation0]]
  $region30: #{_forward_front.6} parent=0
    _
  %s8 = ssub.s32 1, %s6
  %s9 = scalar_select 0, %s8, %s6
  $region1: #{_forward_front.6} parent=0
    #allocation2 [shape = 'u8[1024]{0}', space=vmem, size = 0x400, scoped, tag = 'output window, operand 0, single buffered']
    #allocation3 [shape = 's32[1]{0}', space=sflag, size = 0x4, scoped, tag = 'scoped memory for _forward_front.6']
    #allocation4 [shape = 'u8[1024]{0}', space=vmem, size = 0x400, scoped, tag = 'output window, operand 1, single buffered']
    #allocation5 [shape = 's32[1]{0}', space=sflag, size = 0x4, scoped, tag = 'scoped memory for _forward_front.6']
    %10 = vsyncpa [#allocation3], 0
    %11 = vsyncpa [#allocation5], 0
    // Predicated region
    $region2: #{_forward_front.6} parent=1 // pred_check
      _
    $region3: #{_forward_front.6} parent=1 // pred_check_branch
      %13 = sbr.rel (0) target = $region5
    $region4: #{_forward_front.6} parent=1 // pred_region
      _
    $region5: #{_forward_front.6} parent=1 // pred_fallthru
      _
    // Predicated region
    $region6: #{_forward_front.6} parent=1 // pred_check
      _
    $region7: #{_forward_front.6} parent=1 // pred_check_branch
      %15 = sbr.rel (0) target = $region9
    $region8: #{_forward_front.6} parent=1 // pred_region
      _
    $region9: #{_forward_front.6} parent=1 // pred_fallthru
      _
    // Predicated region
    $region10: #{_forward_front.6} parent=1 // pred_check
      _
    $region11: #{_forward_front.6} parent=1 // pred_check_branch
      %17 = sbr.rel (0) target = $region13
    $region12: #{_forward_front.6} parent=1 // pred_region
      _
    $region13: #{_forward_front.6} parent=1 // pred_fallthru
      _
    %v19 = vld [vmem:[%s0] sm:$0xff]
    %v20 = vld [vmem:[%s0 + $0x8] sm:$0xff]
    %v21 = vld [vmem:[%s0 + $0x10] sm:$0xff]
    %v22 = vld [vmem:[%s0 + $0x18] sm:$0xff]
    %v23 = vld [vmem:[%s0 + $0x20] sm:$0xff]
    %v24 = vld [vmem:[%s0 + $0x28] sm:$0xff]
    %v25 = vld [vmem:[%s0 + $0x30] sm:$0xff]
    %v26 = vld [vmem:[%s0 + $0x38] sm:$0xff]
    %v27 = vld [vmem:[%s0 + $0x40] sm:$0xff]
    %v28 = vld [vmem:[%s0 + $0x48] sm:$0xff]
    %v29 = vld [vmem:[%s0 + $0x50] sm:$0xff]
    %v30 = vld [vmem:[%s0 + $0x58] sm:$0xff]
    %v31 = vld [vmem:[%s0 + $0x60] sm:$0xff]
    %v32 = vld [vmem:[%s0 + $0x68] sm:$0xff]
    %v33 = vld [vmem:[%s0 + $0x70] sm:$0xff]
    %v34 = vld [vmem:[%s0 + $0x78] sm:$0xff]
    %v35 = vadd.f32 %v19, %v20
    %v36 = vadd.f32 %v35, %v21
    %v37 = vadd.f32 %v36, %v22
    %v38 = vadd.f32 %v37, %v23
    %v39 = vadd.f32 %v38, %v24
    %v40 = vadd.f32 %v39, %v25
    %v41 = vadd.f32 %v40, %v26
    %v42 = vrot.slane %v41, 4
    %v43 = vadd.f32 %v41, %v42
    %v44 = vrot.slane %v43, 2
    %v45 = vadd.f32 %v43, %v44
    %v46 = vrot.slane %v45, 1
    %v47 = vadd.f32 %v45, %v46
    %v48 = vadd.f32 %v27, %v28
    %v49 = vadd.f32 %v48, %v29
    %v50 = vadd.f32 %v49, %v30
    %v51 = vadd.f32 %v50, %v31
    %v52 = vadd.f32 %v51, %v32
    %v53 = vadd.f32 %v52, %v33
    %v54 = vadd.f32 %v53, %v34
    %v55 = vrot.slane %v54, 4
    %v56 = vadd.f32 %v54, %v55
    %v57 = vrot.slane %v56, 2
    %v58 = vadd.f32 %v56, %v57
    %v59 = vrot.slane %v58, 1
    %v60 = vadd.f32 %v58, %v59
    %v61 = vrcp.pop 64.0
    %v62 = vmul.f32 %v47, %v61
    %v63 = vmul.f32 %v60, %v61
    %vm66 = vcmask 1041409
    %v67 = vsel %vm66, %v63, %v62
    %69 = vst [vmem:[#allocation2] sm:$0x3] %v67
    %v70 = vpack.c.bf16 %v62, %v62
    %v71 = vpack.c.bf16 %v63, %v63
    %v72 = vld [vmem:[%s1] sm:$0xf]
    %v73 = vld [vmem:[%s1 + $0x4] sm:$0xf]
    %v74 = vld [vmem:[%s1 + $0x8] sm:$0xf]
    %v75 = vld [vmem:[%s1 + $0xc] sm:$0xf]
    %v76 = vld [vmem:[%s1 + $0x10] sm:$0xf]
    %v77 = vld [vmem:[%s1 + $0x14] sm:$0xf]
    %v78 = vld [vmem:[%s1 + $0x18] sm:$0xf]
    %v79 = vld [vmem:[%s1 + $0x1c] sm:$0xf]
    %v80 = vld [vmem:[%s1 + $0x20] sm:$0xf]
    %v81 = vld [vmem:[%s1 + $0x24] sm:$0xf]
    %v82 = vld [vmem:[%s1 + $0x28] sm:$0xf]
    %v83 = vld [vmem:[%s1 + $0x2c] sm:$0xf]
    %v84 = vld [vmem:[%s1 + $0x30] sm:$0xf]
    %v85 = vld [vmem:[%s1 + $0x34] sm:$0xf]
    %v86 = vld [vmem:[%s1 + $0x38] sm:$0xf]
    %v87 = vld [vmem:[%s1 + $0x3c] sm:$0xf]
    %v88 = vld [vmem:[%s2] sm:$0x1]
    %v90 = vlaneseq
    %v91 = vshrl.u32 %v90, 7
    %v92 = vsub.s32 0, %v91
    %v93 = vrot.slane %v88, %v92
    %v97 = vunpack.c.l.b16 %v70
    %v98 = vunpack.c.l.b16 %v71
    %v99 = vsel %vm66, %v98, %v97
    %v100 = vpack.c.b16 %v99, %v99
    %v118 = vunpack.c.l.b16 %v72
    %v119 = vunpack.c.l.b16 %v73
    %v120 = vunpack.c.l.b16 %v74
    %v121 = vunpack.c.l.b16 %v75
    %v122 = vunpack.c.l.b16 %v76
    %v123 = vunpack.c.l.b16 %v77
    %v124 = vunpack.c.l.b16 %v78
    %v125 = vunpack.c.l.b16 %v79
    %v126 = vunpack.c.l.b16 %v80
    %v127 = vunpack.c.l.b16 %v81
    %v128 = vunpack.c.l.b16 %v82
    %v129 = vunpack.c.l.b16 %v83
    %v130 = vunpack.c.l.b16 %v84
    %v131 = vunpack.c.l.b16 %v85
    %v132 = vunpack.c.l.b16 %v86
    %v133 = vunpack.c.l.b16 %v87
    %v134 = vpack.c.b16 %v119, %v118
    %v135 = vpack.c.b16 %v121, %v120
    %v136 = vpack.c.b16 %v123, %v122
    %v137 = vpack.c.b16 %v125, %v124
    %v138 = vpack.c.b16 %v127, %v126
    %v139 = vpack.c.b16 %v129, %v128
    %v140 = vpack.c.b16 %v131, %v130
    %v141 = vpack.c.b16 %v133, %v132
    %150 = vmatprep.subr.bf16.mxu0 0
    %151 = vmatpush1.bf16.msra.mxu0 %v134
    %152 = vmatprep.subr.bf16.mxu0 0
    %153 = vmatpush1.bf16.msra.mxu0 %v135
    %154 = vmatprep.subr.bf16.mxu0 0
    %155 = vmatpush1.bf16.msra.mxu0 %v136
    %156 = vmatprep.subr.bf16.mxu0 0
    %157 = vmatpush1.bf16.msra.mxu0 %v137
    %158 = vmatprep.subr.bf16.mxu0 0
    %159 = vmatpush1.bf16.msra.mxu0 %v138
    %160 = vmatprep.subr.bf16.mxu0 0
    %161 = vmatpush1.bf16.msra.mxu0 %v139
    %162 = vmatprep.subr.bf16.mxu0 0
    %163 = vmatpush1.bf16.msra.mxu0 %v140
    %164 = vmatprep.subr.bf16.mxu0 0
    %165 = vmatpush1.bf16.msra.mxu0 %v141
    %166 = vmatprep.subr.bf16.mxu0 0
    %167 = vmatpush1.bf16.msra.mxu0 0
    %168 = vmatprep.subr.bf16.mxu0 0
    %169 = vmatpush1.bf16.msra.mxu0 0
    %170 = vmatprep.subr.bf16.mxu0 0
    %171 = vmatpush1.bf16.msra.mxu0 0
    %172 = vmatprep.subr.bf16.mxu0 0
    %173 = vmatpush1.bf16.msra.mxu0 0
    %174 = vmatprep.subr.bf16.mxu0 0
    %175 = vmatpush1.bf16.msra.mxu0 0
    %176 = vmatprep.subr.bf16.mxu0 0
    %177 = vmatpush1.bf16.msra.mxu0 0
    %178 = vmatprep.subr.bf16.mxu0 0
    %179 = vmatpush1.bf16.msra.mxu0 0
    %180 = vmatprep.subr.bf16.mxu0 0
    %181 = vmatpush1.bf16.msra.mxu0 0
    %182 = vmatprep.mubr.bf16.mxu0 0
    %183 = vmatmul.mubr.bf16.gmra.mrb[0].mxu0 %v100
    %v184 = vpop.f32.mrb[0].mxu0
    %v185 = vadd.f32 %v93, %v184
    %v186 = vpop.f32.mrb[0].mxu0
    %v187 = vpop.f32.mrb[0].mxu0
    %v188 = vpop.f32.mrb[0].mxu0
    %189 = vdwg.mxu0
    %190 = vst [vmem:[#allocation4] sm:$0x3] %v185
    // Predicated region
    $region14: #{_forward_front.6} parent=1 // pred_check
      _
    $region15: #{_forward_front.6} parent=1 // pred_check_branch
      %192 = sbr.rel (0) target = $region17
    $region16: #{_forward_front.6} parent=1 // pred_region
      %s194 = ssub.s32 32, 32
      %195 = vsyncadd [#allocation3], %s194
      %s197 = sshll.u32 [#allocation2], 4
      %s198 = int_to_ptr.vmem [resolvable:$true] %s197
      %200 = dma.vmem_to_hbm [thread:$0]  %s198, 32, %s3, [#allocation3]
    $region17: #{_forward_front.6} parent=1 // pred_fallthru
      _
    // Predicated region
    $region18: #{_forward_front.6} parent=1 // pred_check
      _
    $region19: #{_forward_front.6} parent=1 // pred_check_branch
      %202 = sbr.rel (0) target = $region21
    $region20: #{_forward_front.6} parent=1 // pred_region
      %s204 = ssub.s32 32, 32
      %205 = vsyncadd [#allocation5], %s204
      %s207 = sshll.u32 [#allocation4], 4
      %s208 = int_to_ptr.vmem [resolvable:$true] %s207
      %210 = dma.vmem_to_hbm [thread:$0]  %s208, 32, %s4, [#allocation5]
    $region21: #{_forward_front.6} parent=1 // pred_fallthru
      _
    // Predicated region
    $region22: #{_forward_front.6} parent=1 // pred_check
      _
    $region23: #{_forward_front.6} parent=1 // pred_check_branch
      %212 = sbr.rel (0) target = $region25
    $region24: #{_forward_front.6} parent=1 // pred_region
      %213 = dma.done [#allocation3], 32
    $region25: #{_forward_front.6} parent=1 // pred_fallthru
      _
    // Predicated region
    $region26: #{_forward_front.6} parent=1 // pred_check
      _
    $region27: #{_forward_front.6} parent=1 // pred_check_branch
      %215 = sbr.rel (0) target = $region29
    $region28: #{_forward_front.6} parent=1 // pred_region
      %216 = dma.done [#allocation5], 32
    $region29: #{_forward_front.6} parent=1 // pred_fallthru
      _
    %217 = vsyncpa [#allocation3], 1
    %218 = vsyncpa [#allocation5], 1

// kernel: _forward_front.9
$region0: #{_forward_front.9}
  #allocation0 [shape = 'u32[]', space=smem, size = 0x4, offset = 0x4, fixed_abs, tag = 'smem constant byte address 0x4 - core index']
  #allocation1 [shape = 'u32[144,128]{1,0:T(1,128)}', space=vmem, size = 0x12000, scoped, tag = 'internal scratch']
  %s0 = inlined_call_operand.vmem [shape: bf16[16,1152], index: 0, kind: input, shape index: {}]
  %s1 = inlined_call_operand.vmem [shape: bf16[1152,128], index: 1, kind: input, shape index: {}]
  %s2 = inlined_call_operand.vmem [shape: f32[1,128], index: 2, kind: input, shape index: {}]
  %s3 = inlined_call_operand.vmem [shape: bf16[128,128], index: 3, kind: input, shape index: {}]
  %s4 = inlined_call_operand.vmem [shape: f32[1,128], index: 4, kind: input, shape index: {}]
  %s5 = inlined_call_operand.hbm [shape: bf16[16,128], index: 5, kind: output, shape index: {0}]
  %s6 = inlined_call_operand.vmem [shape: f32[16,128], index: 6, kind: output, shape index: {1}]
  %7 = xla_tuple %s5, %s6
  %s8 = sld [smem:[#allocation0]]
  $region38: #{_forward_front.9} parent=0
    _
  %s10 = ssub.s32 1, %s8
  %s11 = scalar_select 0, %s10, %s8
  $region1: #{_forward_front.9} parent=0
    #allocation2 [shape = 'u8[4096]{0}', space=vmem, size = 0x1000, scoped, tag = 'output window, operand 0, single buffered']
    #allocation3 [shape = 's32[1]{0}', space=sflag, size = 0x4, scoped, tag = 'scoped memory for _forward_front.9']
    %12 = vsyncpa [#allocation3], 0
    // Predicated region
    $region2: #{_forward_front.9} parent=1 // pred_check
      _
    $region3: #{_forward_front.9} parent=1 // pred_check_branch
      %14 = sbr.rel (0) target = $region5
    $region4: #{_forward_front.9} parent=1 // pred_region
      _
    $region5: #{_forward_front.9} parent=1 // pred_fallthru
      _
    // Predicated region
    $region6: #{_forward_front.9} parent=1 // pred_check
      _
    $region7: #{_forward_front.9} parent=1 // pred_check_branch
      %16 = sbr.rel (0) target = $region9
    $region8: #{_forward_front.9} parent=1 // pred_region
      _
    $region9: #{_forward_front.9} parent=1 // pred_fallthru
      _
    // Predicated region
    $region10: #{_forward_front.9} parent=1 // pred_check
      _
    $region11: #{_forward_front.9} parent=1 // pred_check_branch
      %18 = sbr.rel (0) target = $region13
    $region12: #{_forward_front.9} parent=1 // pred_region
      _
    $region13: #{_forward_front.9} parent=1 // pred_fallthru
      _
    // Predicated region
    $region14: #{_forward_front.9} parent=1 // pred_check
      _
    $region15: #{_forward_front.9} parent=1 // pred_check_branch
      %20 = sbr.rel (0) target = $region17
    $region16: #{_forward_front.9} parent=1 // pred_region
      _
    $region17: #{_forward_front.9} parent=1 // pred_fallthru
      _
    // Predicated region
    $region18: #{_forward_front.9} parent=1 // pred_check
      _
    $region19: #{_forward_front.9} parent=1 // pred_check_branch
      %22 = sbr.rel (0) target = $region21
    $region20: #{_forward_front.9} parent=1 // pred_region
      _
    $region21: #{_forward_front.9} parent=1 // pred_fallthru
      _
    %v24 = vld [vmem:[%s0] sm:$0xff]
    %v25 = vld [vmem:[%s0 + $0x8] sm:$0xff]
    %v26 = vld [vmem:[%s0 + $0x10] sm:$0xff]
    %v27 = vld [vmem:[%s0 + $0x18] sm:$0xff]
    %v28 = vld [vmem:[%s0 + $0x20] sm:$0xf]
    %v29 = vld [vmem:[%s0 + $0x24] sm:$0xff]
    %v30 = vld [vmem:[%s0 + $0x2c] sm:$0xff]
    %v31 = vld [vmem:[%s0 + $0x34] sm:$0xff]
    %v32 = vld [vmem:[%s0 + $0x3c] sm:$0xff]
    %v33 = vld [vmem:[%s0 + $0x44] sm:$0xf]
    %v34 = vld [vmem:[%s1] sm:$0xf]
    %v35 = vld [vmem:[%s1 + $0x4] sm:$0xf]
    %v36 = vld [vmem:[%s1 + $0x8] sm:$0xf]
    %v37 = vld [vmem:[%s1 + $0xc] sm:$0xf]
    %v38 = vld [vmem:[%s1 + $0x10] sm:$0xf]
    %v39 = vld [vmem:[%s1 + $0x14] sm:$0xf]
    %v40 = vld [vmem:[%s1 + $0x18] sm:$0xf]
    %v41 = vld [vmem:[%s1 + $0x1c] sm:$0xf]
    %v42 = vld [vmem:[%s1 + $0x20] sm:$0xf]
    %v43 = vld [vmem:[%s1 + $0x24] sm:$0xf]
    %v44 = vld [vmem:[%s1 + $0x28] sm:$0xf]
    %v45 = vld [vmem:[%s1 + $0x2c] sm:$0xf]
    %v46 = vld [vmem:[%s1 + $0x30] sm:$0xf]
    %v47 = vld [vmem:[%s1 + $0x34] sm:$0xf]
    %v48 = vld [vmem:[%s1 + $0x38] sm:$0xf]
    %v49 = vld [vmem:[%s1 + $0x3c] sm:$0xf]
    %v50 = vld [vmem:[%s1 + $0x40] sm:$0xf]
    %v51 = vld [vmem:[%s1 + $0x44] sm:$0xf]
    %v52 = vld [vmem:[%s1 + $0x48] sm:$0xf]
    %v53 = vld [vmem:[%s1 + $0x4c] sm:$0xf]
    %v54 = vld [vmem:[%s1 + $0x50] sm:$0xf]
    %v55 = vld [vmem:[%s1 + $0x54] sm:$0xf]
    %v56 = vld [vmem:[%s1 + $0x58] sm:$0xf]
    %v57 = vld [vmem:[%s1 + $0x5c] sm:$0xf]
    %v58 = vld [vmem:[%s1 + $0x60] sm:$0xf]
    %v59 = vld [vmem:[%s1 + $0x64] sm:$0xf]
    %v60 = vld [vmem:[%s1 + $0x68] sm:$0xf]
    %v61 = vld [vmem:[%s1 + $0x6c] sm:$0xf]
    %v62 = vld [vmem:[%s1 + $0x70] sm:$0xf]
    %v63 = vld [vmem:[%s1 + $0x74] sm:$0xf]
    %v64 = vld [vmem:[%s1 + $0x78] sm:$0xf]
    %v65 = vld [vmem:[%s1 + $0x7c] sm:$0xf]
    %v66 = vld [vmem:[%s1 + $0x80] sm:$0xf]
    %v67 = vld [vmem:[%s1 + $0x84] sm:$0xf]
    %v68 = vld [vmem:[%s1 + $0x88] sm:$0xf]
    %v69 = vld [vmem:[%s1 + $0x8c] sm:$0xf]
    %v70 = vld [vmem:[%s1 + $0x90] sm:$0xf]
    %v71 = vld [vmem:[%s1 + $0x94] sm:$0xf]
    %v72 = vld [vmem:[%s1 + $0x98] sm:$0xf]
    %v73 = vld [vmem:[%s1 + $0x9c] sm:$0xf]
    %v74 = vld [vmem:[%s1 + $0xa0] sm:$0xf]
    %v75 = vld [vmem:[%s1 + $0xa4] sm:$0xf]
    %v76 = vld [vmem:[%s1 + $0xa8] sm:$0xf]
    %v77 = vld [vmem:[%s1 + $0xac] sm:$0xf]
    %v78 = vld [vmem:[%s1 + $0xb0] sm:$0xf]
    %v79 = vld [vmem:[%s1 + $0xb4] sm:$0xf]
    %v80 = vld [vmem:[%s1 + $0xb8] sm:$0xf]
    %v81 = vld [vmem:[%s1 + $0xbc] sm:$0xf]
    %v82 = vld [vmem:[%s1 + $0xc0] sm:$0xf]
    %v83 = vld [vmem:[%s1 + $0xc4] sm:$0xf]
    %v84 = vld [vmem:[%s1 + $0xc8] sm:$0xf]
    %v85 = vld [vmem:[%s1 + $0xcc] sm:$0xf]
    %v86 = vld [vmem:[%s1 + $0xd0] sm:$0xf]
    %v87 = vld [vmem:[%s1 + $0xd4] sm:$0xf]
    %v88 = vld [vmem:[%s1 + $0xd8] sm:$0xf]
    %v89 = vld [vmem:[%s1 + $0xdc] sm:$0xf]
    %v90 = vld [vmem:[%s1 + $0xe0] sm:$0xf]
    %v91 = vld [vmem:[%s1 + $0xe4] sm:$0xf]
    %v92 = vld [vmem:[%s1 + $0xe8] sm:$0xf]
    %v93 = vld [vmem:[%s1 + $0xec] sm:$0xf]
    %v94 = vld [vmem:[%s1 + $0xf0] sm:$0xf]
    %v95 = vld [vmem:[%s1 + $0xf4] sm:$0xf]
    %v96 = vld [vmem:[%s1 + $0xf8] sm:$0xf]
    %v97 = vld [vmem:[%s1 + $0xfc] sm:$0xf]
    %v98 = vld [vmem:[%s1 + $0x100] sm:$0xf]
    %v99 = vld [vmem:[%s1 + $0x104] sm:$0xf]
    %v100 = vld [vmem:[%s1 + $0x108] sm:$0xf]
    %v101 = vld [vmem:[%s1 + $0x10c] sm:$0xf]
    %v102 = vld [vmem:[%s1 + $0x110] sm:$0xf]
    %v103 = vld [vmem:[%s1 + $0x114] sm:$0xf]
    %v104 = vld [vmem:[%s1 + $0x118] sm:$0xf]
    %v105 = vld [vmem:[%s1 + $0x11c] sm:$0xf]
    %v106 = vld [vmem:[%s1 + $0x120] sm:$0xf]
    %v107 = vld [vmem:[%s1 + $0x124] sm:$0xf]
    %v108 = vld [vmem:[%s1 + $0x128] sm:$0xf]
    %v109 = vld [vmem:[%s1 + $0x12c] sm:$0xf]
    %v110 = vld [vmem:[%s1 + $0x130] sm:$0xf]
    %v111 = vld [vmem:[%s1 + $0x134] sm:$0xf]
    %v112 = vld [vmem:[%s1 + $0x138] sm:$0xf]
    %v113 = vld [vmem:[%s1 + $0x13c] sm:$0xf]
    %v114 = vld [vmem:[%s1 + $0x140] sm:$0xf]
    %v115 = vld [vmem:[%s1 + $0x144] sm:$0xf]
    %v116 = vld [vmem:[%s1 + $0x148] sm:$0xf]
    %v117 = vld [vmem:[%s1 + $0x14c] sm:$0xf]
    %v118 = vld [vmem:[%s1 + $0x150] sm:$0xf]
    %v119 = vld [vmem:[%s1 + $0x154] sm:$0xf]
    %v120 = vld [vmem:[%s1 + $0x158] sm:$0xf]
    %v121 = vld [vmem:[%s1 + $0x15c] sm:$0xf]
    %v122 = vld [vmem:[%s1 + $0x160] sm:$0xf]
    %v123 = vld [vmem:[%s1 + $0x164] sm:$0xf]
    %v124 = vld [vmem:[%s1 + $0x168] sm:$0xf]
    %v125 = vld [vmem:[%s1 + $0x16c] sm:$0xf]
    %v126 = vld [vmem:[%s1 + $0x170] sm:$0xf]
    %v127 = vld [vmem:[%s1 + $0x174] sm:$0xf]
    %v128 = vld [vmem:[%s1 + $0x178] sm:$0xf]
    %v129 = vld [vmem:[%s1 + $0x17c] sm:$0xf]
    %v130 = vld [vmem:[%s1 + $0x180] sm:$0xf]
    %v131 = vld [vmem:[%s1 + $0x184] sm:$0xf]
    %v132 = vld [vmem:[%s1 + $0x188] sm:$0xf]
    %v133 = vld [vmem:[%s1 + $0x18c] sm:$0xf]
    %v134 = vld [vmem:[%s1 + $0x190] sm:$0xf]
    %v135 = vld [vmem:[%s1 + $0x194] sm:$0xf]
    %v136 = vld [vmem:[%s1 + $0x198] sm:$0xf]
    %v137 = vld [vmem:[%s1 + $0x19c] sm:$0xf]
    %v138 = vld [vmem:[%s1 + $0x1a0] sm:$0xf]
    %v139 = vld [vmem:[%s1 + $0x1a4] sm:$0xf]
    %v140 = vld [vmem:[%s1 + $0x1a8] sm:$0xf]
    %v141 = vld [vmem:[%s1 + $0x1ac] sm:$0xf]
    %v142 = vld [vmem:[%s1 + $0x1b0] sm:$0xf]
    %v143 = vld [vmem:[%s1 + $0x1b4] sm:$0xf]
    %v144 = vld [vmem:[%s1 + $0x1b8] sm:$0xf]
    %v145 = vld [vmem:[%s1 + $0x1bc] sm:$0xf]
    %v146 = vld [vmem:[%s1 + $0x1c0] sm:$0xf]
    %v147 = vld [vmem:[%s1 + $0x1c4] sm:$0xf]
    %v148 = vld [vmem:[%s1 + $0x1c8] sm:$0xf]
    %v149 = vld [vmem:[%s1 + $0x1cc] sm:$0xf]
    %v150 = vld [vmem:[%s1 + $0x1d0] sm:$0xf]
    %v151 = vld [vmem:[%s1 + $0x1d4] sm:$0xf]
    %v152 = vld [vmem:[%s1 + $0x1d8] sm:$0xf]
    %v153 = vld [vmem:[%s1 + $0x1dc] sm:$0xf]
    %v154 = vld [vmem:[%s1 + $0x1e0] sm:$0xf]
    %v155 = vld [vmem:[%s1 + $0x1e4] sm:$0xf]
    %v156 = vld [vmem:[%s1 + $0x1e8] sm:$0xf]
    %v157 = vld [vmem:[%s1 + $0x1ec] sm:$0xf]
    %v158 = vld [vmem:[%s1 + $0x1f0] sm:$0xf]
    %v159 = vld [vmem:[%s1 + $0x1f4] sm:$0xf]
    %v160 = vld [vmem:[%s1 + $0x1f8] sm:$0xf]
    %v161 = vld [vmem:[%s1 + $0x1fc] sm:$0xf]
    %v162 = vld [vmem:[%s1 + $0x200] sm:$0xf]
    %v163 = vld [vmem:[%s1 + $0x204] sm:$0xf]
    %v164 = vld [vmem:[%s1 + $0x208] sm:$0xf]
    %v165 = vld [vmem:[%s1 + $0x20c] sm:$0xf]
    %v166 = vld [vmem:[%s1 + $0x210] sm:$0xf]
    %v167 = vld [vmem:[%s1 + $0x214] sm:$0xf]
    %v168 = vld [vmem:[%s1 + $0x218] sm:$0xf]
    %v169 = vld [vmem:[%s1 + $0x21c] sm:$0xf]
    %v170 = vld [vmem:[%s1 + $0x220] sm:$0xf]
    %v171 = vld [vmem:[%s1 + $0x224] sm:$0xf]
    %v172 = vld [vmem:[%s1 + $0x228] sm:$0xf]
    %v173 = vld [vmem:[%s1 + $0x22c] sm:$0xf]
    %v174 = vld [vmem:[%s1 + $0x230] sm:$0xf]
    %v175 = vld [vmem:[%s1 + $0x234] sm:$0xf]
    %v176 = vld [vmem:[%s1 + $0x238] sm:$0xf]
    %v177 = vld [vmem:[%s1 + $0x23c] sm:$0xf]
    %v178 = vld [vmem:[%s2] sm:$0x1]
    %v180 = vlaneseq
    %v181 = vshrl.u32 %v180, 7
    %v182 = vsub.s32 0, %v181
    %v183 = vrot.slane %v178, %v182
    %v195 = vunpack.c.l.b16 %v24
    %v196 = vunpack.c.h.b16 %v24
    %v197 = vunpack.c.l.b16 %v25
    %v198 = vunpack.c.h.b16 %v25
    %v199 = vunpack.c.l.b16 %v26
    %v200 = vunpack.c.h.b16 %v26
    %v201 = vunpack.c.l.b16 %v27
    %v202 = vunpack.c.h.b16 %v27
    %v203 = vunpack.c.l.b16 %v28
    %v204 = vunpack.c.l.b16 %v29
    %v205 = vunpack.c.h.b16 %v29
    %v206 = vunpack.c.l.b16 %v30
    %v207 = vunpack.c.h.b16 %v30
    %v208 = vunpack.c.l.b16 %v31
    %v209 = vunpack.c.h.b16 %v31
    %v210 = vunpack.c.l.b16 %v32
    %v211 = vunpack.c.h.b16 %v32
    %v212 = vunpack.c.l.b16 %v33
    %v213 = vpack.c.b16 %v204, %v195
    %v214 = vpack.c.b16 %v205, %v196
    %v215 = vpack.c.b16 %v206, %v197
    %v216 = vpack.c.b16 %v207, %v198
    %v217 = vpack.c.b16 %v208, %v199
    %v218 = vpack.c.b16 %v209, %v200
    %v219 = vpack.c.b16 %v210, %v201
    %v220 = vpack.c.b16 %v211, %v202
    %v221 = vpack.c.b16 %v212, %v203
    %v375 = vunpack.c.l.b16 %v34
    %v376 = vunpack.c.l.b16 %v35
    %v377 = vunpack.c.l.b16 %v36
    %v378 = vunpack.c.l.b16 %v37
    %v379 = vunpack.c.l.b16 %v38
    %v380 = vunpack.c.l.b16 %v39
    %v381 = vunpack.c.l.b16 %v40
    %v382 = vunpack.c.l.b16 %v41
    %v383 = vunpack.c.l.b16 %v42
    %v384 = vunpack.c.l.b16 %v43
    %v385 = vunpack.c.l.b16 %v44
    %v386 = vunpack.c.l.b16 %v45
    %v387 = vunpack.c.l.b16 %v46
    %v388 = vunpack.c.l.b16 %v47
    %v389 = vunpack.c.l.b16 %v48
    %v390 = vunpack.c.l.b16 %v49
    %v391 = vunpack.c.l.b16 %v50
    %v392 = vunpack.c.l.b16 %v51
    %v393 = vunpack.c.l.b16 %v52
    %v394 = vunpack.c.l.b16 %v53
    %v395 = vunpack.c.l.b16 %v54
    %v396 = vunpack.c.l.b16 %v55
    %v397 = vunpack.c.l.b16 %v56
    %v398 = vunpack.c.l.b16 %v57
    %v399 = vunpack.c.l.b16 %v58
    %v400 = vunpack.c.l.b16 %v59
    %v401 = vunpack.c.l.b16 %v60
    %v402 = vunpack.c.l.b16 %v61
    %v403 = vunpack.c.l.b16 %v62
    %v404 = vunpack.c.l.b16 %v63
    %v405 = vunpack.c.l.b16 %v64
    %v406 = vunpack.c.l.b16 %v65
    %v407 = vunpack.c.l.b16 %v66
    %v408 = vunpack.c.l.b16 %v67
    %v409 = vunpack.c.l.b16 %v68
    %v410 = vunpack.c.l.b16 %v69
    %v411 = vunpack.c.l.b16 %v70
    %v412 = vunpack.c.l.b16 %v71
    %v413 = vunpack.c.l.b16 %v72
    %v414 = vunpack.c.l.b16 %v73
    %v415 = vunpack.c.l.b16 %v74
    %v416 = vunpack.c.l.b16 %v75
    %v417 = vunpack.c.l.b16 %v76
    %v418 = vunpack.c.l.b16 %v77
    %v419 = vunpack.c.l.b16 %v78
    %v420 = vunpack.c.l.b16 %v79
    %v421 = vunpack.c.l.b16 %v80
    %v422 = vunpack.c.l.b16 %v81
    %v423 = vunpack.c.l.b16 %v82
    %v424 = vunpack.c.l.b16 %v83
    %v425 = vunpack.c.l.b16 %v84
    %v426 = vunpack.c.l.b16 %v85
    %v427 = vunpack.c.l.b16 %v86
    %v428 = vunpack.c.l.b16 %v87
    %v429 = vunpack.c.l.b16 %v88
    %v430 = vunpack.c.l.b16 %v89
    %v431 = vunpack.c.l.b16 %v90
    %v432 = vunpack.c.l.b16 %v91
    %v433 = vunpack.c.l.b16 %v92
    %v434 = vunpack.c.l.b16 %v93
    %v435 = vunpack.c.l.b16 %v94
    %v436 = vunpack.c.l.b16 %v95
    %v437 = vunpack.c.l.b16 %v96
    %v438 = vunpack.c.l.b16 %v97
    %v439 = vunpack.c.l.b16 %v98
    %v440 = vunpack.c.l.b16 %v99
    %v441 = vunpack.c.l.b16 %v100
    %v442 = vunpack.c.l.b16 %v101
    %v443 = vunpack.c.l.b16 %v102
    %v444 = vunpack.c.l.b16 %v103
    %v445 = vunpack.c.l.b16 %v104
    %v446 = vunpack.c.l.b16 %v105
    %v447 = vunpack.c.l.b16 %v106
    %v448 = vunpack.c.l.b16 %v107
    %v449 = vunpack.c.l.b16 %v108
    %v450 = vunpack.c.l.b16 %v109
    %v451 = vunpack.c.l.b16 %v110
    %v452 = vunpack.c.l.b16 %v111
    %v453 = vunpack.c.l.b16 %v112
    %v454 = vunpack.c.l.b16 %v113
    %v455 = vunpack.c.l.b16 %v114
    %v456 = vunpack.c.l.b16 %v115
    %v457 = vunpack.c.l.b16 %v116
    %v458 = vunpack.c.l.b16 %v117
    %v459 = vunpack.c.l.b16 %v118
    %v460 = vunpack.c.l.b16 %v119
    %v461 = vunpack.c.l.b16 %v120
    %v462 = vunpack.c.l.b16 %v121
    %v463 = vunpack.c.l.b16 %v122
    %v464 = vunpack.c.l.b16 %v123
    %v465 = vunpack.c.l.b16 %v124
    %v466 = vunpack.c.l.b16 %v125
    %v467 = vunpack.c.l.b16 %v126
    %v468 = vunpack.c.l.b16 %v127
    %v469 = vunpack.c.l.b16 %v128
    %v470 = vunpack.c.l.b16 %v129
    %v471 = vunpack.c.l.b16 %v130
    %v472 = vunpack.c.l.b16 %v131
    %v473 = vunpack.c.l.b16 %v132
    %v474 = vunpack.c.l.b16 %v133
    %v475 = vunpack.c.l.b16 %v134
    %v476 = vunpack.c.l.b16 %v135
    %v477 = vunpack.c.l.b16 %v136
    %v478 = vunpack.c.l.b16 %v137
    %v479 = vunpack.c.l.b16 %v138
    %v480 = vunpack.c.l.b16 %v139
    %v481 = vunpack.c.l.b16 %v140
    %v482 = vunpack.c.l.b16 %v141
    %v483 = vunpack.c.l.b16 %v142
    %v484 = vunpack.c.l.b16 %v143
    %v485 = vunpack.c.l.b16 %v144
    %v486 = vunpack.c.l.b16 %v145
    %v487 = vunpack.c.l.b16 %v146
    %v488 = vunpack.c.l.b16 %v147
    %v489 = vunpack.c.l.b16 %v148
    %v490 = vunpack.c.l.b16 %v149
    %v491 = vunpack.c.l.b16 %v150
    %v492 = vunpack.c.l.b16 %v151
    %v493 = vunpack.c.l.b16 %v152
    %v494 = vunpack.c.l.b16 %v153
    %v495 = vunpack.c.l.b16 %v154
    %v496 = vunpack.c.l.b16 %v155
    %v497 = vunpack.c.l.b16 %v156
    %v498 = vunpack.c.l.b16 %v157
    %v499 = vunpack.c.l.b16 %v158
    %v500 = vunpack.c.l.b16 %v159
    %v501 = vunpack.c.l.b16 %v160
    %v502 = vunpack.c.l.b16 %v161
    %v503 = vunpack.c.l.b16 %v162
    %v504 = vunpack.c.l.b16 %v163
    %v505 = vunpack.c.l.b16 %v164
    %v506 = vunpack.c.l.b16 %v165
    %v507 = vunpack.c.l.b16 %v166
    %v508 = vunpack.c.l.b16 %v167
    %v509 = vunpack.c.l.b16 %v168
    %v510 = vunpack.c.l.b16 %v169
    %v511 = vunpack.c.l.b16 %v170
    %v512 = vunpack.c.l.b16 %v171
    %v513 = vunpack.c.l.b16 %v172
    %v514 = vunpack.c.l.b16 %v173
    %v515 = vunpack.c.l.b16 %v174
    %v516 = vunpack.c.l.b16 %v175
    %v517 = vunpack.c.l.b16 %v176
    %v518 = vunpack.c.l.b16 %v177
    %v519 = vpack.c.b16 %v376, %v375
    %v520 = vpack.c.b16 %v378, %v377
    %v521 = vpack.c.b16 %v380, %v379
    %v522 = vpack.c.b16 %v382, %v381
    %v523 = vpack.c.b16 %v384, %v383
    %v524 = vpack.c.b16 %v386, %v385
    %v525 = vpack.c.b16 %v388, %v387
    %v526 = vpack.c.b16 %v390, %v389
    %v527 = vpack.c.b16 %v392, %v391
    %v528 = vpack.c.b16 %v394, %v393
    %v529 = vpack.c.b16 %v396, %v395
    %v530 = vpack.c.b16 %v398, %v397
    %v531 = vpack.c.b16 %v400, %v399
    %v532 = vpack.c.b16 %v402, %v401
    %v533 = vpack.c.b16 %v404, %v403
    %v534 = vpack.c.b16 %v406, %v405
    %v535 = vpack.c.b16 %v408, %v407
    %v536 = vpack.c.b16 %v410, %v409
    %v537 = vpack.c.b16 %v412, %v411
    %v538 = vpack.c.b16 %v414, %v413
    %v539 = vpack.c.b16 %v416, %v415
    %v540 = vpack.c.b16 %v418, %v417
    %v541 = vpack.c.b16 %v420, %v419
    %v542 = vpack.c.b16 %v422, %v421
    %v543 = vpack.c.b16 %v424, %v423
    %v544 = vpack.c.b16 %v426, %v425
    %v545 = vpack.c.b16 %v428, %v427
    %v546 = vpack.c.b16 %v430, %v429
    %v547 = vpack.c.b16 %v432, %v431
    %v548 = vpack.c.b16 %v434, %v433
    %v549 = vpack.c.b16 %v436, %v435
    %v550 = vpack.c.b16 %v438, %v437
    %v551 = vpack.c.b16 %v440, %v439
    %v552 = vpack.c.b16 %v442, %v441
    %v553 = vpack.c.b16 %v444, %v443
    %v554 = vpack.c.b16 %v446, %v445
    %v555 = vpack.c.b16 %v448, %v447
    %v556 = vpack.c.b16 %v450, %v449
    %v557 = vpack.c.b16 %v452, %v451
    %v558 = vpack.c.b16 %v454, %v453
    %v559 = vpack.c.b16 %v456, %v455
    %v560 = vpack.c.b16 %v458, %v457
    %v561 = vpack.c.b16 %v460, %v459
    %v562 = vpack.c.b16 %v462, %v461
    %v563 = vpack.c.b16 %v464, %v463
    %v564 = vpack.c.b16 %v466, %v465
    %v565 = vpack.c.b16 %v468, %v467
    %v566 = vpack.c.b16 %v470, %v469
    %v567 = vpack.c.b16 %v472, %v471
    %v568 = vpack.c.b16 %v474, %v473
    %v569 = vpack.c.b16 %v476, %v475
    %v570 = vpack.c.b16 %v478, %v477
    %v571 = vpack.c.b16 %v480, %v479
    %v572 = vpack.c.b16 %v482, %v481
    %v573 = vpack.c.b16 %v484, %v483
    %v574 = vpack.c.b16 %v486, %v485
    %v575 = vpack.c.b16 %v488, %v487
    %v576 = vpack.c.b16 %v490, %v489
    %v577 = vpack.c.b16 %v492, %v491
    %v578 = vpack.c.b16 %v494, %v493
    %v579 = vpack.c.b16 %v496, %v495
    %v580 = vpack.c.b16 %v498, %v497
    %v581 = vpack.c.b16 %v500, %v499
    %v582 = vpack.c.b16 %v502, %v501
    %v583 = vpack.c.b16 %v504, %v503
    %v584 = vpack.c.b16 %v506, %v505
    %v585 = vpack.c.b16 %v508, %v507
    %v586 = vpack.c.b16 %v510, %v509
    %v587 = vpack.c.b16 %v512, %v511
    %v588 = vpack.c.b16 %v514, %v513
    %v589 = vpack.c.b16 %v516, %v515
    %v590 = vpack.c.b16 %v518, %v517
    %663 = vmatprep.subr.bf16.mxu0 0
    %664 = vmatpush1.bf16.msra.mxu0 %v519
    %665 = vmatprep.subr.bf16.mxu0 0
    %666 = vmatpush1.bf16.msra.mxu0 %v520
    %667 = vmatprep.subr.bf16.mxu0 0
    %668 = vmatpush1.bf16.msra.mxu0 %v521
    %669 = vmatprep.subr.bf16.mxu0 0
    %670 = vmatpush1.bf16.msra.mxu0 %v522
    %671 = vmatprep.subr.bf16.mxu0 0
    %672 = vmatpush1.bf16.msra.mxu0 %v523
    %673 = vmatprep.subr.bf16.mxu0 0
    %674 = vmatpush1.bf16.msra.mxu0 %v524
    %675 = vmatprep.subr.bf16.mxu0 0
    %676 = vmatpush1.bf16.msra.mxu0 %v525
    %677 = vmatprep.subr.bf16.mxu0 0
    %678 = vmatpush1.bf16.msra.mxu0 %v526
    %679 = vmatprep.subr.bf16.mxu0 0
    %680 = vmatpush1.bf16.msra.mxu0 %v527
    %681 = vmatprep.subr.bf16.mxu0 0
    %682 = vmatpush1.bf16.msra.mxu0 %v528
    %683 = vmatprep.subr.bf16.mxu0 0
    %684 = vmatpush1.bf16.msra.mxu0 %v529
    %685 = vmatprep.subr.bf16.mxu0 0
    %686 = vmatpush1.bf16.msra.mxu0 %v530
    %687 = vmatprep.subr.bf16.mxu0 0
    %688 = vmatpush1.bf16.msra.mxu0 %v531
    %689 = vmatprep.subr.bf16.mxu0 0
    %690 = vmatpush1.bf16.msra.mxu0 %v532
    %691 = vmatprep.subr.bf16.mxu0 0
    %692 = vmatpush1.bf16.msra.mxu0 %v533
    %693 = vmatprep.subr.bf16.mxu0 0
    %694 = vmatpush1.bf16.msra.mxu0 %v534
    %695 = vmatprep.mubr.bf16.mxu0 %v214
    %696 = vmatmul.mubr.bf16.gmra.mrb[0].mxu0 %v213
    %v697 = vpop.f32.mrb[0].mxu0
    %v698 = vadd.f32 %v183, %v697
    %v699 = vpop.f32.mrb[0].mxu0
    %v700 = vpop.f32.mrb[0].mxu0
    %v701 = vadd.f32 %v183, %v700
    %v702 = vpop.f32.mrb[0].mxu0
    %703 = vdwg.mxu0
    %704 = vmatprep.subr.bf16.mxu0 0
    %705 = vmatpush1.bf16.msra.mxu0 %v535
    %706 = vmatprep.subr.bf16.mxu0 0
    %707 = vmatpush1.bf16.msra.mxu0 %v536
    %708 = vmatprep.subr.bf16.mxu0 0
    %709 = vmatpush1.bf16.msra.mxu0 %v537
    %710 = vmatprep.subr.bf16.mxu0 0
    %711 = vmatpush1.bf16.msra.mxu0 %v538
    %712 = vmatprep.subr.bf16.mxu0 0
    %713 = vmatpush1.bf16.msra.mxu0 %v539
    %714 = vmatprep.subr.bf16.mxu0 0
    %715 = vmatpush1.bf16.msra.mxu0 %v540
    %716 = vmatprep.subr.bf16.mxu0 0
    %717 = vmatpush1.bf16.msra.mxu0 %v541
    %718 = vmatprep.subr.bf16.mxu0 0
    %719 = vmatpush1.bf16.msra.mxu0 %v542
    %720 = vmatprep.subr.bf16.mxu0 0
    %721 = vmatpush1.bf16.msra.mxu0 %v543
    %722 = vmatprep.subr.bf16.mxu0 0
    %723 = vmatpush1.bf16.msra.mxu0 %v544
    %724 = vmatprep.subr.bf16.mxu0 0
    %725 = vmatpush1.bf16.msra.mxu0 %v545
    %726 = vmatprep.subr.bf16.mxu0 0
    %727 = vmatpush1.bf16.msra.mxu0 %v546
    %728 = vmatprep.subr.bf16.mxu0 0
    %729 = vmatpush1.bf16.msra.mxu0 %v547
    %730 = vmatprep.subr.bf16.mxu0 0
    %731 = vmatpush1.bf16.msra.mxu0 %v548
    %732 = vmatprep.subr.bf16.mxu0 0
    %733 = vmatpush1.bf16.msra.mxu0 %v549
    %734 = vmatprep.subr.bf16.mxu0 0
    %735 = vmatpush1.bf16.msra.mxu0 %v550
    %736 = vmatprep.mubr.bf16.mxu0 %v216
    %737 = vmatmul.mubr.bf16.gmra.mrb[0].mxu0 %v215
    %v738 = vpop.f32.mrb[0].mxu0
    %v739 = vadd.f32 %v698, %v738
    %v740 = vpop.f32.mrb[0].mxu0
    %v741 = vpop.f32.mrb[0].mxu0
    %v742 = vadd.f32 %v701, %v741
    %v743 = vpop.f32.mrb[0].mxu0
    %744 = vdwg.mxu0
    %745 = vmatprep.subr.bf16.mxu0 0
    %746 = vmatpush1.bf16.msra.mxu0 %v551
    %747 = vmatprep.subr.bf16.mxu0 0
    %748 = vmatpush1.bf16.msra.mxu0 %v552
    %749 = vmatprep.subr.bf16.mxu0 0
    %750 = vmatpush1.bf16.msra.mxu0 %v553
    %751 = vmatprep.subr.bf16.mxu0 0
    %752 = vmatpush1.bf16.msra.mxu0 %v554
    %753 = vmatprep.subr.bf16.mxu0 0
    %754 = vmatpush1.bf16.msra.mxu0 %v555
    %755 = vmatprep.subr.bf16.mxu0 0
    %756 = vmatpush1.bf16.msra.mxu0 %v556
    %757 = vmatprep.subr.bf16.mxu0 0
    %758 = vmatpush1.bf16.msra.mxu0 %v557
    %759 = vmatprep.subr.bf16.mxu0 0
    %760 = vmatpush1.bf16.msra.mxu0 %v558
    %761 = vmatprep.subr.bf16.mxu0 0
    %762 = vmatpush1.bf16.msra.mxu0 %v559
    %763 = vmatprep.subr.bf16.mxu0 0
    %764 = vmatpush1.bf16.msra.mxu0 %v560
    %765 = vmatprep.subr.bf16.mxu0 0
    %766 = vmatpush1.bf16.msra.mxu0 %v561
    %767 = vmatprep.subr.bf16.mxu0 0
    %768 = vmatpush1.bf16.msra.mxu0 %v562
    %769 = vmatprep.subr.bf16.mxu0 0
    %770 = vmatpush1.bf16.msra.mxu0 %v563
    %771 = vmatprep.subr.bf16.mxu0 0
    %772 = vmatpush1.bf16.msra.mxu0 %v564
    %773 = vmatprep.subr.bf16.mxu0 0
    %774 = vmatpush1.bf16.msra.mxu0 %v565
    %775 = vmatprep.subr.bf16.mxu0 0
    %776 = vmatpush1.bf16.msra.mxu0 %v566
    %777 = vmatprep.mubr.bf16.mxu0 %v218
    %778 = vmatmul.mubr.bf16.gmra.mrb[0].mxu0 %v217
    %v779 = vpop.f32.mrb[0].mxu0
    %v780 = vadd.f32 %v739, %v779
    %v781 = vpop.f32.mrb[0].mxu0
    %v782 = vpop.f32.mrb[0].mxu0
    %v783 = vadd.f32 %v742, %v782
    %v784 = vpop.f32.mrb[0].mxu0
    %785 = vdwg.mxu0
    %786 = vmatprep.subr.bf16.mxu0 0
    %787 = vmatpush1.bf16.msra.mxu0 %v567
    %788 = vmatprep.subr.bf16.mxu0 0
    %789 = vmatpush1.bf16.msra.mxu0 %v568
    %790 = vmatprep.subr.bf16.mxu0 0
    %791 = vmatpush1.bf16.msra.mxu0 %v569
    %792 = vmatprep.subr.bf16.mxu0 0
    %793 = vmatpush1.bf16.msra.mxu0 %v570
    %794 = vmatprep.subr.bf16.mxu0 0
    %795 = vmatpush1.bf16.msra.mxu0 %v571
    %796 = vmatprep.subr.bf16.mxu0 0
    %797 = vmatpush1.bf16.msra.mxu0 %v572
    %798 = vmatprep.subr.bf16.mxu0 0
    %799 = vmatpush1.bf16.msra.mxu0 %v573
    %800 = vmatprep.subr.bf16.mxu0 0
    %801 = vmatpush1.bf16.msra.mxu0 %v574
    %802 = vmatprep.subr.bf16.mxu0 0
    %803 = vmatpush1.bf16.msra.mxu0 %v575
    %804 = vmatprep.subr.bf16.mxu0 0
    %805 = vmatpush1.bf16.msra.mxu0 %v576
    %806 = vmatprep.subr.bf16.mxu0 0
    %807 = vmatpush1.bf16.msra.mxu0 %v577
    %808 = vmatprep.subr.bf16.mxu0 0
    %809 = vmatpush1.bf16.msra.mxu0 %v578
    %810 = vmatprep.subr.bf16.mxu0 0
    %811 = vmatpush1.bf16.msra.mxu0 %v579
    %812 = vmatprep.subr.bf16.mxu0 0
    %813 = vmatpush1.bf16.msra.mxu0 %v580
    %814 = vmatprep.subr.bf16.mxu0 0
    %815 = vmatpush1.bf16.msra.mxu0 %v581
    %816 = vmatprep.subr.bf16.mxu0 0
    %817 = vmatpush1.bf16.msra.mxu0 %v582
    %818 = vmatprep.mubr.bf16.mxu0 %v220
    %819 = vmatmul.mubr.bf16.gmra.mrb[0].mxu0 %v219
    %v820 = vpop.f32.mrb[0].mxu0
    %v821 = vadd.f32 %v780, %v820
    %v822 = vpop.f32.mrb[0].mxu0
    %v823 = vpop.f32.mrb[0].mxu0
    %v824 = vadd.f32 %v783, %v823
    %v825 = vpop.f32.mrb[0].mxu0
    %826 = vdwg.mxu0
    %827 = vmatprep.subr.bf16.mxu0 0
    %828 = vmatpush1.bf16.msra.mxu0 %v583
    %829 = vmatprep.subr.bf16.mxu0 0
    %830 = vmatpush1.bf16.msra.mxu0 %v584
    %831 = vmatprep.subr.bf16.mxu0 0
    %832 = vmatpush1.bf16.msra.mxu0 %v585
    %833 = vmatprep.subr.bf16.mxu0 0
    %834 = vmatpush1.bf16.msra.mxu0 %v586
    %835 = vmatprep.subr.bf16.mxu0 0
    %836 = vmatpush1.bf16.msra.mxu0 %v587
    %837 = vmatprep.subr.bf16.mxu0 0
    %838 = vmatpush1.bf16.msra.mxu0 %v588
    %839 = vmatprep.subr.bf16.mxu0 0
    %840 = vmatpush1.bf16.msra.mxu0 %v589
    %841 = vmatprep.subr.bf16.mxu0 0
    %842 = vmatpush1.bf16.msra.mxu0 %v590
    %843 = vmatprep.subr.bf16.mxu0 0
    %844 = vmatpush1.bf16.msra.mxu0 0
    %845 = vmatprep.subr.bf16.mxu0 0
    %846 = vmatpush1.bf16.msra.mxu0 0
    %847 = vmatprep.subr.bf16.mxu0 0
    %848 = vmatpush1.bf16.msra.mxu0 0
    %849 = vmatprep.subr.bf16.mxu0 0
    %850 = vmatpush1.bf16.msra.mxu0 0
    %851 = vmatprep.subr.bf16.mxu0 0
    %852 = vmatpush1.bf16.msra.mxu0 0
    %853 = vmatprep.subr.bf16.mxu0 0
    %854 = vmatpush1.bf16.msra.mxu0 0
    %855 = vmatprep.subr.bf16.mxu0 0
    %856 = vmatpush1.bf16.msra.mxu0 0
    %857 = vmatprep.subr.bf16.mxu0 0
    %858 = vmatpush1.bf16.msra.mxu0 0
    %859 = vmatprep.mubr.bf16.mxu0 0
    %860 = vmatmul.mubr.bf16.gmra.mrb[0].mxu0 %v221
    %v861 = vpop.f32.mrb[0].mxu0
    %v862 = vadd.f32 %v821, %v861
    %v863 = vpop.f32.mrb[0].mxu0
    %v864 = vpop.f32.mrb[0].mxu0
    %v865 = vadd.f32 %v824, %v864
    %v866 = vpop.f32.mrb[0].mxu0
    %867 = vdwg.mxu0
    %v868 = vmax.f32 %v862, 0.0
    %v869 = vmax.f32 %v865, 0.0
    %v870 = vpack.c.bf16 %v869, %v868
    %v872 = vunpack.c.l.b16 %v870
    %v873 = vunpack.c.h.b16 %v870
    %v874 = vpack.c.b16 %v872, %v872
    %v875 = vpack.c.b16 %v873, %v873
    %878 = vst [vmem:[#allocation2] sm:$0xf] %v874
    %879 = vst [vmem:[#allocation2 + $0x4] sm:$0xf] %v875
    %v880 = vld [vmem:[%s3] sm:$0xf]
    %v881 = vld [vmem:[%s3 + $0x4] sm:$0xf]
    %v882 = vld [vmem:[%s3 + $0x8] sm:$0xf]
    %v883 = vld [vmem:[%s3 + $0xc] sm:$0xf]
    %v884 = vld [vmem:[%s3 + $0x10] sm:$0xf]
    %v885 = vld [vmem:[%s3 + $0x14] sm:$0xf]
    %v886 = vld [vmem:[%s3 + $0x18] sm:$0xf]
    %v887 = vld [vmem:[%s3 + $0x1c] sm:$0xf]
    %v888 = vld [vmem:[%s3 + $0x20] sm:$0xf]
    %v889 = vld [vmem:[%s3 + $0x24] sm:$0xf]
    %v890 = vld [vmem:[%s3 + $0x28] sm:$0xf]
    %v891 = vld [vmem:[%s3 + $0x2c] sm:$0xf]
    %v892 = vld [vmem:[%s3 + $0x30] sm:$0xf]
    %v893 = vld [vmem:[%s3 + $0x34] sm:$0xf]
    %v894 = vld [vmem:[%s3 + $0x38] sm:$0xf]
    %v895 = vld [vmem:[%s3 + $0x3c] sm:$0xf]
    %v896 = vld [vmem:[%s4] sm:$0x1]
    %v898 = vlaneseq
    %v899 = vshrl.u32 %v898, 7
    %v900 = vsub.s32 0, %v899
    %v901 = vrot.slane %v896, %v900
    %v919 = vunpack.c.l.b16 %v880
    %v920 = vunpack.c.l.b16 %v881
    %v921 = vunpack.c.l.b16 %v882
    %v922 = vunpack.c.l.b16 %v883
    %v923 = vunpack.c.l.b16 %v884
    %v924 = vunpack.c.l.b16 %v885
    %v925 = vunpack.c.l.b16 %v886
    %v926 = vunpack.c.l.b16 %v887
    %v927 = vunpack.c.l.b16 %v888
    %v928 = vunpack.c.l.b16 %v889
    %v929 = vunpack.c.l.b16 %v890
    %v930 = vunpack.c.l.b16 %v891
    %v931 = vunpack.c.l.b16 %v892
    %v932 = vunpack.c.l.b16 %v893
    %v933 = vunpack.c.l.b16 %v894
    %v934 = vunpack.c.l.b16 %v895
    %v935 = vpack.c.b16 %v920, %v919
    %v936 = vpack.c.b16 %v922, %v921
    %v937 = vpack.c.b16 %v924, %v923
    %v938 = vpack.c.b16 %v926, %v925
    %v939 = vpack.c.b16 %v928, %v927
    %v940 = vpack.c.b16 %v930, %v929
    %v941 = vpack.c.b16 %v932, %v931
    %v942 = vpack.c.b16 %v934, %v933
    %951 = vmatprep.subr.bf16.mxu0 0
    %952 = vmatpush1.bf16.msra.mxu0 %v935
    %953 = vmatprep.subr.bf16.mxu0 0
    %954 = vmatpush1.bf16.msra.mxu0 %v936
    %955 = vmatprep.subr.bf16.mxu0 0
    %956 = vmatpush1.bf16.msra.mxu0 %v937
    %957 = vmatprep.subr.bf16.mxu0 0
    %958 = vmatpush1.bf16.msra.mxu0 %v938
    %959 = vmatprep.subr.bf16.mxu0 0
    %960 = vmatpush1.bf16.msra.mxu0 %v939
    %961 = vmatprep.subr.bf16.mxu0 0
    %962 = vmatpush1.bf16.msra.mxu0 %v940
    %963 = vmatprep.subr.bf16.mxu0 0
    %964 = vmatpush1.bf16.msra.mxu0 %v941
    %965 = vmatprep.subr.bf16.mxu0 0
    %966 = vmatpush1.bf16.msra.mxu0 %v942
    %967 = vmatprep.subr.bf16.mxu0 0
    %968 = vmatpush1.bf16.msra.mxu0 0
    %969 = vmatprep.subr.bf16.mxu0 0
    %970 = vmatpush1.bf16.msra.mxu0 0
    %971 = vmatprep.subr.bf16.mxu0 0
    %972 = vmatpush1.bf16.msra.mxu0 0
    %973 = vmatprep.subr.bf16.mxu0 0
    %974 = vmatpush1.bf16.msra.mxu0 0
    %975 = vmatprep.subr.bf16.mxu0 0
    %976 = vmatpush1.bf16.msra.mxu0 0
    %977 = vmatprep.subr.bf16.mxu0 0
    %978 = vmatpush1.bf16.msra.mxu0 0
    %979 = vmatprep.subr.bf16.mxu0 0
    %980 = vmatpush1.bf16.msra.mxu0 0
    %981 = vmatprep.subr.bf16.mxu0 0
    %982 = vmatpush1.bf16.msra.mxu0 0
    %983 = vmatprep.mubr.bf16.mxu0 0
    %984 = vmatmul.mubr.bf16.gmra.mrb[0].mxu0 %v870
    %v985 = vpop.f32.mrb[0].mxu0
    %v986 = vadd.f32 %v901, %v985
    %v987 = vpop.f32.mrb[0].mxu0
    %v988 = vpop.f32.mrb[0].mxu0
    %v989 = vadd.f32 %v901, %v988
    %v990 = vpop.f32.mrb[0].mxu0
    %991 = vdwg.mxu0
    %992 = vst [vmem:[%s6] sm:$0xff] %v986
    %993 = vst [vmem:[%s6 + $0x8] sm:$0xff] %v989
    // Predicated region
    $region22: #{_forward_front.9} parent=1 // pred_check
      _
    $region23: #{_forward_front.9} parent=1 // pred_check_branch
      %995 = sbr.rel (0) target = $region25
    $region24: #{_forward_front.9} parent=1 // pred_region
      %s997 = ssub.s32 128, 128
      %998 = vsyncadd [#allocation3], %s997
      %s999 = sshll.u32 [#allocation2], 4
      %s1000 = int_to_ptr.vmem [resolvable:$true] %s999
      %1005 = dma.vmem_to_hbm [thread:$0]  %s1000, 128, %s5, [#allocation3], 64, 64, 4
    $region25: #{_forward_front.9} parent=1 // pred_fallthru
      _
    // Predicated region
    $region26: #{_forward_front.9} parent=1 // pred_check
      _
    $region27: #{_forward_front.9} parent=1 // pred_check_branch
      %1007 = sbr.rel (0) target = $region29
    $region28: #{_forward_front.9} parent=1 // pred_region
      _
    $region29: #{_forward_front.9} parent=1 // pred_fallthru
      _
    // Predicated region
    $region30: #{_forward_front.9} parent=1 // pred_check
      _
    $region31: #{_forward_front.9} parent=1 // pred_check_branch
      %1009 = sbr.rel (0) target = $region33
    $region32: #{_forward_front.9} parent=1 // pred_region
      %1010 = dma.done [#allocation3], 128
    $region33: #{_forward_front.9} parent=1 // pred_fallthru
      _
    // Predicated region
    $region34: #{_forward_front.9} parent=1 // pred_check
      _
    $region35: #{_forward_front.9} parent=1 // pred_check_branch
      %1012 = sbr.rel (0) target = $region37
    $region36: #{_forward_front.9} parent=1 // pred_region
      _
    $region37: #{_forward_front.9} parent=1 // pred_fallthru
      _
    %1013 = vsyncpa [#allocation3], 1

</llo_original>
